<compile_context>
chip_gen: v7x
topology: tpu7x:2x2x1
jax: 0.10.0
libtpu: 0.0.40
codegen_flags: <defaults>
</compile_context>

<pallas_src>
import functools
import math

import jax
import jax.numpy as jnp
from jax.experimental import pallas as pl
from jax.experimental.pallas import tpu as pltpu


def _round_up(a, b):
    return (a + b - 1) // b * b


# --------------------------------------------------------------------------- #
# Pass 1: in-kernel transposed-conv (k*k lane-shifted matmuls) + bias +
# per-channel sum / sum-of-squares (training-mode BatchNorm statistics).
# Grid: (N, n_h_tiles).  Blocks: channels on sublanes, flat (h, w) on lanes.
# --------------------------------------------------------------------------- #
def _conv_stats_kernel(xa_ref, xb_ref, w_ref, b_ref, cmask_ref,
                       y_ref, sum_ref, ssq_ref, *, k, w_row, th, h_out):
    t = pl.program_id(1)
    c_out_p = w_ref.shape[1]
    bl = y_ref.shape[2]

    xa = xa_ref[0]                                   # (C_in, BL)  bf16
    xb = xb_ref[0]                                   # (C_in, BL)  bf16 (halo src)
    xw = jnp.concatenate([xa, xb[:, : k * w_row]], axis=1)

    acc = jnp.zeros((c_out_p, bl), jnp.float32)
    for p in range(k):                               # static k*k unrolled loop
        for q in range(k):
            off = p * w_row + q                      # pure lane offset
            acc = acc + jnp.dot(w_ref[p * k + q], xw[:, off:off + bl],
                                preferred_element_type=jnp.float32)
    y = acc + b_ref[...]                             # (C_out_p, BL) f32
    y_ref[0] = y

    # mask out spatial padding (garbage rows/cols) before accumulating stats
    valid_rows = jnp.minimum(th, h_out - t * th)
    pos = jax.lax.broadcasted_iota(jnp.int32, (1, bl), 1)
    m = jnp.where(pos < valid_rows * w_row, cmask_ref[...], 0.0)
    ym = y * m

    @pl.when(t == 0)
    def _():
        sum_ref[...] = jnp.zeros_like(sum_ref)
        ssq_ref[...] = jnp.zeros_like(ssq_ref)

    sum_ref[0] += jnp.sum(ym, axis=1, keepdims=True)
    ssq_ref[0] += jnp.sum(ym * y, axis=1, keepdims=True)


# --------------------------------------------------------------------------- #
# Pass 2: fused BatchNorm affine (+ optional multiplier) + ReLU, in place.
# --------------------------------------------------------------------------- #
def _bn_act_kernel(y_ref, scale_ref, shift_ref, o_ref):
    o_ref[0] = jnp.maximum(y_ref[0] * scale_ref[...] + shift_ref[...], 0.0)


def _bn_act_mul_kernel(y_ref, scale_ref, shift_ref, mul_ref, o_ref):
    o_ref[0] = jnp.maximum(
        (y_ref[0] * scale_ref[...] + shift_ref[...]) * mul_ref[0], 0.0)


# --------------------------------------------------------------------------- #
# KL divergence of the Bayesian weights vs. N(0,1) prior (gridded, iota mask).
# --------------------------------------------------------------------------- #
def _kl_kernel(mu_ref, rho_ref, kl_ref, *, n_valid, tile_rows):
    i = pl.program_id(0)

    @pl.when(i == 0)
    def _():
        kl_ref[0, 0] = 0.0

    mu = mu_ref[...]
    sigma = jax.nn.softplus(rho_ref[...])
    term = 0.5 * (sigma * sigma + mu * mu) - jnp.log(sigma) - 0.5
    base = i * tile_rows * 128
    idx = (base
           + jax.lax.broadcasted_iota(jnp.int32, term.shape, 0) * 128
           + jax.lax.broadcasted_iota(jnp.int32, term.shape, 1))
    kl_ref[0, 0] += jnp.sum(jnp.where(idx < n_valid, term, 0.0))


def _kl_divergence(w_mu, w_rho, b_mu, b_rho):
    mu = jnp.concatenate([w_mu.reshape(-1), b_mu.reshape(-1)])
    rho = jnp.concatenate([w_rho.reshape(-1), b_rho.reshape(-1)])
    n = mu.shape[0]
    rows_needed = -(-n // 128)
    tr = min(256, _round_up(rows_needed, 8))
    rows = _round_up(rows_needed, tr)
    pad = rows * 128 - n
    mu_p = jnp.pad(mu, (0, pad)).reshape(rows, 128).astype(jnp.float32)
    rho_p = jnp.pad(rho, (0, pad)).reshape(rows, 128).astype(jnp.float32)

    kl = pl.pallas_call(
        functools.partial(_kl_kernel, n_valid=n, tile_rows=tr),
        out_shape=jax.ShapeDtypeStruct((1, 1), jnp.float32),
        grid_spec=pltpu.PrefetchScalarGridSpec(
            num_scalar_prefetch=0,
            grid=(rows // tr,),
            in_specs=[pl.BlockSpec((tr, 128), lambda i: (i, 0)),
                      pl.BlockSpec((tr, 128), lambda i: (i, 0))],
            out_specs=pl.BlockSpec((1, 1), lambda i: (0, 0),
                                   memory_space=pltpu.SMEM),
        ),
        compiler_params=pltpu.CompilerParams(dimension_semantics=("arbitrary",)),
    )(mu_p, rho_p)
    return kl[0, 0]


# --------------------------------------------------------------------------- #
# Forward wrapper.
# --------------------------------------------------------------------------- #
def conv_norm_act(x, params, *, kernel_size, stride, padding, output_padding,
                  eps=1e-5, mul=None):
    """ConvNormAct(transpose=True) forward.  Returns (out_NCHW, kl_scalar)."""
    k, s = kernel_size, stride
    N, C_in, H, W = x.shape

    # ---- Bayesian weight sample (deterministic eps) --------------------------
    w = params["w_mu"] + jax.nn.softplus(params["w_rho"]) * params["w_eps"]
    b = params["b_mu"] + jax.nn.softplus(params["b_rho"]) * params["b_eps"]
    C_out = w.shape[1]
    C_out_p = _round_up(C_out, 8)            # sublane-aligned channel count

    # ---- geometry: conv-transpose == stride-1 conv over dilated input --------
    H_up, W_up = (H - 1) * s + 1, (W - 1) * s + 1
    pb = k - 1 - padding
    pa = k - 1 - padding + output_padding
    assert pb >= 0 and pa >= 0  # TODO(synk): support padding > k-1 via crop
    H_pad, W_pad = H_up + pb + pa, W_up + pb + pa
    H_out, W_out = H_pad - k + 1, W_pad - k + 1

    # ---- tiling: lane dim = th * W_al, a multiple of 128 ----------------------
    W_al = _round_up(W_pad, 8)
    th_unit = 128 // math.gcd(W_al, 128)
    th = _round_up(k, th_unit)
    while th * W_al < 1024 and th < H_out:
        th += th_unit
    assert th >= k
    n_ht = -(-H_out // th)
    BL = th * W_al
    HRP = (n_ht + 1) * th                     # padded input rows (incl. halo blk)
    S = n_ht * BL                             # flat padded spatial size per image

    # ---- XLA prep: dilate + pad + flatten input (bf16 for the MXU) -----------
    x_up = jnp.zeros((N, C_in, H_up, W_up), jnp.float32).at[:, :, ::s, ::s].set(x)
    x_padded = jnp.pad(
        x_up, ((0, 0), (0, 0), (pb, HRP - H_up - pb), (pb, W_al - W_up - pb)))
    x_flat = x_padded.reshape(N, C_in, HRP * W_al).astype(jnp.bfloat16)

    # weights -> (k*k, C_out_p, C_in), bf16.  w_conv[co,ci,p,q] = w[ci,co,k-1-p,k-1-q]
    w_conv = jnp.flip(w, (2, 3)).transpose(1, 0, 2, 3)
    w_t3 = w_conv.transpose(2, 3, 0, 1).reshape(k * k, C_out, C_in)
    w_t3 = jnp.pad(w_t3, ((0, 0), (0, C_out_p - C_out), (0, 0))).astype(jnp.bfloat16)
    b_p = jnp.pad(b, (0, C_out_p - C_out)).reshape(C_out_p, 1).astype(jnp.float32)

    col_mask = jnp.tile((jnp.arange(W_al) < W_out).astype(jnp.float32),
                        th).reshape(1, BL)

    vmem_cap = 48 * 1024 * 1024

    # ---- Pass 1: conv + bias + per-batch channel stats ------------------------
    kernel1 = functools.partial(_conv_stats_kernel, k=k, w_row=W_al,
                                th=th, h_out=H_out)
    y_flat, sum_nc, ssq_nc = pl.pallas_call(
        kernel1,
        out_shape=(
            jax.ShapeDtypeStruct((N, C_out_p, S), jnp.float32),
            jax.ShapeDtypeStruct((N, C_out_p, 1), jnp.float32),
            jax.ShapeDtypeStruct((N, C_out_p, 1), jnp.float32),
        ),
        grid_spec=pltpu.PrefetchScalarGridSpec(
            num_scalar_prefetch=0,
            grid=(N, n_ht),
            in_specs=[
                pl.BlockSpec((1, C_in, BL), lambda n, t: (n, 0, t)),       # main
                pl.BlockSpec((1, C_in, BL), lambda n, t: (n, 0, t + 1)),   # halo
                pl.BlockSpec((k * k, C_out_p, C_in), lambda n, t: (0, 0, 0)),
                pl.BlockSpec((C_out_p, 1), lambda n, t: (0, 0)),
                pl.BlockSpec((1, BL), lambda n, t: (0, 0)),
            ],
            out_specs=[
                pl.BlockSpec((1, C_out_p, BL), lambda n, t: (n, 0, t)),
                pl.BlockSpec((1, C_out_p, 1), lambda n, t: (n, 0, 0)),
                pl.BlockSpec((1, C_out_p, 1), lambda n, t: (n, 0, 0)),
            ],
        ),
        compiler_params=pltpu.CompilerParams(
            dimension_semantics=("parallel", "arbitrary"),
            vmem_limit_bytes=vmem_cap),
    )(x_flat, x_flat, w_t3, b_p, col_mask)

    # ---- BatchNorm (training mode: batch stats, biased variance) --------------
    cnt = jnp.float32(N * H_out * W_out)
    mean = jnp.sum(sum_nc, axis=0) / cnt                       # (C_out_p, 1)
    var = jnp.maximum(jnp.sum(ssq_nc, axis=0) / cnt - mean * mean, 0.0)
    gamma_p = jnp.pad(params["bn_gamma"], (0, C_out_p - C_out)).reshape(C_out_p, 1)
    beta_p = jnp.pad(params["bn_beta"], (0, C_out_p - C_out)).reshape(C_out_p, 1)
    scale = (gamma_p / jnp.sqrt(var + eps)).astype(jnp.float32)
    shift = (beta_p - mean * scale).astype(jnp.float32)

    # ---- Pass 2: fused norm (+mul) + ReLU, in place ---------------------------
    if mul is None:
        kernel2 = _bn_act_kernel
        extra_in, extra_specs = (), ()
    else:
        reps = C_out // mul.shape[1]
        mul_full = jnp.concatenate((mul,) * reps, axis=1)      # (N, C_out, H, W)
        mul_full = jnp.pad(
            mul_full,
            ((0, 0), (0, C_out_p - C_out), (0, n_ht * th - H_out), (0, W_al - W_out)),
            constant_values=1.0)
        mul_flat = mul_full.reshape(N, C_out_p, S).astype(jnp.float32)
        kernel2 = _bn_act_mul_kernel
        extra_in = (mul_flat,)
        extra_specs = (pl.BlockSpec((1, C_out_p, BL), lambda n, t: (n, 0, t)),)

    out_flat = pl.pallas_call(
        kernel2,
        out_shape=jax.ShapeDtypeStruct((N, C_out_p, S), jnp.float32),
        grid_spec=pltpu.PrefetchScalarGridSpec(
            num_scalar_prefetch=0,
            grid=(N, n_ht),
            in_specs=[
                pl.BlockSpec((1, C_out_p, BL), lambda n, t: (n, 0, t)),
                pl.BlockSpec((C_out_p, 1), lambda n, t: (0, 0)),
                pl.BlockSpec((C_out_p, 1), lambda n, t: (0, 0)),
                *extra_specs,
            ],
            out_specs=pl.BlockSpec((1, C_out_p, BL), lambda n, t: (n, 0, t)),
        ),
        input_output_aliases={0: 0},
        compiler_params=pltpu.CompilerParams(
            dimension_semantics=("parallel", "parallel"),
            vmem_limit_bytes=vmem_cap),
    )(y_flat, scale, shift, *extra_in)

    # layout is already channels-major; only crop the spatial/channel padding.
    out = out_flat.reshape(N, C_out_p, n_ht * th, W_al)[:, :C_out, :H_out, :W_out]

    kl = _kl_divergence(params["w_mu"], params["w_rho"],
                        params["b_mu"], params["b_rho"])
    return out, kl


# --------------------------------------------------------------------------- #
# Pure-JAX reference (f32) and parameter init.
# --------------------------------------------------------------------------- #
def _reference(x, params, *, kernel_size, stride, padding, output_padding,
               eps=1e-5, mul=None):
    k, s = kernel_size, stride
    w = params["w_mu"] + jax.nn.softplus(params["w_rho"]) * params["w_eps"]
    b = params["b_mu"] + jax.nn.softplus(params["b_rho"]) * params["b_eps"]
    w_conv = jnp.flip(w, (2, 3)).transpose(1, 0, 2, 3)
    pb = k - 1 - padding
    pa = k - 1 - padding + output_padding
    y = jax.lax.conv_general_dilated(
        x, w_conv, window_strides=(1, 1), padding=((pb, pa), (pb, pa)),
        lhs_dilation=(s, s), dimension_numbers=("NCHW", "OIHW", "NCHW"),
        precision=jax.lax.Precision.HIGHEST)
    y = y + b.reshape(1, -1, 1, 1)
    mean = y.mean(axis=(0, 2, 3), keepdims=True)
    var = y.var(axis=(0, 2, 3), keepdims=True)
    z = (y - mean) / jnp.sqrt(var + eps)
    z = z * params["bn_gamma"].reshape(1, -1, 1, 1) \
        + params["bn_beta"].reshape(1, -1, 1, 1)
    if mul is not None:
        reps = w.shape[1] // mul.shape[1]
        z = z * jnp.concatenate((mul,) * reps, axis=1)
    out = jnp.maximum(z, 0.0)

    sig = jnp.concatenate([jax.nn.softplus(params["w_rho"]).ravel(),
                           jax.nn.softplus(params["b_rho"]).ravel()])
    mu = jnp.concatenate([params["w_mu"].ravel(), params["b_mu"].ravel()])
    kl = jnp.sum(0.5 * (sig * sig + mu * mu) - jnp.log(sig) - 0.5)
    return out, kl


def init_params(key, in_channels, out_channels, kernel_size):
    k = kernel_size
    ks = jax.random.split(key, 4)
    return {
        # ConvTranspose2d weight layout: (C_in, C_out, kH, kW)
        "w_mu": 0.1 * jax.random.normal(ks[0], (in_channels, out_channels, k, k), jnp.float32),
        "w_rho": jnp.full((in_channels, out_channels, k, k), -3.0, jnp.float32),
        "w_eps": jax.random.normal(ks[1], (in_channels, out_channels, k, k), jnp.float32),
        "b_mu": 0.1 * jax.random.normal(ks[2], (out_channels,), jnp.float32),
        "b_rho": jnp.full((out_channels,), -3.0, jnp.float32),
        "b_eps": jax.random.normal(ks[3], (out_channels,), jnp.float32),
        # nn.BatchNorm2d defaults
        "bn_gamma": jnp.ones((out_channels,), jnp.float32),
        "bn_beta": jnp.zeros((out_channels,), jnp.float32),
    }


if __name__ == "__main__":
    key = jax.random.PRNGKey(0)
    kx, kp = jax.random.split(key)

    N, C_in, H, W = 2, 4, 16, 16
    C_out, k, stride, pad, out_pad = 8, 3, 2, 1, 1

    x = jax.random.normal(kx, (N, C_in, H, W), jnp.float32)
    params = init_params(kp, C_in, C_out, k)

    fwd = jax.jit(functools.partial(conv_norm_act, kernel_size=k, stride=stride,
                                    padding=pad, output_padding=out_pad))
    out, kl = fwd(x, params)
    out = jax.block_until_ready(out)
    kl = jax.block_until_ready(kl)

    H_out = (H - 1) * stride - 2 * pad + k + out_pad
    W_out = (W - 1) * stride - 2 * pad + k + out_pad
    assert out.shape == (N, C_out, H_out, W_out), out.shape
    assert out.dtype == jnp.float32 and kl.shape == ()

    # correctness sanity check against a pure-JAX f32 reference
    out_ref, kl_ref = _reference(x, params, kernel_size=k, stride=stride,
                                 padding=pad, output_padding=out_pad)
    max_err = float(jnp.max(jnp.abs(out - out_ref)))
    mean_err = float(jnp.mean(jnp.abs(out - out_ref)))
    assert max_err < 0.1 and mean_err < 0.01, (max_err, mean_err)
    assert abs(float(kl) - float(kl_ref)) <= 1e-3 * max(1.0, abs(float(kl_ref))), \
        (float(kl), float(kl_ref))

    print("KERNEL_OK")
</pallas_src>

<mosaic_0001>
module attributes {stable_mosaic.version = 11 : i64} {
  func.func @_conv_stats_kernel(%arg0: i32, %arg1: i32, %arg2: memref<1x4x1280xbf16, #tpu.memory_space<vmem>>, %arg3: memref<1x4x1280xbf16, #tpu.memory_space<vmem>>, %arg4: memref<9x8x4xbf16, #tpu.memory_space<vmem>>, %arg5: memref<8x1xf32, #tpu.memory_space<vmem>>, %arg6: memref<1x1280xf32, #tpu.memory_space<vmem>>, %arg7: memref<1x8x1280xf32, #tpu.memory_space<vmem>>, %arg8: memref<1x8x1xf32, #tpu.memory_space<vmem>>, %arg9: memref<1x8x1xf32, #tpu.memory_space<vmem>>) attributes {dimension_semantics = [#tpu.dimension_semantics<parallel>, #tpu.dimension_semantics<arbitrary>], iteration_bounds = array<i64: 2, 1>, scalar_prefetch = 0 : i64, scratch_operands = 0 : i64, tpu.core_type = #tpu.core_type<tc>, window_params = [{transform_indices = @transform_0, window_bounds = array<i64: 1, 4, 1280>}, {transform_indices = @transform_1, window_bounds = array<i64: 1, 4, 1280>}, {pipeline_mode = #tpu.pipeline_mode<synchronous>, transform_indices = @transform_2, window_bounds = array<i64: 9, 8, 4>}, {pipeline_mode = #tpu.pipeline_mode<synchronous>, transform_indices = @transform_3, window_bounds = array<i64: 8, 1>}, {pipeline_mode = #tpu.pipeline_mode<synchronous>, transform_indices = @transform_4, window_bounds = array<i64: 1, 1280>}, {transform_indices = @transform_5, window_bounds = array<i64: 1, 8, 1280>}, {transform_indices = @transform_6, window_bounds = array<i64: 1, 8, 1>}, {transform_indices = @transform_7, window_bounds = array<i64: 1, 8, 1>}]} {
    %c0 = arith.constant 0 : index
    %c0_0 = arith.constant 0 : index
    %c0_1 = arith.constant 0 : index
    %0 = vector.load %arg2[%c0, %c0_0, %c0_1] : memref<1x4x1280xbf16, #tpu.memory_space<vmem>>, vector<1x4x1280xbf16>
    %1 = vector.shape_cast %0 : vector<1x4x1280xbf16> to vector<4x1280xbf16>
    %c0_2 = arith.constant 0 : index
    %c0_3 = arith.constant 0 : index
    %c0_4 = arith.constant 0 : index
    %2 = vector.load %arg3[%c0_2, %c0_3, %c0_4] : memref<1x4x1280xbf16, #tpu.memory_space<vmem>>, vector<1x4x1280xbf16>
    %3 = vector.shape_cast %2 : vector<1x4x1280xbf16> to vector<4x1280xbf16>
    %4 = vector.extract_strided_slice %3 {offsets = [0, 0], sizes = [4, 120], strides = [1, 1]} : vector<4x1280xbf16> to vector<4x120xbf16>
    %5 = tpu.concatenate %1, %4 in 1 : vector<4x1280xbf16>, vector<4x120xbf16> -> vector<4x1400xbf16>
    %cst = arith.constant 0.000000e+00 : f32
    %6 = vector.broadcast %cst : f32 to vector<8x1280xf32>
    %c0_5 = arith.constant 0 : index
    %c0_6 = arith.constant 0 : index
    %c0_7 = arith.constant 0 : index
    %7 = vector.load %arg4[%c0_5, %c0_6, %c0_7] : memref<9x8x4xbf16, #tpu.memory_space<vmem>>, vector<1x8x4xbf16>
    %8 = vector.shape_cast %7 : vector<1x8x4xbf16> to vector<8x4xbf16>
    %9 = vector.extract_strided_slice %5 {offsets = [0, 0], sizes = [4, 1280], strides = [1, 1]} : vector<4x1400xbf16> to vector<4x1280xbf16>
    %cst_8 = arith.constant dense<0.000000e+00> : vector<8x1280xf32>
    %10 = tpu.matmul %8, %9, %cst_8 {dimension_numbers = #tpu.dot_dimension_numbers<[1], [0], [0], [1], [0, 0, 1, 1], [], []>} : vector<8x4xbf16>, vector<4x1280xbf16>, vector<8x1280xf32> -> vector<8x1280xf32>
    %11 = arith.addf %6, %10 : vector<8x1280xf32>
    %c1 = arith.constant 1 : index
    %c0_9 = arith.constant 0 : index
    %c0_10 = arith.constant 0 : index
    %12 = vector.load %arg4[%c1, %c0_9, %c0_10] : memref<9x8x4xbf16, #tpu.memory_space<vmem>>, vector<1x8x4xbf16>
    %13 = vector.shape_cast %12 : vector<1x8x4xbf16> to vector<8x4xbf16>
    %14 = vector.extract_strided_slice %5 {offsets = [0, 1], sizes = [4, 1280], strides = [1, 1]} : vector<4x1400xbf16> to vector<4x1280xbf16>
    %cst_11 = arith.constant dense<0.000000e+00> : vector<8x1280xf32>
    %15 = tpu.matmul %13, %14, %cst_11 {dimension_numbers = #tpu.dot_dimension_numbers<[1], [0], [0], [1], [0, 0, 1, 1], [], []>} : vector<8x4xbf16>, vector<4x1280xbf16>, vector<8x1280xf32> -> vector<8x1280xf32>
    %16 = arith.addf %11, %15 : vector<8x1280xf32>
    %c2 = arith.constant 2 : index
    %c0_12 = arith.constant 0 : index
    %c0_13 = arith.constant 0 : index
    %17 = vector.load %arg4[%c2, %c0_12, %c0_13] : memref<9x8x4xbf16, #tpu.memory_space<vmem>>, vector<1x8x4xbf16>
    %18 = vector.shape_cast %17 : vector<1x8x4xbf16> to vector<8x4xbf16>
    %19 = vector.extract_strided_slice %5 {offsets = [0, 2], sizes = [4, 1280], strides = [1, 1]} : vector<4x1400xbf16> to vector<4x1280xbf16>
    %cst_14 = arith.constant dense<0.000000e+00> : vector<8x1280xf32>
    %20 = tpu.matmul %18, %19, %cst_14 {dimension_numbers = #tpu.dot_dimension_numbers<[1], [0], [0], [1], [0, 0, 1, 1], [], []>} : vector<8x4xbf16>, vector<4x1280xbf16>, vector<8x1280xf32> -> vector<8x1280xf32>
    %21 = arith.addf %16, %20 : vector<8x1280xf32>
    %c3 = arith.constant 3 : index
    %c0_15 = arith.constant 0 : index
    %c0_16 = arith.constant 0 : index
    %22 = vector.load %arg4[%c3, %c0_15, %c0_16] : memref<9x8x4xbf16, #tpu.memory_space<vmem>>, vector<1x8x4xbf16>
    %23 = vector.shape_cast %22 : vector<1x8x4xbf16> to vector<8x4xbf16>
    %24 = vector.extract_strided_slice %5 {offsets = [0, 40], sizes = [4, 1280], strides = [1, 1]} : vector<4x1400xbf16> to vector<4x1280xbf16>
    %cst_17 = arith.constant dense<0.000000e+00> : vector<8x1280xf32>
    %25 = tpu.matmul %23, %24, %cst_17 {dimension_numbers = #tpu.dot_dimension_numbers<[1], [0], [0], [1], [0, 0, 1, 1], [], []>} : vector<8x4xbf16>, vector<4x1280xbf16>, vector<8x1280xf32> -> vector<8x1280xf32>
    %26 = arith.addf %21, %25 : vector<8x1280xf32>
    %c4 = arith.constant 4 : index
    %c0_18 = arith.constant 0 : index
    %c0_19 = arith.constant 0 : index
    %27 = vector.load %arg4[%c4, %c0_18, %c0_19] : memref<9x8x4xbf16, #tpu.memory_space<vmem>>, vector<1x8x4xbf16>
    %28 = vector.shape_cast %27 : vector<1x8x4xbf16> to vector<8x4xbf16>
    %29 = vector.extract_strided_slice %5 {offsets = [0, 41], sizes = [4, 1280], strides = [1, 1]} : vector<4x1400xbf16> to vector<4x1280xbf16>
    %cst_20 = arith.constant dense<0.000000e+00> : vector<8x1280xf32>
    %30 = tpu.matmul %28, %29, %cst_20 {dimension_numbers = #tpu.dot_dimension_numbers<[1], [0], [0], [1], [0, 0, 1, 1], [], []>} : vector<8x4xbf16>, vector<4x1280xbf16>, vector<8x1280xf32> -> vector<8x1280xf32>
    %31 = arith.addf %26, %30 : vector<8x1280xf32>
    %c5 = arith.constant 5 : index
    %c0_21 = arith.constant 0 : index
    %c0_22 = arith.constant 0 : index
    %32 = vector.load %arg4[%c5, %c0_21, %c0_22] : memref<9x8x4xbf16, #tpu.memory_space<vmem>>, vector<1x8x4xbf16>
    %33 = vector.shape_cast %32 : vector<1x8x4xbf16> to vector<8x4xbf16>
    %34 = vector.extract_strided_slice %5 {offsets = [0, 42], sizes = [4, 1280], strides = [1, 1]} : vector<4x1400xbf16> to vector<4x1280xbf16>
    %cst_23 = arith.constant dense<0.000000e+00> : vector<8x1280xf32>
    %35 = tpu.matmul %33, %34, %cst_23 {dimension_numbers = #tpu.dot_dimension_numbers<[1], [0], [0], [1], [0, 0, 1, 1], [], []>} : vector<8x4xbf16>, vector<4x1280xbf16>, vector<8x1280xf32> -> vector<8x1280xf32>
    %36 = arith.addf %31, %35 : vector<8x1280xf32>
    %c6 = arith.constant 6 : index
    %c0_24 = arith.constant 0 : index
    %c0_25 = arith.constant 0 : index
    %37 = vector.load %arg4[%c6, %c0_24, %c0_25] : memref<9x8x4xbf16, #tpu.memory_space<vmem>>, vector<1x8x4xbf16>
    %38 = vector.shape_cast %37 : vector<1x8x4xbf16> to vector<8x4xbf16>
    %39 = vector.extract_strided_slice %5 {offsets = [0, 80], sizes = [4, 1280], strides = [1, 1]} : vector<4x1400xbf16> to vector<4x1280xbf16>
    %cst_26 = arith.constant dense<0.000000e+00> : vector<8x1280xf32>
    %40 = tpu.matmul %38, %39, %cst_26 {dimension_numbers = #tpu.dot_dimension_numbers<[1], [0], [0], [1], [0, 0, 1, 1], [], []>} : vector<8x4xbf16>, vector<4x1280xbf16>, vector<8x1280xf32> -> vector<8x1280xf32>
    %41 = arith.addf %36, %40 : vector<8x1280xf32>
    %c7 = arith.constant 7 : index
    %c0_27 = arith.constant 0 : index
    %c0_28 = arith.constant 0 : index
    %42 = vector.load %arg4[%c7, %c0_27, %c0_28] : memref<9x8x4xbf16, #tpu.memory_space<vmem>>, vector<1x8x4xbf16>
    %43 = vector.shape_cast %42 : vector<1x8x4xbf16> to vector<8x4xbf16>
    %44 = vector.extract_strided_slice %5 {offsets = [0, 81], sizes = [4, 1280], strides = [1, 1]} : vector<4x1400xbf16> to vector<4x1280xbf16>
    %cst_29 = arith.constant dense<0.000000e+00> : vector<8x1280xf32>
    %45 = tpu.matmul %43, %44, %cst_29 {dimension_numbers = #tpu.dot_dimension_numbers<[1], [0], [0], [1], [0, 0, 1, 1], [], []>} : vector<8x4xbf16>, vector<4x1280xbf16>, vector<8x1280xf32> -> vector<8x1280xf32>
    %46 = arith.addf %41, %45 : vector<8x1280xf32>
    %c8 = arith.constant 8 : index
    %c0_30 = arith.constant 0 : index
    %c0_31 = arith.constant 0 : index
    %47 = vector.load %arg4[%c8, %c0_30, %c0_31] : memref<9x8x4xbf16, #tpu.memory_space<vmem>>, vector<1x8x4xbf16>
    %48 = vector.shape_cast %47 : vector<1x8x4xbf16> to vector<8x4xbf16>
    %49 = vector.extract_strided_slice %5 {offsets = [0, 82], sizes = [4, 1280], strides = [1, 1]} : vector<4x1400xbf16> to vector<4x1280xbf16>
    %cst_32 = arith.constant dense<0.000000e+00> : vector<8x1280xf32>
    %50 = tpu.matmul %48, %49, %cst_32 {dimension_numbers = #tpu.dot_dimension_numbers<[1], [0], [0], [1], [0, 0, 1, 1], [], []>} : vector<8x4xbf16>, vector<4x1280xbf16>, vector<8x1280xf32> -> vector<8x1280xf32>
    %51 = arith.addf %46, %50 : vector<8x1280xf32>
    %c0_33 = arith.constant 0 : index
    %c0_34 = arith.constant 0 : index
    %52 = vector.load %arg5[%c0_33, %c0_34] : memref<8x1xf32, #tpu.memory_space<vmem>>, vector<8x1xf32>
    %53 = vector.broadcast %52 : vector<8x1xf32> to vector<8x1280xf32>
    %54 = arith.addf %51, %53 : vector<8x1280xf32>
    %c0_35 = arith.constant 0 : index
    %c0_36 = arith.constant 0 : index
    %c0_37 = arith.constant 0 : index
    %55 = vector.load %arg7[%c0_35, %c0_36, %c0_37] : memref<1x8x1280xf32, #tpu.memory_space<vmem>>, vector<1x8x1280xf32>
    %56 = vector.shape_cast %55 : vector<1x8x1280xf32> to vector<8x1280xf32>
    %57 = vector.shape_cast %54 : vector<8x1280xf32> to vector<1x8x1280xf32>
    tpu.vector_store %arg7[%c0_35, %c0_36, %c0_37], %57 {strides = array<i32>} : memref<1x8x1280xf32, #tpu.memory_space<vmem>>, vector<1x8x1280xf32>,
    %c32_i32 = arith.constant 32 : i32
    %58 = arith.muli %arg1, %c32_i32 : i32
    %c32_i32_38 = arith.constant 32 : i32
    %59 = arith.subi %c32_i32_38, %58 : i32
    %c32_i32_39 = arith.constant 32 : i32
    %60 = arith.minsi %c32_i32_39, %59 : i32
    %61 = tpu.iota {dimensions = array<i32: 1>} : vector<1x1280xi32>
    %c40_i32 = arith.constant 40 : i32
    %62 = arith.muli %60, %c40_i32 : i32
    %63 = vector.broadcast %62 : i32 to vector<1x1280xi32>
    %64 = arith.cmpi slt, %61, %63 : vector<1x1280xi32>
    %c0_40 = arith.constant 0 : index
    %c0_41 = arith.constant 0 : index
    %65 = vector.load %arg6[%c0_40, %c0_41] : memref<1x1280xf32, #tpu.memory_space<vmem>>, vector<1x1280xf32>
    %cst_42 = arith.constant 0.000000e+00 : f32
    %66 = vector.broadcast %cst_42 : f32 to vector<1x1280xf32>
    %67 = arith.select %64, %65, %66 : vector<1x1280xi1>, vector<1x1280xf32>
    %68 = vector.broadcast %67 : vector<1x1280xf32> to vector<8x1280xf32>
    %69 = arith.mulf %54, %68 : vector<8x1280xf32>
    %c0_i32 = arith.constant 0 : i32
    %70 = arith.cmpi eq, %arg1, %c0_i32 : i32
    %71 = arith.extui %70 : i1 to i32
    %c0_i32_43 = arith.constant 0 : i32
    %72 = arith.cmpi ne, %71, %c0_i32_43 : i32
    scf.if %72 {
      %cst_58 = arith.constant 0.000000e+00 : f32
      %90 = vector.broadcast %cst_58 : f32 to vector<1x8x1xf32>
      %c0_59 = arith.constant 0 : index
      %c0_60 = arith.constant 0 : index
      %c0_61 = arith.constant 0 : index
      %91 = vector.load %arg8[%c0_59, %c0_60, %c0_61] : memref<1x8x1xf32, #tpu.memory_space<vmem>>, vector<1x8x1xf32>
      tpu.vector_store %arg8[%c0_59, %c0_60, %c0_61], %90 {strides = array<i32>} : memref<1x8x1xf32, #tpu.memory_space<vmem>>, vector<1x8x1xf32>,
      %cst_62 = arith.constant 0.000000e+00 : f32
      %92 = vector.broadcast %cst_62 : f32 to vector<1x8x1xf32>
      %c0_63 = arith.constant 0 : index
      %c0_64 = arith.constant 0 : index
      %c0_65 = arith.constant 0 : index
      %93 = vector.load %arg9[%c0_63, %c0_64, %c0_65] : memref<1x8x1xf32, #tpu.memory_space<vmem>>, vector<1x8x1xf32>
      tpu.vector_store %arg9[%c0_63, %c0_64, %c0_65], %92 {strides = array<i32>} : memref<1x8x1xf32, #tpu.memory_space<vmem>>, vector<1x8x1xf32>,
    } else {
    }
    %c0_44 = arith.constant 0 : index
    %c0_45 = arith.constant 0 : index
    %c0_46 = arith.constant 0 : index
    %73 = vector.load %arg8[%c0_44, %c0_45, %c0_46] : memref<1x8x1xf32, #tpu.memory_space<vmem>>, vector<1x8x1xf32>
    %74 = vector.shape_cast %73 : vector<1x8x1xf32> to vector<8x1xf32>
    %cst_47 = arith.constant dense<0.000000e+00> : vector<8xf32>
    %75 = vector.multi_reduction <add>, %69, %cst_47 [1] : vector<8x1280xf32> to vector<8xf32>
    %76 = vector.shape_cast %75 : vector<8xf32> to vector<8x1xf32>
    %77 = arith.addf %74, %76 : vector<8x1xf32>
    %c0_48 = arith.constant 0 : index
    %c0_49 = arith.constant 0 : index
    %c0_50 = arith.constant 0 : index
    %78 = vector.load %arg8[%c0_48, %c0_49, %c0_50] : memref<1x8x1xf32, #tpu.memory_space<vmem>>, vector<1x8x1xf32>
    %79 = vector.shape_cast %78 : vector<1x8x1xf32> to vector<8x1xf32>
    %80 = vector.shape_cast %77 : vector<8x1xf32> to vector<1x8x1xf32>
    tpu.vector_store %arg8[%c0_48, %c0_49, %c0_50], %80 {strides = array<i32>} : memref<1x8x1xf32, #tpu.memory_space<vmem>>, vector<1x8x1xf32>,
    %c0_51 = arith.constant 0 : index
    %c0_52 = arith.constant 0 : index
    %c0_53 = arith.constant 0 : index
    %81 = vector.load %arg9[%c0_51, %c0_52, %c0_53] : memref<1x8x1xf32, #tpu.memory_space<vmem>>, vector<1x8x1xf32>
    %82 = vector.shape_cast %81 : vector<1x8x1xf32> to vector<8x1xf32>
    %83 = arith.mulf %69, %54 : vector<8x1280xf32>
    %cst_54 = arith.constant dense<0.000000e+00> : vector<8xf32>
    %84 = vector.multi_reduction <add>, %83, %cst_54 [1] : vector<8x1280xf32> to vector<8xf32>
    %85 = vector.shape_cast %84 : vector<8xf32> to vector<8x1xf32>
    %86 = arith.addf %82, %85 : vector<8x1xf32>
    %c0_55 = arith.constant 0 : index
    %c0_56 = arith.constant 0 : index
    %c0_57 = arith.constant 0 : index
    %87 = vector.load %arg9[%c0_55, %c0_56, %c0_57] : memref<1x8x1xf32, #tpu.memory_space<vmem>>, vector<1x8x1xf32>
    %88 = vector.shape_cast %87 : vector<1x8x1xf32> to vector<8x1xf32>
    %89 = vector.shape_cast %86 : vector<8x1xf32> to vector<1x8x1xf32>
    tpu.vector_store %arg9[%c0_55, %c0_56, %c0_57], %89 {strides = array<i32>} : memref<1x8x1xf32, #tpu.memory_space<vmem>>, vector<1x8x1xf32>,
    return
  }
  func.func @transform_0(%arg0: i32, %arg1: i32) -> (i32, i32, i32) {
    %c0_i32 = arith.constant 0 : i32
    %c0_i32_0 = arith.constant 0 : i32
    return %arg0, %c0_i32, %arg1 : i32, i32, i32
  }
  func.func @transform_1(%arg0: i32, %arg1: i32) -> (i32, i32, i32) {
    %c1_i32 = arith.constant 1 : i32
    %0 = arith.addi %arg1, %c1_i32 : i32
    %c0_i32 = arith.constant 0 : i32
    %c0_i32_0 = arith.constant 0 : i32
    return %arg0, %c0_i32, %0 : i32, i32, i32
  }
  func.func @transform_2(%arg0: i32, %arg1: i32) -> (i32, i32, i32) {
    %c0_i32 = arith.constant 0 : i32
    %c0_i32_0 = arith.constant 0 : i32
    %c0_i32_1 = arith.constant 0 : i32
    %c0_i32_2 = arith.constant 0 : i32
    return %c0_i32, %c0_i32_0, %c0_i32_1 : i32, i32, i32
  }
  func.func @transform_3(%arg0: i32, %arg1: i32) -> (i32, i32) {
    %c0_i32 = arith.constant 0 : i32
    %c0_i32_0 = arith.constant 0 : i32
    %c0_i32_1 = arith.constant 0 : i32
    return %c0_i32, %c0_i32_0 : i32, i32
  }
  func.func @transform_4(%arg0: i32, %arg1: i32) -> (i32, i32) {
    %c0_i32 = arith.constant 0 : i32
    %c0_i32_0 = arith.constant 0 : i32
    %c0_i32_1 = arith.constant 0 : i32
    return %c0_i32, %c0_i32_0 : i32, i32
  }
  func.func @transform_5(%arg0: i32, %arg1: i32) -> (i32, i32, i32) {
    %c0_i32 = arith.constant 0 : i32
    %c0_i32_0 = arith.constant 0 : i32
    return %arg0, %c0_i32, %arg1 : i32, i32, i32
  }
  func.func @transform_6(%arg0: i32, %arg1: i32) -> (i32, i32, i32) {
    %c0_i32 = arith.constant 0 : i32
    %c0_i32_0 = arith.constant 0 : i32
    %c0_i32_1 = arith.constant 0 : i32
    return %arg0, %c0_i32, %c0_i32_0 : i32, i32, i32
  }
  func.func @transform_7(%arg0: i32, %arg1: i32) -> (i32, i32, i32) {
    %c0_i32 = arith.constant 0 : i32
    %c0_i32_0 = arith.constant 0 : i32
    %c0_i32_1 = arith.constant 0 : i32
    return %arg0, %c0_i32, %c0_i32_0 : i32, i32, i32
  }
}

module attributes {stable_mosaic.version = 11 : i64} {
  func.func @_bn_act_kernel(%arg0: i32, %arg1: i32, %arg2: memref<1x8x1280xf32, #tpu.memory_space<vmem>>, %arg3: memref<8x1xf32, #tpu.memory_space<vmem>>, %arg4: memref<8x1xf32, #tpu.memory_space<vmem>>, %arg5: memref<1x8x1280xf32, #tpu.memory_space<vmem>>) attributes {dimension_semantics = [#tpu.dimension_semantics<parallel>, #tpu.dimension_semantics<parallel>], iteration_bounds = array<i64: 2, 1>, scalar_prefetch = 0 : i64, scratch_operands = 0 : i64, tpu.core_type = #tpu.core_type<tc>, window_params = [{transform_indices = @transform_0, window_bounds = array<i64: 1, 8, 1280>}, {pipeline_mode = #tpu.pipeline_mode<synchronous>, transform_indices = @transform_1, window_bounds = array<i64: 8, 1>}, {pipeline_mode = #tpu.pipeline_mode<synchronous>, transform_indices = @transform_2, window_bounds = array<i64: 8, 1>}, {transform_indices = @transform_3, window_bounds = array<i64: 1, 8, 1280>}]} {
    %c0 = arith.constant 0 : index
    %c0_0 = arith.constant 0 : index
    %c0_1 = arith.constant 0 : index
    %0 = vector.load %arg2[%c0, %c0_0, %c0_1] : memref<1x8x1280xf32, #tpu.memory_space<vmem>>, vector<1x8x1280xf32>
    %1 = vector.shape_cast %0 : vector<1x8x1280xf32> to vector<8x1280xf32>
    %c0_2 = arith.constant 0 : index
    %c0_3 = arith.constant 0 : index
    %2 = vector.load %arg3[%c0_2, %c0_3] : memref<8x1xf32, #tpu.memory_space<vmem>>, vector<8x1xf32>
    %3 = vector.broadcast %2 : vector<8x1xf32> to vector<8x1280xf32>
    %4 = arith.mulf %1, %3 : vector<8x1280xf32>
    %c0_4 = arith.constant 0 : index
    %c0_5 = arith.constant 0 : index
    %5 = vector.load %arg4[%c0_4, %c0_5] : memref<8x1xf32, #tpu.memory_space<vmem>>, vector<8x1xf32>
    %6 = vector.broadcast %5 : vector<8x1xf32> to vector<8x1280xf32>
    %7 = arith.addf %4, %6 : vector<8x1280xf32>
    %cst = arith.constant 0.000000e+00 : f32
    %8 = vector.broadcast %cst : f32 to vector<8x1280xf32>
    %9 = arith.maximumf %7, %8 : vector<8x1280xf32>
    %c0_6 = arith.constant 0 : index
    %c0_7 = arith.constant 0 : index
    %c0_8 = arith.constant 0 : index
    %10 = vector.load %arg5[%c0_6, %c0_7, %c0_8] : memref<1x8x1280xf32, #tpu.memory_space<vmem>>, vector<1x8x1280xf32>
    %11 = vector.shape_cast %10 : vector<1x8x1280xf32> to vector<8x1280xf32>
    %12 = vector.shape_cast %9 : vector<8x1280xf32> to vector<1x8x1280xf32>
    tpu.vector_store %arg5[%c0_6, %c0_7, %c0_8], %12 {strides = array<i32>} : memref<1x8x1280xf32, #tpu.memory_space<vmem>>, vector<1x8x1280xf32>,
    return
  }
  func.func @transform_0(%arg0: i32, %arg1: i32) -> (i32, i32, i32) {
    %c0_i32 = arith.constant 0 : i32
    %c0_i32_0 = arith.constant 0 : i32
    return %arg0, %c0_i32, %arg1 : i32, i32, i32
  }
  func.func @transform_1(%arg0: i32, %arg1: i32) -> (i32, i32) {
    %c0_i32 = arith.constant 0 : i32
    %c0_i32_0 = arith.constant 0 : i32
    %c0_i32_1 = arith.constant 0 : i32
    return %c0_i32, %c0_i32_0 : i32, i32
  }
  func.func @transform_2(%arg0: i32, %arg1: i32) -> (i32, i32) {
    %c0_i32 = arith.constant 0 : i32
    %c0_i32_0 = arith.constant 0 : i32
    %c0_i32_1 = arith.constant 0 : i32
    return %c0_i32, %c0_i32_0 : i32, i32
  }
  func.func @transform_3(%arg0: i32, %arg1: i32) -> (i32, i32, i32) {
    %c0_i32 = arith.constant 0 : i32
    %c0_i32_0 = arith.constant 0 : i32
    return %arg0, %c0_i32, %arg1 : i32, i32, i32
  }
}

module attributes {stable_mosaic.version = 11 : i64} {
  func.func @_kl_kernel(%arg0: i32, %arg1: memref<8x128xf32, #tpu.memory_space<vmem>>, %arg2: memref<8x128xf32, #tpu.memory_space<vmem>>, %arg3: memref<1x1xf32, #tpu.memory_space<smem>>) attributes {dimension_semantics = [#tpu.dimension_semantics<arbitrary>], iteration_bounds = array<i64: 1>, scalar_prefetch = 0 : i64, scratch_operands = 0 : i64, tpu.core_type = #tpu.core_type<tc>, window_params = [{transform_indices = @transform_0, window_bounds = array<i64: 8, 128>}, {transform_indices = @transform_1, window_bounds = array<i64: 8, 128>}, {transform_indices = @transform_2, window_bounds = array<i64: 1, 1>}]} {
    %c0_i32 = arith.constant 0 : i32
    %0 = arith.cmpi eq, %arg0, %c0_i32 : i32
    %1 = arith.extui %0 : i1 to i32
    %c0_i32_0 = arith.constant 0 : i32
    %2 = arith.cmpi ne, %1, %c0_i32_0 : i32
    scf.if %2 {
      %cst_14 = arith.constant 0.000000e+00 : f32
      %c0_15 = arith.constant 0 : index
      %c0_16 = arith.constant 0 : index
      %48 = memref.load %arg3[%c0_15, %c0_16] : memref<1x1xf32, #tpu.memory_space<smem>>
      memref.store %cst_14, %arg3[%c0_15, %c0_16] : memref<1x1xf32, #tpu.memory_space<smem>>
    } else {
    }
    %c0 = arith.constant 0 : index
    %c0_1 = arith.constant 0 : index
    %3 = vector.load %arg1[%c0, %c0_1] : memref<8x128xf32, #tpu.memory_space<vmem>>, vector<8x128xf32>
    %c0_2 = arith.constant 0 : index
    %c0_3 = arith.constant 0 : index
    %4 = vector.load %arg2[%c0_2, %c0_3] : memref<8x128xf32, #tpu.memory_space<vmem>>, vector<8x128xf32>
    %cst = arith.constant 0.000000e+00 : f32
    %5 = vector.broadcast %cst : f32 to vector<8x128xf32>
    %6 = arith.maximumf %4, %5 : vector<8x128xf32>
    %7 = vector.broadcast %cst : f32 to vector<8x128xf32>
    %8 = arith.subf %4, %7 : vector<8x128xf32>
    %9 = arith.cmpf one, %8, %8 : vector<8x128xf32>
    %10 = vector.broadcast %cst : f32 to vector<8x128xf32>
    %11 = arith.addf %4, %10 : vector<8x128xf32>
    %12 = math.absf %8 : vector<8x128xf32>
    %cst_4 = arith.constant 0.000000e+00 : f32
    %13 = vector.broadcast %cst_4 : f32 to vector<8x128xf32>
    %14 = arith.subf %13, %12 : vector<8x128xf32>
    %15 = math.exp %14 : vector<8x128xf32>
    %16 = math.log1p %15 : vector<8x128xf32>
    %17 = arith.addf %6, %16 : vector<8x128xf32>
    %18 = arith.select %9, %11, %17 : vector<8x128xi1>, vector<8x128xf32>
    %19 = arith.mulf %18, %18 : vector<8x128xf32>
    %20 = arith.mulf %3, %3 : vector<8x128xf32>
    %21 = arith.addf %19, %20 : vector<8x128xf32>
    %cst_5 = arith.constant 5.000000e-01 : f32
    %22 = vector.broadcast %cst_5 : f32 to vector<8x128xf32>
    %23 = arith.mulf %22, %21 : vector<8x128xf32>
    %24 = math.log %18 : vector<8x128xf32>
    %25 = arith.subf %23, %24 : vector<8x128xf32>
    %cst_6 = arith.constant 5.000000e-01 : f32
    %26 = vector.broadcast %cst_6 : f32 to vector<8x128xf32>
    %27 = arith.subf %25, %26 : vector<8x128xf32>
    %c8_i32 = arith.constant 8 : i32
    %28 = arith.muli %arg0, %c8_i32 : i32
    %c128_i32 = arith.constant 128 : i32
    %29 = arith.muli %28, %c128_i32 : i32
    %30 = tpu.iota {dimensions = array<i32: 0>} : vector<8x128xi32>
    %c128_i32_7 = arith.constant 128 : i32
    %31 = vector.broadcast %c128_i32_7 : i32 to vector<8x128xi32>
    %32 = arith.muli %30, %31 : vector<8x128xi32>
    %33 = vector.broadcast %29 : i32 to vector<8x128xi32>
    %34 = arith.addi %33, %32 : vector<8x128xi32>
    %35 = tpu.iota {dimensions = array<i32: 1>} : vector<8x128xi32>
    %36 = arith.addi %34, %35 : vector<8x128xi32>
    %c0_8 = arith.constant 0 : index
    %c0_9 = arith.constant 0 : index
    %37 = memref.load %arg3[%c0_8, %c0_9] : memref<1x1xf32, #tpu.memory_space<smem>>
    %c296_i32 = arith.constant 296 : i32
    %38 = vector.broadcast %c296_i32 : i32 to vector<8x128xi32>
    %39 = arith.cmpi slt, %36, %38 : vector<8x128xi32>
    %cst_10 = arith.constant 0.000000e+00 : f32
    %40 = vector.broadcast %cst_10 : f32 to vector<8x128xf32>
    %41 = arith.select %39, %27, %40 : vector<8x128xi1>, vector<8x128xf32>
    %42 = vector.shape_cast %41 : vector<8x128xf32> to vector<1x8x128xf32>
    %cst_11 = arith.constant dense<0.000000e+00> : vector<1xf32>
    %43 = vector.multi_reduction <add>, %42, %cst_11 [1, 2] : vector<1x8x128xf32> to vector<1xf32>
    %44 = vector.shape_cast %43 : vector<1xf32> to vector<1x1x1xf32>
    %45 = vector.extract %44[0, 0, 0] : f32 from vector<1x1x1xf32>
    %46 = arith.addf %37, %45 : f32
    %c0_12 = arith.constant 0 : index
    %c0_13 = arith.constant 0 : index
    %47 = memref.load %arg3[%c0_12, %c0_13] : memref<1x1xf32, #tpu.memory_space<smem>>
    memref.store %46, %arg3[%c0_12, %c0_13] : memref<1x1xf32, #tpu.memory_space<smem>>
    return
  }
  func.func @transform_0(%arg0: i32) -> (i32, i32) {
    %c0_i32 = arith.constant 0 : i32
    %c0_i32_0 = arith.constant 0 : i32
    return %arg0, %c0_i32 : i32, i32
  }
  func.func @transform_1(%arg0: i32) -> (i32, i32) {
    %c0_i32 = arith.constant 0 : i32
    %c0_i32_0 = arith.constant 0 : i32
    return %arg0, %c0_i32 : i32, i32
  }
  func.func @transform_2(%arg0: i32) -> (i32, i32) {
    %c0_i32 = arith.constant 0 : i32
    %c0_i32_0 = arith.constant 0 : i32
    %c0_i32_1 = arith.constant 0 : i32
    return %c0_i32, %c0_i32_0 : i32, i32
  }
}

</mosaic_0001>

<llo_original>
// kernel: tile.8
$region0: #{tile.8}
  #allocation0 [shape = 's32[1]{0}', space=sflag, size = 0x4, scoped, tag = 'scoped memory for tile.8']
  %s0 = inlined_call_operand.vmem [shape: f32[40], index: 0, kind: input, shape index: {}]
  %s1 = inlined_call_operand.vmem [shape: f32[32,40], index: 1, kind: output, shape index: {}]
  // Predicated region
  $region2: #{tile.8} parent=0 // pred_check
    _
  $region3: #{tile.8} parent=0 // pred_check_branch
    %3 = sbr.rel (0) target = $region5
  $region4: #{tile.8} parent=0 // pred_region
    _
  $region5: #{tile.8} parent=0 // pred_fallthru
    _
  %v4 = vld [vmem:[%s0] ss:$0 sm:$0xff]
  %5 = vst [vmem:[%s1] sm:$0xff] %v4
  %s6 = scalar_lea.vmem %s1, 8
  %7 = vst [vmem:[%s6] sm:$0xff] %v4
  %s8 = scalar_lea.vmem %s1, 16
  %9 = vst [vmem:[%s8] sm:$0xff] %v4
  %s10 = scalar_lea.vmem %s1, 24
  %11 = vst [vmem:[%s10] sm:$0xff] %v4

// kernel: tile.9
$region0: #{tile.9}
  %s0 = inlined_call_operand.vmem [shape: f32[32,40], index: 0, kind: input, shape index: {}]
  %s1 = inlined_call_operand.vmem [shape: f32[1,1280], index: 1, kind: output, shape index: {}]
  $region1: #{tile.9} parent=0
    #allocation0 [shape = 'u8[40960]{0}', space=vmem, size = 0xa000, scoped, tag = 'scoped mem for output reshape']
    %s2 = smov 3
    %v3 = vld [vmem:[%s0] ss:$16 sm:%s2]
    %vm4 = vcmask 326656
    %5 = vst.msk [vmem:[#allocation0] ss:$40 sm:$0x3] %vm4, %v3
    %s6 = scalar_lea.vmem %s0, 3
    %s7 = smov 3
    %v8 = vld [vmem:[%s6] ss:$16 sm:%s7]
    %s9 = scalar_lea.vmem %s0, 3
    %s10 = smov 3
    %v11 = vld [vmem:[%s9] ss:$16 sm:%s10]
    %vm12 = vcmask 64512
    %v13 = vsel %vm12, %v11, %v8
    %14 = vrot.lane.b32.xlu0 %v13, 120
    %v15 = vpop.permute.xlu0 %14
    %vm16 = vcmask 261120
    %s17 = scalar_lea.vmem [#allocation0], 8
    %18 = vst.msk [vmem:[%s17] ss:$40 sm:$0x3] %vm16, %v15
    %vm19 = vcmask 1048512
    %20 = vst.msk [vmem:[#allocation0] ss:$40 sm:$0x3] %vm19, %v15
    %s21 = scalar_lea.vmem %s0, 6
    %s22 = smov 3
    %v23 = vld [vmem:[%s21] ss:$16 sm:%s22]
    %s24 = scalar_lea.vmem %s0, 6
    %s25 = smov 3
    %v26 = vld [vmem:[%s24] ss:$16 sm:%s25]
    %vm27 = vcmask 130048
    %v28 = vsel %vm27, %v26, %v23
    %29 = vrot.lane.b32.xlu0 %v28, 112
    %v30 = vpop.permute.xlu0 %29
    %vm31 = vcmask 195584
    %s32 = scalar_lea.vmem [#allocation0], 16
    %33 = vst.msk [vmem:[%s32] ss:$40 sm:$0x3] %vm31, %v30
    %vm34 = vcmask 1048448
    %s35 = scalar_lea.vmem [#allocation0], 8
    %36 = vst.msk [vmem:[%s35] ss:$40 sm:$0x3] %vm34, %v30
    %s37 = scalar_lea.vmem %s0, 25
    %s38 = smov 3
    %v39 = vld [vmem:[%s37] ss:$-16 sm:%s38]
    %s40 = scalar_lea.vmem %s0, 9
    %s41 = smov 3
    %v42 = vld [vmem:[%s40] ss:$16 sm:%s41]
    %vm43 = vcmask 195584
    %v44 = vsel %vm43, %v42, %v39
    %45 = vrot.lane.b32.xlu0 %v44, 104
    %v46 = vpop.permute.xlu0 %45
    %vm47 = vcmask 130048
    %s48 = scalar_lea.vmem [#allocation0], 64
    %49 = vst.msk [vmem:[%s48] ss:$-40 sm:$0x3] %vm47, %v46
    %vm50 = vcmask 1048384
    %s51 = scalar_lea.vmem [#allocation0], 16
    %52 = vst.msk [vmem:[%s51] ss:$40 sm:$0x3] %vm50, %v46
    %s53 = scalar_lea.vmem %s0, 12
    %s54 = smov 3
    %v55 = vld [vmem:[%s53] ss:$16 sm:%s54]
    %s56 = scalar_lea.vmem %s0, 28
    %s57 = smov 3
    %v58 = vld [vmem:[%s56] ss:$-16 sm:%s57]
    %vm59 = vcmask 261120
    %v60 = vsel %vm59, %v58, %v55
    %61 = vrot.lane.b32.xlu0 %v60, 96
    %v62 = vpop.permute.xlu0 %61
    %vm63 = vcmask 64512
    %s64 = scalar_lea.vmem [#allocation0], 32
    %65 = vst.msk [vmem:[%s64] ss:$40 sm:$0x3] %vm63, %v62
    %vm66 = vcmask 1048320
    %s67 = scalar_lea.vmem [#allocation0], 64
    %68 = vst.msk [vmem:[%s67] ss:$-40 sm:$0x3] %vm66, %v62
    %s69 = scalar_lea.vmem %s0, 15
    %s70 = smov 3
    %v71 = vld [vmem:[%s69] ss:$16 sm:%s70]
    %72 = vrot.lane.b32.xlu0 %v71, 88
    %v73 = vpop.permute.xlu0 %72
    %vm74 = vcmask 1048256
    %s75 = scalar_lea.vmem [#allocation0], 32
    %76 = vst.msk [vmem:[%s75] ss:$40 sm:$0x3] %vm74, %v73
    %s77 = scalar_lea.vmem %s0, 2
    %s78 = smov 3
    %v79 = vld [vmem:[%s77] ss:$16 sm:%s78]
    %80 = vrot.lane.b32.xlu0 %v79, 80
    %v81 = vpop.permute.xlu0 %80
    %vm82 = vcmask 982656
    %83 = vst.msk [vmem:[#allocation0] ss:$40 sm:$0x3] %vm82, %v81
    %s84 = scalar_lea.vmem %s0, 5
    %s85 = smov 3
    %v86 = vld [vmem:[%s84] ss:$16 sm:%s85]
    %87 = vrot.lane.b32.xlu0 %v86, 72
    %v88 = vpop.permute.xlu0 %87
    %vm89 = vcmask 917056
    %s90 = scalar_lea.vmem [#allocation0], 8
    %91 = vst.msk [vmem:[%s90] ss:$40 sm:$0x3] %vm89, %v88
    %s92 = scalar_lea.vmem %s0, 8
    %s93 = smov 3
    %v94 = vld [vmem:[%s92] ss:$16 sm:%s93]
    %95 = vrot.lane.b32.xlu0 %v94, 64
    %v96 = vpop.permute.xlu0 %95
    %vm97 = vcmask 851456
    %s98 = scalar_lea.vmem [#allocation0], 16
    %99 = vst.msk [vmem:[%s98] ss:$40 sm:$0x3] %vm97, %v96
    %s100 = scalar_lea.vmem %s0, 27
    %s101 = smov 3
    %v102 = vld [vmem:[%s100] ss:$-16 sm:%s101]
    %103 = vrot.lane.b32.xlu0 %v102, 56
    %v104 = vpop.permute.xlu0 %103
    %vm105 = vcmask 785856
    %s106 = scalar_lea.vmem [#allocation0], 64
    %107 = vst.msk [vmem:[%s106] ss:$-40 sm:$0x3] %vm105, %v104
    %s108 = scalar_lea.vmem %s0, 14
    %s109 = smov 3
    %v110 = vld [vmem:[%s108] ss:$16 sm:%s109]
    %111 = vrot.lane.b32.xlu0 %v110, 48
    %v112 = vpop.permute.xlu0 %111
    %vm113 = vcmask 720256
    %s114 = scalar_lea.vmem [#allocation0], 32
    %115 = vst.msk [vmem:[%s114] ss:$40 sm:$0x3] %vm113, %v112
    %s116 = scalar_lea.vmem %s0, 1
    %s117 = smov 3
    %v118 = vld [vmem:[%s116] ss:$16 sm:%s117]
    %119 = vrot.lane.b32.xlu0 %v118, 40
    %v120 = vpop.permute.xlu0 %119
    %vm121 = vcmask 654656
    %122 = vst.msk [vmem:[#allocation0] ss:$40 sm:$0x3] %vm121, %v120
    %s123 = scalar_lea.vmem %s0, 4
    %s124 = smov 3
    %v125 = vld [vmem:[%s123] ss:$16 sm:%s124]
    %126 = vrot.lane.b32.xlu0 %v125, 32
    %v127 = vpop.permute.xlu0 %126
    %vm128 = vcmask 589056
    %s129 = scalar_lea.vmem [#allocation0], 8
    %130 = vst.msk [vmem:[%s129] ss:$40 sm:$0x3] %vm128, %v127
    %s131 = scalar_lea.vmem %s0, 7
    %s132 = smov 3
    %v133 = vld [vmem:[%s131] ss:$16 sm:%s132]
    %134 = vrot.lane.b32.xlu0 %v133, 24
    %v135 = vpop.permute.xlu0 %134
    %vm136 = vcmask 523456
    %s137 = scalar_lea.vmem [#allocation0], 16
    %138 = vst.msk [vmem:[%s137] ss:$40 sm:$0x3] %vm136, %v135
    %s139 = scalar_lea.vmem %s0, 26
    %s140 = smov 3
    %v141 = vld [vmem:[%s139] ss:$-16 sm:%s140]
    %142 = vrot.lane.b32.xlu0 %v141, 16
    %v143 = vpop.permute.xlu0 %142
    %vm144 = vcmask 457856
    %s145 = scalar_lea.vmem [#allocation0], 64
    %146 = vst.msk [vmem:[%s145] ss:$-40 sm:$0x3] %vm144, %v143
    %s147 = scalar_lea.vmem %s0, 13
    %s148 = smov 3
    %v149 = vld [vmem:[%s147] ss:$16 sm:%s148]
    %150 = vrot.lane.b32.xlu0 %v149, 8
    %v151 = vpop.permute.xlu0 %150
    %vm152 = vcmask 392256
    %s153 = scalar_lea.vmem [#allocation0], 32
    %154 = vst.msk [vmem:[%s153] ss:$40 sm:$0x3] %vm152, %v151
    %s156 = sshllo.u32 0, 1
    %v158 = vld [vmem:[#allocation0] sm:%s156]
    %s159 = sshllo.u32 0, 1
    %160 = vst [vmem:[%s1] sm:%s159] %v158
    %s161 = scalar_lea.vmem [#allocation0], 8
    %v162 = vld [vmem:[%s161] sm:%s156]
    %s163 = sshllo.u32 0, 1
    %s164 = scalar_lea.vmem %s1, 1
    %165 = vst [vmem:[%s164] sm:%s163] %v162
    %s166 = scalar_lea.vmem [#allocation0], 16
    %v167 = vld [vmem:[%s166] sm:%s156]
    %s168 = sshllo.u32 0, 1
    %s169 = smul.addr 1, 2
    %s170 = scalar_lea.vmem %s1, %s169
    %171 = vst [vmem:[%s170] sm:%s168] %v167
    %s172 = scalar_lea.vmem [#allocation0], 24
    %v173 = vld [vmem:[%s172] sm:%s156]
    %s174 = sshllo.u32 0, 1
    %s175 = smul.addr 1, 3
    %s176 = scalar_lea.vmem %s1, %s175
    %177 = vst [vmem:[%s176] sm:%s174] %v173
    %s178 = scalar_lea.vmem [#allocation0], 32
    %v179 = vld [vmem:[%s178] sm:%s156]
    %s180 = sshllo.u32 0, 1
    %s181 = smul.addr 1, 4
    %s182 = scalar_lea.vmem %s1, %s181
    %183 = vst [vmem:[%s182] sm:%s180] %v179
    %s184 = scalar_lea.vmem [#allocation0], 40
    %v185 = vld [vmem:[%s184] sm:%s156]
    %s186 = sshllo.u32 0, 1
    %s187 = smul.addr 1, 5
    %s188 = scalar_lea.vmem %s1, %s187
    %189 = vst [vmem:[%s188] sm:%s186] %v185
    %s190 = scalar_lea.vmem [#allocation0], 48
    %v191 = vld [vmem:[%s190] sm:%s156]
    %s192 = sshllo.u32 0, 1
    %s193 = smul.addr 1, 6
    %s194 = scalar_lea.vmem %s1, %s193
    %195 = vst [vmem:[%s194] sm:%s192] %v191
    %s196 = scalar_lea.vmem [#allocation0], 56
    %v197 = vld [vmem:[%s196] sm:%s156]
    %s198 = sshllo.u32 0, 1
    %s199 = smul.addr 1, 7
    %s200 = scalar_lea.vmem %s1, %s199
    %201 = vst [vmem:[%s200] sm:%s198] %v197
    %s202 = scalar_lea.vmem [#allocation0], 64
    %v203 = vld [vmem:[%s202] sm:%s156]
    %s204 = sshllo.u32 0, 1
    %s205 = smul.addr 1, 8
    %s206 = scalar_lea.vmem %s1, %s205
    %207 = vst [vmem:[%s206] sm:%s204] %v203
    %s208 = scalar_lea.vmem [#allocation0], 72
    %v209 = vld [vmem:[%s208] sm:%s156]
    %s210 = sshllo.u32 0, 1
    %s211 = smul.addr 1, 9
    %s212 = scalar_lea.vmem %s1, %s211
    %213 = vst [vmem:[%s212] sm:%s210] %v209

// kernel: conv_norm_act.4
$region0: #{conv_norm_act.4}
  #allocation0 [shape = 'u32[]', space=smem, size = 0x4, offset = 0x4, fixed_abs, tag = 'smem constant byte address 0x4 - core index']
  #allocation1 [shape = 'u32[144,128]{1,0:T(1,128)}', space=vmem, size = 0x12000, scoped, tag = 'internal scratch']
  %s0 = inlined_call_operand.vmem [shape: f32[2,8,1280], index: 0, kind: input, shape index: {}, may-alias: {0,3}]
  %s1 = inlined_call_operand.vmem [shape: f32[8,1], index: 1, kind: input, shape index: {}]
  %s2 = inlined_call_operand.vmem [shape: f32[8,1], index: 2, kind: input, shape index: {}]
  %s3 = inlined_call_operand.vmem [shape: f32[2,8,1280], index: 3, kind: output, shape index: {}, may-alias: {0,3}]
  %s4 = sld [smem:[#allocation0]]
  $region45: #{conv_norm_act.4} parent=0
    _
  %s6 = ssub.s32 1, %s4
  %s7 = scalar_select 0, %s6, %s4
  loop: start=0, step=1, limit=4
  $region2: #{conv_norm_act.4} parent=0 // loop_pre_header
    _
  $region3: #{conv_norm_act.4} parent=0 // loop_header
    %s9 = sphi 0, %s13
    %p10 = scmp.ge.s32.totalorder %s9, 4
    %s16 = sphi 0, %s28
    %s17 = sphi 0, %s24
    %s18 = sphi 0, %s16
    %s19 = sphi 0, %s17
    %s20 = sphi 0, %s18
    %s21 = sphi 0, %s19
    %s33 = sphi 0, %s35
    %s36 = sphi 0, %s33
    %s37 = sphi 0, %s36
    %s53 = sphi 0, %s37
    %s57 = sphi 0, %s57
    %s59 = sphi 0, %s57
    %s60 = sphi 0, %s59
    %s74 = sphi 0, %s60
    %s78 = sphi 0, %s78
    %s80 = sphi 0, %s78
    %s81 = sphi 0, %s80
    %s95 = sphi 0, %s81
    %s103 = sphi 0, %s105
    %s106 = sphi 0, %s103
    %s107 = sphi 0, %s106
    %s123 = sphi 0, %s107
  $region4: #{conv_norm_act.4} parent=0 // loop_header_branch
    %12 = sbr.rel (%p10) target = $region8
  $region5: #{conv_norm_act.4} parent=0 // loop_body
    %s14 = ssub.s32 %s9, 1
    %s15 = ssub.s32 %s9, 2
    %s22 = sadd.s32 1, %s17
    %p23 = scmp.ge.s32.totalorder %s22, 1
    %s24 = scalar_select %p23, 0, %s22
    %s25 = sadd.s32 1, %s16
    %s26 = scalar_select %p23, %s25, %s16
    %p27 = scmp.ge.s32.totalorder %s26, 2
    %s28 = scalar_select %p27, 0, %s26
    %s29 = ssub.s32 %s16, %s28
    %s30 = ssub.s32 %s17, %s24
    %s31 = sor.u32 %s29, %s30
    %p32 = scmp.eq.s32.totalorder %s31, 0
    %s34 = sadd.s32 %s33, 1
    %s35 = scalar_select %p32, %s33, %s34
    %p38 = pneg %p32
    %p39 = scmp.eq.s32.totalorder %s9, 1
    %p40 = por %p38, %p39
    %p41 = scmp.ne.s32.totalorder %s33, %s36
    %p42 = scmp.eq.s32.totalorder %s9, 0
    %p43 = por %p41, %p42
    %p44 = scmp.ne.s32.totalorder %s33, %s36
    %p45 = scmp.eq.s32.totalorder %s14, 1
    %p46 = por %p44, %p45
    %p47 = scmp.ne.s32.totalorder %s36, %s37
    %p48 = scmp.eq.s32.totalorder %s14, 0
    %p49 = por %p47, %p48
    %p50 = scmp.ne.s32.totalorder %s36, %s37
    %p51 = scmp.eq.s32.totalorder %s15, 1
    %p52 = por %p50, %p51
    %p54 = scmp.ne.s32.totalorder %s37, %s53
    %p55 = scmp.eq.s32.totalorder %s15, 0
    %p56 = por %p54, %p55
    %s58 = sadd.s32 %s57, 1
    %p61 = scmp.eq.s32.totalorder %s9, 1
    %p62 = scmp.ne.s32.totalorder %s57, %s59
    %p63 = scmp.eq.s32.totalorder %s9, 0
    %p64 = por %p62, %p63
    %p65 = scmp.ne.s32.totalorder %s57, %s59
    %p66 = scmp.eq.s32.totalorder %s14, 1
    %p67 = por %p65, %p66
    %p68 = scmp.ne.s32.totalorder %s59, %s60
    %p69 = scmp.eq.s32.totalorder %s14, 0
    %p70 = por %p68, %p69
    %p71 = scmp.ne.s32.totalorder %s59, %s60
    %p72 = scmp.eq.s32.totalorder %s15, 1
    %p73 = por %p71, %p72
    %p75 = scmp.ne.s32.totalorder %s60, %s74
    %p76 = scmp.eq.s32.totalorder %s15, 0
    %p77 = por %p75, %p76
    %s79 = sadd.s32 %s78, 1
    %p82 = scmp.eq.s32.totalorder %s9, 1
    %p83 = scmp.ne.s32.totalorder %s78, %s80
    %p84 = scmp.eq.s32.totalorder %s9, 0
    %p85 = por %p83, %p84
    %p86 = scmp.ne.s32.totalorder %s78, %s80
    %p87 = scmp.eq.s32.totalorder %s14, 1
    %p88 = por %p86, %p87
    %p89 = scmp.ne.s32.totalorder %s80, %s81
    %p90 = scmp.eq.s32.totalorder %s14, 0
    %p91 = por %p89, %p90
    %p92 = scmp.ne.s32.totalorder %s80, %s81
    %p93 = scmp.eq.s32.totalorder %s15, 1
    %p94 = por %p92, %p93
    %p96 = scmp.ne.s32.totalorder %s81, %s95
    %p97 = scmp.eq.s32.totalorder %s15, 0
    %p98 = por %p96, %p97
    %s99 = ssub.s32 %s16, %s28
    %s100 = ssub.s32 %s17, %s24
    %s101 = sor.u32 %s99, %s100
    %p102 = scmp.eq.s32.totalorder %s101, 0
    %s104 = sadd.s32 %s103, 1
    %s105 = scalar_select %p102, %s103, %s104
    %p108 = pneg %p102
    %p109 = scmp.eq.s32.totalorder %s9, 1
    %p110 = por %p108, %p109
    %p111 = scmp.ne.s32.totalorder %s103, %s106
    %p112 = scmp.eq.s32.totalorder %s9, 0
    %p113 = por %p111, %p112
    %p114 = scmp.ne.s32.totalorder %s103, %s106
    %p115 = scmp.eq.s32.totalorder %s14, 1
    %p116 = por %p114, %p115
    %p117 = scmp.ne.s32.totalorder %s106, %s107
    %p118 = scmp.eq.s32.totalorder %s14, 0
    %p119 = por %p117, %p118
    %p120 = scmp.ne.s32.totalorder %s106, %s107
    %p121 = scmp.eq.s32.totalorder %s15, 1
    %p122 = por %p120, %p121
    %p124 = scmp.ne.s32.totalorder %s107, %s123
    %p125 = scmp.eq.s32.totalorder %s15, 0
    %p126 = por %p124, %p125
    %p127 = scmp.le.s32.totalorder 1, %s9
    %p128 = scmp.lt.s32.totalorder %s9, 3
    %p129 = pnand %p127, %p128
    %p130 = pneg %p129
    // Predicated region
    $region9: #{conv_norm_act.4} parent=5 // pred_check
      _
    $region10: #{conv_norm_act.4} parent=5 // pred_check_branch
      %132 = sbr.rel (%p129) target = $region12
    $region11: #{conv_norm_act.4} parent=5 // pred_region
      %s133 = ssub.s32 %s9, 1
      // Predicated region
      $region13: #{conv_norm_act.4} parent=11 // pred_check
        %p134 = pneg %p70
      $region14: #{conv_norm_act.4} parent=11 // pred_check_branch
        %136 = sbr.rel (%p134) target = $region16
      $region15: #{conv_norm_act.4} parent=11 // pred_region
        _
      $region16: #{conv_norm_act.4} parent=11 // pred_fallthru
        _
      // Predicated region
      $region17: #{conv_norm_act.4} parent=11 // pred_check
        %p137 = pneg %p91
      $region18: #{conv_norm_act.4} parent=11 // pred_check_branch
        %139 = sbr.rel (%p137) target = $region20
      $region19: #{conv_norm_act.4} parent=11 // pred_region
        _
      $region20: #{conv_norm_act.4} parent=11 // pred_fallthru
        _
    $region12: #{conv_norm_act.4} parent=5 // pred_fallthru
      _
    %p140 = scmp.lt.s32.totalorder %s9, 2
    // Predicated region
    $region21: #{conv_norm_act.4} parent=5 // pred_check
      %p141 = pneg %p140
    $region22: #{conv_norm_act.4} parent=5 // pred_check_branch
      %143 = sbr.rel (%p141) target = $region24
    $region23: #{conv_norm_act.4} parent=5 // pred_region
      // Predicated region
      $region25: #{conv_norm_act.4} parent=23 // pred_check
        %p144 = pneg %p43
      $region26: #{conv_norm_act.4} parent=23 // pred_check_branch
        %146 = sbr.rel (%p144) target = $region28
      $region27: #{conv_norm_act.4} parent=23 // pred_region
        %s147 = smul.u32 10, %s17
        %p148 = scmp.lt.s32.totalorder %s16, 1
        %s149 = scalar_select %p148, %s16, 1
        %p150 = scmp.lt.s32.totalorder %s147, 9
        %s151 = scalar_select %p150, %s147, 9
        %s152 = smul.addr %s149, 10
        %s153 = sadd.s32 %s151, %s152
        %s154 = smul.addr %s153, 8
        %s155 = scalar_lea.vmem %s0, %s154
        %s156 = smul.u32 10, %s17
      $region28: #{conv_norm_act.4} parent=23 // pred_fallthru
        _
    $region24: #{conv_norm_act.4} parent=5 // pred_fallthru
      _
    %p157 = scmp.le.s32.totalorder 1, %s9
    %p158 = scmp.lt.s32.totalorder %s9, 3
    %p159 = pnand %p157, %p158
    %p160 = pneg %p159
    // Predicated region
    $region29: #{conv_norm_act.4} parent=5 // pred_check
      _
    $region30: #{conv_norm_act.4} parent=5 // pred_check_branch
      %162 = sbr.rel (%p159) target = $region32
    $region31: #{conv_norm_act.4} parent=5 // pred_region
      %s163 = ssub.s32 %s9, 1
      %s164 = smul.u32 10, %s19
      %p165 = scmp.lt.s32.totalorder %s18, 1
      %s166 = scalar_select %p165, %s18, 1
      %p167 = scmp.lt.s32.totalorder %s164, 9
      %s168 = scalar_select %p167, %s164, 9
      %s169 = smul.addr %s166, 10
      %s170 = sadd.s32 %s168, %s169
      %s171 = smul.addr %s170, 8
      %s172 = scalar_lea.vmem %s0, %s171
      %p173 = pneg %p49
      %p174 = pneg %p46
      %p175 = pneg %p70
      %p176 = pneg %p67
      %p177 = pneg %p91
      %p178 = pneg %p88
      %p179 = pneg %p119
      %p180 = pneg %p116
      %s181 = smul.u32 10, %s19
      %p182 = scmp.lt.s32.totalorder %s18, 1
      %s183 = scalar_select %p182, %s18, 1
      %p184 = scmp.lt.s32.totalorder %s181, 9
      %s185 = scalar_select %p184, %s181, 9
      %s186 = smul.addr %s183, 10
      %s187 = sadd.s32 %s185, %s186
      %s188 = smul.addr %s187, 8
      %s189 = scalar_lea.vmem %s3, %s188
      %s190 = smul.u32 10, %s19
      %p191 = scmp.lt.s32.totalorder %s18, 1
      %s192 = scalar_select %p191, %s18, 1
      %p193 = scmp.lt.s32.totalorder %s190, 9
      %s194 = scalar_select %p193, %s190, 9
      %s195 = smul.addr %s192, 10
      %s196 = sadd.s32 %s194, %s195
      %s197 = smul.addr %s196, 8
      %s198 = scalar_lea.vmem %s0, %s197
      %s199 = smul.u32 10, %s19
      %s200 = smul.u32 10, %s19
      %p201 = scmp.lt.s32.totalorder %s18, 1
      %s202 = scalar_select %p201, %s18, 1
      %p203 = scmp.lt.s32.totalorder %s200, 9
      %s204 = scalar_select %p203, %s200, 9
      %s205 = smul.addr %s202, 10
      %s206 = sadd.s32 %s204, %s205
      %s207 = smul.addr %s206, 8
      %s208 = scalar_lea.vmem %s3, %s207
      %s209 = smul.u32 10, %s19
      %v210 = vld [vmem:[%s198] sm:$0xff]
      %v211 = vld [vmem:[%s198 + $0x8] sm:$0xff]
      %v212 = vld [vmem:[%s198 + $0x10] sm:$0xff]
      %v213 = vld [vmem:[%s198 + $0x18] sm:$0xff]
      %v214 = vld [vmem:[%s198 + $0x20] sm:$0xff]
      %v215 = vld [vmem:[%s198 + $0x28] sm:$0xff]
      %v216 = vld [vmem:[%s198 + $0x30] sm:$0xff]
      %v217 = vld [vmem:[%s198 + $0x38] sm:$0xff]
      %v218 = vld [vmem:[%s198 + $0x40] sm:$0xff]
      %v219 = vld [vmem:[%s198 + $0x48] sm:$0xff]
      %v220 = vld [vmem:[%s1] sm:$0xff]
      %222 = vset.pattern.permute.xlu0 0
      %223 = vperm.xlu0 %222, %v220
      %v224 = vpop.permute.xlu0 %223
      %v226 = vmul.f32 %v210, %v224
      %v227 = vmul.f32 %v211, %v224
      %v228 = vmul.f32 %v212, %v224
      %v229 = vmul.f32 %v213, %v224
      %v230 = vmul.f32 %v214, %v224
      %v231 = vmul.f32 %v215, %v224
      %v232 = vmul.f32 %v216, %v224
      %v233 = vmul.f32 %v217, %v224
      %v234 = vmul.f32 %v218, %v224
      %v235 = vmul.f32 %v219, %v224
      %v236 = vld [vmem:[%s2] sm:$0xff]
      %238 = vset.pattern.permute.xlu0 0
      %239 = vperm.xlu0 %238, %v236
      %v240 = vpop.permute.xlu0 %239
      %v242 = vadd.f32 %v226, %v240
      %v243 = vadd.f32 %v227, %v240
      %v244 = vadd.f32 %v228, %v240
      %v245 = vadd.f32 %v229, %v240
      %v246 = vadd.f32 %v230, %v240
      %v247 = vadd.f32 %v231, %v240
      %v248 = vadd.f32 %v232, %v240
      %v249 = vadd.f32 %v233, %v240
      %v250 = vadd.f32 %v234, %v240
      %v251 = vadd.f32 %v235, %v240
      %v252 = vmax.f32 %v242, 0.0
      %v253 = vmax.f32 %v243, 0.0
      %v254 = vmax.f32 %v244, 0.0
      %v255 = vmax.f32 %v245, 0.0
      %v256 = vmax.f32 %v246, 0.0
      %v257 = vmax.f32 %v247, 0.0
      %v258 = vmax.f32 %v248, 0.0
      %v259 = vmax.f32 %v249, 0.0
      %v260 = vmax.f32 %v250, 0.0
      %v261 = vmax.f32 %v251, 0.0
      %262 = vst [vmem:[%s208] sm:$0xff] %v252
      %263 = vst [vmem:[%s208 + $0x8] sm:$0xff] %v253
      %264 = vst [vmem:[%s208 + $0x10] sm:$0xff] %v254
      %265 = vst [vmem:[%s208 + $0x18] sm:$0xff] %v255
      %266 = vst [vmem:[%s208 + $0x20] sm:$0xff] %v256
      %267 = vst [vmem:[%s208 + $0x28] sm:$0xff] %v257
      %268 = vst [vmem:[%s208 + $0x30] sm:$0xff] %v258
      %269 = vst [vmem:[%s208 + $0x38] sm:$0xff] %v259
      %270 = vst [vmem:[%s208 + $0x40] sm:$0xff] %v260
      %271 = vst [vmem:[%s208 + $0x48] sm:$0xff] %v261
      %s272 = smul.u32 10, %s19
      %p273 = scmp.lt.s32.totalorder %s18, 1
      %s274 = scalar_select %p273, %s18, 1
      %p275 = scmp.lt.s32.totalorder %s272, 9
      %s276 = scalar_select %p275, %s272, 9
      %s277 = smul.addr %s274, 10
      %s278 = sadd.s32 %s276, %s277
      %s279 = smul.addr %s278, 8
      %s280 = scalar_lea.vmem %s3, %s279
      // Predicated region
      $region33: #{conv_norm_act.4} parent=31 // pred_check
        %p281 = pneg %p116
      $region34: #{conv_norm_act.4} parent=31 // pred_check_branch
        %283 = sbr.rel (%p281) target = $region36
      $region35: #{conv_norm_act.4} parent=31 // pred_region
        %s284 = smul.u32 10, %s19
      $region36: #{conv_norm_act.4} parent=31 // pred_fallthru
        _
    $region32: #{conv_norm_act.4} parent=5 // pred_fallthru
      _
    %p285 = scmp.le.s32.totalorder 2, %s9
    // Predicated region
    $region37: #{conv_norm_act.4} parent=5 // pred_check
      %p286 = pneg %p285
    $region38: #{conv_norm_act.4} parent=5 // pred_check_branch
      %288 = sbr.rel (%p286) target = $region40
    $region39: #{conv_norm_act.4} parent=5 // pred_region
      %s289 = ssub.s32 %s9, 2
      // Predicated region
      $region41: #{conv_norm_act.4} parent=39 // pred_check
        %p290 = pneg %p122
      $region42: #{conv_norm_act.4} parent=39 // pred_check_branch
        %292 = sbr.rel (%p290) target = $region44
      $region43: #{conv_norm_act.4} parent=39 // pred_region
        %s293 = smul.u32 10, %s21
        %p294 = scmp.lt.s32.totalorder %s20, 1
        %s295 = scalar_select %p294, %s20, 1
        %p296 = scmp.lt.s32.totalorder %s293, 9
        %s297 = scalar_select %p296, %s293, 9
        %s298 = smul.addr %s295, 10
        %s299 = sadd.s32 %s297, %s298
        %s300 = smul.addr %s299, 8
        %s301 = scalar_lea.vmem %s3, %s300
      $region44: #{conv_norm_act.4} parent=39 // pred_fallthru
        _
    $region40: #{conv_norm_act.4} parent=5 // pred_fallthru
      _
  $region6: #{conv_norm_act.4} parent=0 // loop_footer
    %s13 = sadd.s32 1, %s9
  $region7: #{conv_norm_act.4} parent=0 // loop_footer_branch
    %8 = sbr.rel target = $region3
  $region8: #{conv_norm_act.4} parent=0 // loop_exit
    _

// kernel: conv_norm_act.3
$region0: #{conv_norm_act.3}
  #allocation0 [shape = 'u32[]', space=smem, size = 0x4, offset = 0x4, fixed_abs, tag = 'smem constant byte address 0x4 - core index']
  #allocation1 [shape = 'u32[144,128]{1,0:T(1,128)}', space=vmem, size = 0x12000, scoped, tag = 'internal scratch']
  %s0 = inlined_call_operand.vmem [shape: bf16[2,4,2560], index: 0, kind: input, shape index: {}, may-alias: {0,1}]
  %s1 = inlined_call_operand.vmem [shape: bf16[2,4,2560], index: 1, kind: input, shape index: {}, may-alias: {0,1}]
  %s2 = inlined_call_operand.vmem [shape: bf16[9,8,4], index: 2, kind: input, shape index: {}]
  %s3 = inlined_call_operand.vmem [shape: f32[8,1], index: 3, kind: input, shape index: {}]
  %s4 = inlined_call_operand.vmem [shape: f32[1,1280], index: 4, kind: input, shape index: {}]
  %s5 = inlined_call_operand.vmem [shape: f32[2,8,1280], index: 5, kind: output, shape index: {0}]
  %s6 = inlined_call_operand.vmem [shape: f32[2,8,1], index: 6, kind: output, shape index: {1}]
  %s7 = inlined_call_operand.vmem [shape: f32[2,8,1], index: 7, kind: output, shape index: {2}]
  %8 = xla_tuple %s5, %s6, %s7
  %s9 = sld [smem:[#allocation0]]
  $region73: #{conv_norm_act.3} parent=0
    _
  %s11 = ssub.s32 1, %s9
  %s12 = scalar_select 0, %s11, %s9
  loop: start=0, step=1, limit=4
  $region2: #{conv_norm_act.3} parent=0 // loop_pre_header
    _
  $region3: #{conv_norm_act.3} parent=0 // loop_header
    %s14 = sphi 0, %s18
    %p15 = scmp.ge.s32.totalorder %s14, 4
    %s21 = sphi 0, %s33
    %s22 = sphi 0, %s29
    %s23 = sphi 0, %s21
    %s24 = sphi 0, %s22
    %s25 = sphi 0, %s23
    %s26 = sphi 0, %s24
    %s38 = sphi 0, %s40
    %s41 = sphi 0, %s38
    %s42 = sphi 0, %s41
    %s58 = sphi 0, %s42
    %s68 = sphi 0, %s70
    %s71 = sphi 0, %s68
    %s72 = sphi 0, %s71
    %s88 = sphi 0, %s72
    %s92 = sphi 0, %s92
    %s94 = sphi 0, %s92
    %s95 = sphi 0, %s94
    %s109 = sphi 0, %s95
    %s113 = sphi 0, %s113
    %s115 = sphi 0, %s113
    %s116 = sphi 0, %s115
    %s130 = sphi 0, %s116
    %s134 = sphi 0, %s134
    %s136 = sphi 0, %s134
    %s137 = sphi 0, %s136
    %s151 = sphi 0, %s137
    %s159 = sphi 0, %s161
    %s162 = sphi 0, %s159
    %s163 = sphi 0, %s162
    %s179 = sphi 0, %s163
    %s185 = sphi 0, %s187
    %s188 = sphi 0, %s185
    %s189 = sphi 0, %s188
    %s205 = sphi 0, %s189
    %s211 = sphi 0, %s213
    %s214 = sphi 0, %s211
    %s215 = sphi 0, %s214
    %s231 = sphi 0, %s215
  $region4: #{conv_norm_act.3} parent=0 // loop_header_branch
    %17 = sbr.rel (%p15) target = $region8
  $region5: #{conv_norm_act.3} parent=0 // loop_body
    %s19 = ssub.s32 %s14, 1
    %s20 = ssub.s32 %s14, 2
    %s27 = sadd.s32 1, %s22
    %p28 = scmp.ge.s32.totalorder %s27, 1
    %s29 = scalar_select %p28, 0, %s27
    %s30 = sadd.s32 1, %s21
    %s31 = scalar_select %p28, %s30, %s21
    %p32 = scmp.ge.s32.totalorder %s31, 2
    %s33 = scalar_select %p32, 0, %s31
    %s34 = ssub.s32 %s21, %s33
    %s35 = ssub.s32 %s22, %s29
    %s36 = sor.u32 %s34, %s35
    %p37 = scmp.eq.s32.totalorder %s36, 0
    %s39 = sadd.s32 %s38, 1
    %s40 = scalar_select %p37, %s38, %s39
    %p43 = pneg %p37
    %p44 = scmp.eq.s32.totalorder %s14, 1
    %p45 = por %p43, %p44
    %p46 = scmp.ne.s32.totalorder %s38, %s41
    %p47 = scmp.eq.s32.totalorder %s14, 0
    %p48 = por %p46, %p47
    %p49 = scmp.ne.s32.totalorder %s38, %s41
    %p50 = scmp.eq.s32.totalorder %s19, 1
    %p51 = por %p49, %p50
    %p52 = scmp.ne.s32.totalorder %s41, %s42
    %p53 = scmp.eq.s32.totalorder %s19, 0
    %p54 = por %p52, %p53
    %p55 = scmp.ne.s32.totalorder %s41, %s42
    %p56 = scmp.eq.s32.totalorder %s20, 1
    %p57 = por %p55, %p56
    %p59 = scmp.ne.s32.totalorder %s42, %s58
    %p60 = scmp.eq.s32.totalorder %s20, 0
    %p61 = por %p59, %p60
    %s62 = sadd.s32 %s22, 1
    %s63 = sadd.s32 %s29, 1
    %s64 = ssub.s32 %s21, %s33
    %s65 = ssub.s32 %s62, %s63
    %s66 = sor.u32 %s64, %s65
    %p67 = scmp.eq.s32.totalorder %s66, 0
    %s69 = sadd.s32 %s68, 1
    %s70 = scalar_select %p67, %s68, %s69
    %p73 = pneg %p67
    %p74 = scmp.eq.s32.totalorder %s14, 1
    %p75 = por %p73, %p74
    %p76 = scmp.ne.s32.totalorder %s68, %s71
    %p77 = scmp.eq.s32.totalorder %s14, 0
    %p78 = por %p76, %p77
    %p79 = scmp.ne.s32.totalorder %s68, %s71
    %p80 = scmp.eq.s32.totalorder %s19, 1
    %p81 = por %p79, %p80
    %p82 = scmp.ne.s32.totalorder %s71, %s72
    %p83 = scmp.eq.s32.totalorder %s19, 0
    %p84 = por %p82, %p83
    %p85 = scmp.ne.s32.totalorder %s71, %s72
    %p86 = scmp.eq.s32.totalorder %s20, 1
    %p87 = por %p85, %p86
    %p89 = scmp.ne.s32.totalorder %s72, %s88
    %p90 = scmp.eq.s32.totalorder %s20, 0
    %p91 = por %p89, %p90
    %s93 = sadd.s32 %s92, 1
    %p96 = scmp.eq.s32.totalorder %s14, 1
    %p97 = scmp.ne.s32.totalorder %s92, %s94
    %p98 = scmp.eq.s32.totalorder %s14, 0
    %p99 = por %p97, %p98
    %p100 = scmp.ne.s32.totalorder %s92, %s94
    %p101 = scmp.eq.s32.totalorder %s19, 1
    %p102 = por %p100, %p101
    %p103 = scmp.ne.s32.totalorder %s94, %s95
    %p104 = scmp.eq.s32.totalorder %s19, 0
    %p105 = por %p103, %p104
    %p106 = scmp.ne.s32.totalorder %s94, %s95
    %p107 = scmp.eq.s32.totalorder %s20, 1
    %p108 = por %p106, %p107
    %p110 = scmp.ne.s32.totalorder %s95, %s109
    %p111 = scmp.eq.s32.totalorder %s20, 0
    %p112 = por %p110, %p111
    %s114 = sadd.s32 %s113, 1
    %p117 = scmp.eq.s32.totalorder %s14, 1
    %p118 = scmp.ne.s32.totalorder %s113, %s115
    %p119 = scmp.eq.s32.totalorder %s14, 0
    %p120 = por %p118, %p119
    %p121 = scmp.ne.s32.totalorder %s113, %s115
    %p122 = scmp.eq.s32.totalorder %s19, 1
    %p123 = por %p121, %p122
    %p124 = scmp.ne.s32.totalorder %s115, %s116
    %p125 = scmp.eq.s32.totalorder %s19, 0
    %p126 = por %p124, %p125
    %p127 = scmp.ne.s32.totalorder %s115, %s116
    %p128 = scmp.eq.s32.totalorder %s20, 1
    %p129 = por %p127, %p128
    %p131 = scmp.ne.s32.totalorder %s116, %s130
    %p132 = scmp.eq.s32.totalorder %s20, 0
    %p133 = por %p131, %p132
    %s135 = sadd.s32 %s134, 1
    %p138 = scmp.eq.s32.totalorder %s14, 1
    %p139 = scmp.ne.s32.totalorder %s134, %s136
    %p140 = scmp.eq.s32.totalorder %s14, 0
    %p141 = por %p139, %p140
    %p142 = scmp.ne.s32.totalorder %s134, %s136
    %p143 = scmp.eq.s32.totalorder %s19, 1
    %p144 = por %p142, %p143
    %p145 = scmp.ne.s32.totalorder %s136, %s137
    %p146 = scmp.eq.s32.totalorder %s19, 0
    %p147 = por %p145, %p146
    %p148 = scmp.ne.s32.totalorder %s136, %s137
    %p149 = scmp.eq.s32.totalorder %s20, 1
    %p150 = por %p148, %p149
    %p152 = scmp.ne.s32.totalorder %s137, %s151
    %p153 = scmp.eq.s32.totalorder %s20, 0
    %p154 = por %p152, %p153
    %s155 = ssub.s32 %s21, %s33
    %s156 = ssub.s32 %s22, %s29
    %s157 = sor.u32 %s155, %s156
    %p158 = scmp.eq.s32.totalorder %s157, 0
    %s160 = sadd.s32 %s159, 1
    %s161 = scalar_select %p158, %s159, %s160
    %p164 = pneg %p158
    %p165 = scmp.eq.s32.totalorder %s14, 1
    %p166 = por %p164, %p165
    %p167 = scmp.ne.s32.totalorder %s159, %s162
    %p168 = scmp.eq.s32.totalorder %s14, 0
    %p169 = por %p167, %p168
    %p170 = scmp.ne.s32.totalorder %s159, %s162
    %p171 = scmp.eq.s32.totalorder %s19, 1
    %p172 = por %p170, %p171
    %p173 = scmp.ne.s32.totalorder %s162, %s163
    %p174 = scmp.eq.s32.totalorder %s19, 0
    %p175 = por %p173, %p174
    %p176 = scmp.ne.s32.totalorder %s162, %s163
    %p177 = scmp.eq.s32.totalorder %s20, 1
    %p178 = por %p176, %p177
    %p180 = scmp.ne.s32.totalorder %s163, %s179
    %p181 = scmp.eq.s32.totalorder %s20, 0
    %p182 = por %p180, %p181
    %s183 = ssub.s32 %s21, %s33
    %p184 = scmp.eq.s32.totalorder %s183, 0
    %s186 = sadd.s32 %s185, 1
    %s187 = scalar_select %p184, %s185, %s186
    %p190 = pneg %p184
    %p191 = scmp.eq.s32.totalorder %s14, 1
    %p192 = por %p190, %p191
    %p193 = scmp.ne.s32.totalorder %s185, %s188
    %p194 = scmp.eq.s32.totalorder %s14, 0
    %p195 = por %p193, %p194
    %p196 = scmp.ne.s32.totalorder %s185, %s188
    %p197 = scmp.eq.s32.totalorder %s19, 1
    %p198 = por %p196, %p197
    %p199 = scmp.ne.s32.totalorder %s188, %s189
    %p200 = scmp.eq.s32.totalorder %s19, 0
    %p201 = por %p199, %p200
    %p202 = scmp.ne.s32.totalorder %s188, %s189
    %p203 = scmp.eq.s32.totalorder %s20, 1
    %p204 = por %p202, %p203
    %p206 = scmp.ne.s32.totalorder %s189, %s205
    %p207 = scmp.eq.s32.totalorder %s20, 0
    %p208 = por %p206, %p207
    %s209 = ssub.s32 %s21, %s33
    %p210 = scmp.eq.s32.totalorder %s209, 0
    %s212 = sadd.s32 %s211, 1
    %s213 = scalar_select %p210, %s211, %s212
    %p216 = pneg %p210
    %p217 = scmp.eq.s32.totalorder %s14, 1
    %p218 = por %p216, %p217
    %p219 = scmp.ne.s32.totalorder %s211, %s214
    %p220 = scmp.eq.s32.totalorder %s14, 0
    %p221 = por %p219, %p220
    %p222 = scmp.ne.s32.totalorder %s211, %s214
    %p223 = scmp.eq.s32.totalorder %s19, 1
    %p224 = por %p222, %p223
    %p225 = scmp.ne.s32.totalorder %s214, %s215
    %p226 = scmp.eq.s32.totalorder %s19, 0
    %p227 = por %p225, %p226
    %p228 = scmp.ne.s32.totalorder %s214, %s215
    %p229 = scmp.eq.s32.totalorder %s20, 1
    %p230 = por %p228, %p229
    %p232 = scmp.ne.s32.totalorder %s215, %s231
    %p233 = scmp.eq.s32.totalorder %s20, 0
    %p234 = por %p232, %p233
    %p235 = scmp.le.s32.totalorder 1, %s14
    %p236 = scmp.lt.s32.totalorder %s14, 3
    %p237 = pnand %p235, %p236
    %p238 = pneg %p237
    // Predicated region
    $region9: #{conv_norm_act.3} parent=5 // pred_check
      _
    $region10: #{conv_norm_act.3} parent=5 // pred_check_branch
      %240 = sbr.rel (%p237) target = $region12
    $region11: #{conv_norm_act.3} parent=5 // pred_region
      %s241 = ssub.s32 %s14, 1
      // Predicated region
      $region13: #{conv_norm_act.3} parent=11 // pred_check
        %p242 = pneg %p105
      $region14: #{conv_norm_act.3} parent=11 // pred_check_branch
        %244 = sbr.rel (%p242) target = $region16
      $region15: #{conv_norm_act.3} parent=11 // pred_region
        _
      $region16: #{conv_norm_act.3} parent=11 // pred_fallthru
        _
      // Predicated region
      $region17: #{conv_norm_act.3} parent=11 // pred_check
        %p245 = pneg %p126
      $region18: #{conv_norm_act.3} parent=11 // pred_check_branch
        %247 = sbr.rel (%p245) target = $region20
      $region19: #{conv_norm_act.3} parent=11 // pred_region
        _
      $region20: #{conv_norm_act.3} parent=11 // pred_fallthru
        _
      // Predicated region
      $region21: #{conv_norm_act.3} parent=11 // pred_check
        %p248 = pneg %p147
      $region22: #{conv_norm_act.3} parent=11 // pred_check_branch
        %250 = sbr.rel (%p248) target = $region24
      $region23: #{conv_norm_act.3} parent=11 // pred_region
        _
      $region24: #{conv_norm_act.3} parent=11 // pred_fallthru
        _
    $region12: #{conv_norm_act.3} parent=5 // pred_fallthru
      _
    %p251 = scmp.lt.s32.totalorder %s14, 2
    // Predicated region
    $region25: #{conv_norm_act.3} parent=5 // pred_check
      %p252 = pneg %p251
    $region26: #{conv_norm_act.3} parent=5 // pred_check_branch
      %254 = sbr.rel (%p252) target = $region28
    $region27: #{conv_norm_act.3} parent=5 // pred_region
      // Predicated region
      $region29: #{conv_norm_act.3} parent=27 // pred_check
        %p255 = pneg %p48
      $region30: #{conv_norm_act.3} parent=27 // pred_check_branch
        %257 = sbr.rel (%p255) target = $region32
      $region31: #{conv_norm_act.3} parent=27 // pred_region
        %s258 = smul.u32 10, %s22
        %p259 = scmp.lt.s32.totalorder %s21, 1
        %s260 = scalar_select %p259, %s21, 1
        %p261 = scmp.lt.s32.totalorder %s258, 19
        %s262 = scalar_select %p261, %s258, 19
        %s263 = smul.addr %s260, 20
        %s264 = sadd.s32 %s262, %s263
        %s265 = smul.addr %s264, 2
        %s266 = scalar_lea.vmem %s0, %s265
        %s267 = smul.u32 10, %s22
      $region32: #{conv_norm_act.3} parent=27 // pred_fallthru
        _
      // Predicated region
      $region33: #{conv_norm_act.3} parent=27 // pred_check
        %p268 = pneg %p78
      $region34: #{conv_norm_act.3} parent=27 // pred_check_branch
        %270 = sbr.rel (%p268) target = $region36
      $region35: #{conv_norm_act.3} parent=27 // pred_region
        %s271 = sadd.s32 %s22, 1
        %s272 = smul.u32 10, %s271
        %p273 = scmp.lt.s32.totalorder %s21, 1
        %s274 = scalar_select %p273, %s21, 1
        %p275 = scmp.lt.s32.totalorder %s272, 19
        %s276 = scalar_select %p275, %s272, 19
        %s277 = smul.addr %s274, 20
        %s278 = sadd.s32 %s276, %s277
        %s279 = smul.addr %s278, 2
        %s280 = scalar_lea.vmem %s1, %s279
        %s281 = sadd.s32 %s22, 1
        %s282 = smul.u32 10, %s281
      $region36: #{conv_norm_act.3} parent=27 // pred_fallthru
        _
    $region28: #{conv_norm_act.3} parent=5 // pred_fallthru
      _
    %p283 = scmp.le.s32.totalorder 1, %s14
    %p284 = scmp.lt.s32.totalorder %s14, 3
    %p285 = pnand %p283, %p284
    %p286 = pneg %p285
    // Predicated region
    $region37: #{conv_norm_act.3} parent=5 // pred_check
      _
    $region38: #{conv_norm_act.3} parent=5 // pred_check_branch
      %288 = sbr.rel (%p285) target = $region40
    $region39: #{conv_norm_act.3} parent=5 // pred_region
      %s289 = ssub.s32 %s14, 1
      %s290 = smul.u32 10, %s24
      %p291 = scmp.lt.s32.totalorder %s23, 1
      %s292 = scalar_select %p291, %s23, 1
      %p293 = scmp.lt.s32.totalorder %s290, 19
      %s294 = scalar_select %p293, %s290, 19
      %s295 = smul.addr %s292, 20
      %s296 = sadd.s32 %s294, %s295
      %s297 = smul.addr %s296, 2
      %s298 = scalar_lea.vmem %s0, %s297
      %p299 = pneg %p54
      %p300 = pneg %p51
      %s301 = sadd.s32 %s24, 1
      %s302 = smul.u32 10, %s301
      %p303 = scmp.lt.s32.totalorder %s23, 1
      %s304 = scalar_select %p303, %s23, 1
      %p305 = scmp.lt.s32.totalorder %s302, 19
      %s306 = scalar_select %p305, %s302, 19
      %s307 = smul.addr %s304, 20
      %s308 = sadd.s32 %s306, %s307
      %s309 = smul.addr %s308, 2
      %s310 = scalar_lea.vmem %s1, %s309
      %p311 = pneg %p84
      %p312 = pneg %p81
      %p313 = pneg %p105
      %p314 = pneg %p102
      %p315 = pneg %p126
      %p316 = pneg %p123
      %p317 = pneg %p147
      %p318 = pneg %p144
      %p319 = pneg %p175
      %p320 = pneg %p172
      %s321 = smul.u32 10, %s24
      %p322 = scmp.lt.s32.totalorder %s23, 1
      %s323 = scalar_select %p322, %s23, 1
      %p324 = scmp.lt.s32.totalorder %s321, 9
      %s325 = scalar_select %p324, %s321, 9
      %s326 = smul.addr %s323, 10
      %s327 = sadd.s32 %s325, %s326
      %s328 = smul.addr %s327, 8
      %s329 = scalar_lea.vmem %s5, %s328
      %p330 = pneg %p201
      %p331 = pneg %p198
      %p332 = scmp.lt.s32.totalorder %s23, 1
      %s333 = scalar_select %p332, %s23, 1
      %s334 = smul.addr %s333, 8
      %s335 = scalar_lea.vmem %s6, %s334
      %p336 = pneg %p227
      %p337 = pneg %p224
      %p338 = scmp.lt.s32.totalorder %s23, 1
      %s339 = scalar_select %p338, %s23, 1
      %s340 = smul.addr %s339, 8
      %s341 = scalar_lea.vmem %s7, %s340
      %s342 = smul.u32 10, %s24
      %p343 = scmp.lt.s32.totalorder %s23, 1
      %s344 = scalar_select %p343, %s23, 1
      %p345 = scmp.lt.s32.totalorder %s342, 19
      %s346 = scalar_select %p345, %s342, 19
      %s347 = smul.addr %s344, 20
      %s348 = sadd.s32 %s346, %s347
      %s349 = smul.addr %s348, 2
      %s350 = scalar_lea.vmem %s0, %s349
      %s351 = smul.u32 10, %s24
      %s352 = sadd.s32 %s24, 1
      %s353 = smul.u32 10, %s352
      %p354 = scmp.lt.s32.totalorder %s23, 1
      %s355 = scalar_select %p354, %s23, 1
      %p356 = scmp.lt.s32.totalorder %s353, 19
      %s357 = scalar_select %p356, %s353, 19
      %s358 = smul.addr %s355, 20
      %s359 = sadd.s32 %s357, %s358
      %s360 = smul.addr %s359, 2
      %s361 = scalar_lea.vmem %s1, %s360
      %s362 = sadd.s32 %s24, 1
      %s363 = smul.u32 10, %s362
      %s364 = smul.u32 10, %s24
      %p365 = scmp.lt.s32.totalorder %s23, 1
      %s366 = scalar_select %p365, %s23, 1
      %p367 = scmp.lt.s32.totalorder %s364, 9
      %s368 = scalar_select %p367, %s364, 9
      %s369 = smul.addr %s366, 10
      %s370 = sadd.s32 %s368, %s369
      %s371 = smul.addr %s370, 8
      %s372 = scalar_lea.vmem %s5, %s371
      %s373 = smul.u32 10, %s24
      %p374 = scmp.lt.s32.totalorder %s23, 1
      %s375 = scalar_select %p374, %s23, 1
      %s376 = smul.addr %s375, 8
      %s377 = scalar_lea.vmem %s6, %s376
      %p378 = scmp.lt.s32.totalorder %s23, 1
      %s379 = scalar_select %p378, %s23, 1
      %s380 = smul.addr %s379, 8
      %s381 = scalar_lea.vmem %s7, %s380
      %v383 = vld [vmem:[%s350] sm:$0xff]
      %v384 = vld [vmem:[%s350 + $0x8] sm:$0xff]
      %v385 = vld [vmem:[%s350 + $0x10] sm:$0xf]
      %v386 = vld [vmem:[%s361] sm:$0xff]
      %v390 = vcombine.high %v383, %v383
      %v392 = vunpack.c.l.s4 1983009808
      %v393 = vunpack.c.0.s8 %v392
      %v394 = vlaneseq
      %v395 = vshrl.u32 %v394, 7
      %v396 = vsub.s32 %v393, %v395
      %v397 = vrot.slane %v383, %v396
      %v399 = vunpack.c.l.s4 1983009808
      %v400 = vunpack.c.0.s8 %v399
      %v401 = vlaneseq
      %v402 = vshrl.u32 %v401, 7
      %v403 = vsub.s32 %v400, %v402
      %v404 = vrot.slane %v390, %v403
      %v405 = vcombine.high %v397, %v397
      %v406 = vcombine.high %v404, %v404
      %v407 = vcombine.high %v384, %v384
      %v409 = vunpack.c.l.s4 1983009808
      %v410 = vunpack.c.0.s8 %v409
      %v411 = vlaneseq
      %v412 = vshrl.u32 %v411, 7
      %v413 = vsub.s32 %v410, %v412
      %v414 = vrot.slane %v384, %v413
      %v416 = vunpack.c.l.s4 1983009808
      %v417 = vunpack.c.0.s8 %v416
      %v418 = vlaneseq
      %v419 = vshrl.u32 %v418, 7
      %v420 = vsub.s32 %v417, %v419
      %v421 = vrot.slane %v407, %v420
      %v422 = vcombine.high %v414, %v414
      %v423 = vcombine.high %v421, %v421
      %v425 = vunpack.c.l.s4 1983009808
      %v426 = vunpack.c.0.s8 %v425
      %v427 = vlaneseq
      %v428 = vshrl.u32 %v427, 7
      %v429 = vsub.s32 %v426, %v428
      %v430 = vrot.slane %v385, %v429
      %v431 = vcombine.high %v430, %v430
      %v432 = vld [vmem:[%s2] sm:$0xf]
      %s433 = scalar_lea.vmem %s2, 4
      %v434 = vld [vmem:[%s433] sm:$0xf]
      %436 = vrot.lane.b32.xlu0 %v397, 127
      %v437 = vpop.permute.xlu0 %436
      %438 = vrot.lane.b32.xlu0 %v405, 127
      %v439 = vpop.permute.xlu0 %438
      %440 = vrot.lane.b32.xlu0 %v404, 127
      %v441 = vpop.permute.xlu0 %440
      %442 = vrot.lane.b32.xlu0 %v406, 127
      %v443 = vpop.permute.xlu0 %442
      %444 = vrot.lane.b32.xlu0 %v414, 127
      %v445 = vpop.permute.xlu0 %444
      %446 = vrot.lane.b32.xlu0 %v422, 127
      %v447 = vpop.permute.xlu0 %446
      %448 = vrot.lane.b32.xlu0 %v421, 127
      %v449 = vpop.permute.xlu0 %448
      %450 = vrot.lane.b32.xlu0 %v423, 127
      %v451 = vpop.permute.xlu0 %450
      %452 = vrot.lane.b32.xlu0 %v430, 127
      %v453 = vpop.permute.xlu0 %452
      %454 = vrot.lane.b32.xlu0 %v431, 127
      %v455 = vpop.permute.xlu0 %454
      %456 = vrot.lane.b32.xlu0 %v386, 127
      %v457 = vpop.permute.xlu0 %456
      %vm458 = vcmask 1039360
      %v459 = vsel %vm458, %v437, %v439
      %v460 = vsel %vm458, %v439, %v441
      %v461 = vsel %vm458, %v441, %v443
      %v462 = vsel %vm458, %v443, %v445
      %v463 = vsel %vm458, %v445, %v447
      %v464 = vsel %vm458, %v447, %v449
      %v465 = vsel %vm458, %v449, %v451
      %v466 = vsel %vm458, %v451, %v453
      %v467 = vsel %vm458, %v453, %v455
      %v468 = vsel %vm458, %v455, %v457
      %vm469 = vcmask 31744
      %v471 = vsel %vm469, %v434, 0
      %vm473 = vcmask 1041408
      %v475 = vsel %vm473, %v459, 0
      %v478 = vsel %vm473, %v460, 0
      %v481 = vsel %vm473, %v461, 0
      %v484 = vsel %vm473, %v462, 0
      %v487 = vsel %vm473, %v463, 0
      %v490 = vsel %vm473, %v464, 0
      %v493 = vsel %vm473, %v465, 0
      %v496 = vsel %vm473, %v466, 0
      %v499 = vsel %vm473, %v467, 0
      %v502 = vsel %vm473, %v468, 0
      %504 = vmatprep.subr.bf16.mxu0 %v478
      %505 = vmatpush1.bf16.msra.mxu0 %v475
      %506 = vmatprep.subr.bf16.mxu0 0
      %507 = vmatpush1.bf16.msra.mxu0 0
      %508 = vmatprep.subr.bf16.mxu0 0
      %509 = vmatpush1.bf16.msra.mxu0 0
      %510 = vmatprep.subr.bf16.mxu0 0
      %511 = vmatpush1.bf16.msra.mxu0 0
      %512 = vmatprep.subr.bf16.mxu0 0
      %513 = vmatpush1.bf16.msra.mxu0 0
      %514 = vmatprep.subr.bf16.mxu0 0
      %515 = vmatpush1.bf16.msra.mxu0 0
      %516 = vmatprep.subr.bf16.mxu0 0
      %517 = vmatpush1.bf16.msra.mxu0 0
      %518 = vmatprep.subr.bf16.mxu0 0
      %519 = vmatpush1.bf16.msra.mxu0 0
      %520 = vmatprep.subr.bf16.mxu0 0
      %521 = vmatpush1.bf16.msra.mxu0 0
      %522 = vmatprep.subr.bf16.mxu0 0
      %523 = vmatpush1.bf16.msra.mxu0 0
      %524 = vmatprep.subr.bf16.mxu0 0
      %525 = vmatpush1.bf16.msra.mxu0 0
      %526 = vmatprep.subr.bf16.mxu0 0
      %527 = vmatpush1.bf16.msra.mxu0 0
      %528 = vmatprep.subr.bf16.mxu0 0
      %529 = vmatpush1.bf16.msra.mxu0 0
      %530 = vmatprep.subr.bf16.mxu0 0
      %531 = vmatpush1.bf16.msra.mxu0 0
      %532 = vmatprep.subr.bf16.mxu0 0
      %533 = vmatpush1.bf16.msra.mxu0 0
      %534 = vmatprep.subr.bf16.mxu0 0
      %535 = vmatpush1.bf16.msra.mxu0 0
      %536 = vmatprep.mubr.bf16.mxu0 0
      %537 = vmatmul.mubr.bf16.gmra.mrb[0].mxu0 %v471
      %v538 = vpop.f32.mrb[0].mxu0
      %v539 = vadd.f32 0.0, %v538
      %v540 = vpop.f32.mrb[0].mxu0
      %v541 = vadd.f32 0.0, %v540
      %v542 = vpop.f32.mrb[0].mxu0
      %v543 = vpop.f32.mrb[0].mxu0
      %544 = vdwg.mxu0
      %545 = vmatprep.subr.bf16.mxu0 %v484
      %546 = vmatpush1.bf16.msra.mxu0 %v481
      %547 = vmatprep.subr.bf16.mxu0 0
      %548 = vmatpush1.bf16.msra.mxu0 0
      %549 = vmatprep.subr.bf16.mxu0 0
      %550 = vmatpush1.bf16.msra.mxu0 0
      %551 = vmatprep.subr.bf16.mxu0 0
      %552 = vmatpush1.bf16.msra.mxu0 0
      %553 = vmatprep.subr.bf16.mxu0 0
      %554 = vmatpush1.bf16.msra.mxu0 0
      %555 = vmatprep.subr.bf16.mxu0 0
      %556 = vmatpush1.bf16.msra.mxu0 0
      %557 = vmatprep.subr.bf16.mxu0 0
      %558 = vmatpush1.bf16.msra.mxu0 0
      %559 = vmatprep.subr.bf16.mxu0 0
      %560 = vmatpush1.bf16.msra.mxu0 0
      %561 = vmatprep.subr.bf16.mxu0 0
      %562 = vmatpush1.bf16.msra.mxu0 0
      %563 = vmatprep.subr.bf16.mxu0 0
      %564 = vmatpush1.bf16.msra.mxu0 0
      %565 = vmatprep.subr.bf16.mxu0 0
      %566 = vmatpush1.bf16.msra.mxu0 0
      %567 = vmatprep.subr.bf16.mxu0 0
      %568 = vmatpush1.bf16.msra.mxu0 0
      %569 = vmatprep.subr.bf16.mxu0 0
      %570 = vmatpush1.bf16.msra.mxu0 0
      %571 = vmatprep.subr.bf16.mxu0 0
      %572 = vmatpush1.bf16.msra.mxu0 0
      %573 = vmatprep.subr.bf16.mxu0 0
      %574 = vmatpush1.bf16.msra.mxu0 0
      %575 = vmatprep.subr.bf16.mxu0 0
      %576 = vmatpush1.bf16.msra.mxu0 0
      %577 = vmatprep.mubr.bf16.mxu0 0
      %578 = vmatmul.mubr.bf16.gmra.mrb[0].mxu0 %v471
      %v579 = vpop.f32.mrb[0].mxu0
      %v580 = vadd.f32 0.0, %v579
      %v581 = vpop.f32.mrb[0].mxu0
      %v582 = vadd.f32 0.0, %v581
      %v583 = vpop.f32.mrb[0].mxu0
      %v584 = vpop.f32.mrb[0].mxu0
      %585 = vdwg.mxu0
      %586 = vmatprep.subr.bf16.mxu0 %v490
      %587 = vmatpush1.bf16.msra.mxu0 %v487
      %588 = vmatprep.subr.bf16.mxu0 0
      %589 = vmatpush1.bf16.msra.mxu0 0
      %590 = vmatprep.subr.bf16.mxu0 0
      %591 = vmatpush1.bf16.msra.mxu0 0
      %592 = vmatprep.subr.bf16.mxu0 0
      %593 = vmatpush1.bf16.msra.mxu0 0
      %594 = vmatprep.subr.bf16.mxu0 0
      %595 = vmatpush1.bf16.msra.mxu0 0
      %596 = vmatprep.subr.bf16.mxu0 0
      %597 = vmatpush1.bf16.msra.mxu0 0
      %598 = vmatprep.subr.bf16.mxu0 0
      %599 = vmatpush1.bf16.msra.mxu0 0
      %600 = vmatprep.subr.bf16.mxu0 0
      %601 = vmatpush1.bf16.msra.mxu0 0
      %602 = vmatprep.subr.bf16.mxu0 0
      %603 = vmatpush1.bf16.msra.mxu0 0
      %604 = vmatprep.subr.bf16.mxu0 0
      %605 = vmatpush1.bf16.msra.mxu0 0
      %606 = vmatprep.subr.bf16.mxu0 0
      %607 = vmatpush1.bf16.msra.mxu0 0
      %608 = vmatprep.subr.bf16.mxu0 0
      %609 = vmatpush1.bf16.msra.mxu0 0
      %610 = vmatprep.subr.bf16.mxu0 0
      %611 = vmatpush1.bf16.msra.mxu0 0
      %612 = vmatprep.subr.bf16.mxu0 0
      %613 = vmatpush1.bf16.msra.mxu0 0
      %614 = vmatprep.subr.bf16.mxu0 0
      %615 = vmatpush1.bf16.msra.mxu0 0
      %616 = vmatprep.subr.bf16.mxu0 0
      %617 = vmatpush1.bf16.msra.mxu0 0
      %618 = vmatprep.mubr.bf16.mxu0 0
      %619 = vmatmul.mubr.bf16.gmra.mrb[0].mxu0 %v471
      %v620 = vpop.f32.mrb[0].mxu0
      %v621 = vadd.f32 0.0, %v620
      %v622 = vpop.f32.mrb[0].mxu0
      %v623 = vadd.f32 0.0, %v622
      %v624 = vpop.f32.mrb[0].mxu0
      %v625 = vpop.f32.mrb[0].mxu0
      %626 = vdwg.mxu0
      %627 = vmatprep.subr.bf16.mxu0 %v496
      %628 = vmatpush1.bf16.msra.mxu0 %v493
      %629 = vmatprep.subr.bf16.mxu0 0
      %630 = vmatpush1.bf16.msra.mxu0 0
      %631 = vmatprep.subr.bf16.mxu0 0
      %632 = vmatpush1.bf16.msra.mxu0 0
      %633 = vmatprep.subr.bf16.mxu0 0
      %634 = vmatpush1.bf16.msra.mxu0 0
      %635 = vmatprep.subr.bf16.mxu0 0
      %636 = vmatpush1.bf16.msra.mxu0 0
      %637 = vmatprep.subr.bf16.mxu0 0
      %638 = vmatpush1.bf16.msra.mxu0 0
      %639 = vmatprep.subr.bf16.mxu0 0
      %640 = vmatpush1.bf16.msra.mxu0 0
      %641 = vmatprep.subr.bf16.mxu0 0
      %642 = vmatpush1.bf16.msra.mxu0 0
      %643 = vmatprep.subr.bf16.mxu0 0
      %644 = vmatpush1.bf16.msra.mxu0 0
      %645 = vmatprep.subr.bf16.mxu0 0
      %646 = vmatpush1.bf16.msra.mxu0 0
      %647 = vmatprep.subr.bf16.mxu0 0
      %648 = vmatpush1.bf16.msra.mxu0 0
      %649 = vmatprep.subr.bf16.mxu0 0
      %650 = vmatpush1.bf16.msra.mxu0 0
      %651 = vmatprep.subr.bf16.mxu0 0
      %652 = vmatpush1.bf16.msra.mxu0 0
      %653 = vmatprep.subr.bf16.mxu0 0
      %654 = vmatpush1.bf16.msra.mxu0 0
      %655 = vmatprep.subr.bf16.mxu0 0
      %656 = vmatpush1.bf16.msra.mxu0 0
      %657 = vmatprep.subr.bf16.mxu0 0
      %658 = vmatpush1.bf16.msra.mxu0 0
      %659 = vmatprep.mubr.bf16.mxu0 0
      %660 = vmatmul.mubr.bf16.gmra.mrb[0].mxu0 %v471
      %v661 = vpop.f32.mrb[0].mxu0
      %v662 = vadd.f32 0.0, %v661
      %v663 = vpop.f32.mrb[0].mxu0
      %v664 = vadd.f32 0.0, %v663
      %v665 = vpop.f32.mrb[0].mxu0
      %v666 = vpop.f32.mrb[0].mxu0
      %667 = vdwg.mxu0
      %668 = vmatprep.subr.bf16.mxu0 %v502
      %669 = vmatpush1.bf16.msra.mxu0 %v499
      %670 = vmatprep.subr.bf16.mxu0 0
      %671 = vmatpush1.bf16.msra.mxu0 0
      %672 = vmatprep.subr.bf16.mxu0 0
      %673 = vmatpush1.bf16.msra.mxu0 0
      %674 = vmatprep.subr.bf16.mxu0 0
      %675 = vmatpush1.bf16.msra.mxu0 0
      %676 = vmatprep.subr.bf16.mxu0 0
      %677 = vmatpush1.bf16.msra.mxu0 0
      %678 = vmatprep.subr.bf16.mxu0 0
      %679 = vmatpush1.bf16.msra.mxu0 0
      %680 = vmatprep.subr.bf16.mxu0 0
      %681 = vmatpush1.bf16.msra.mxu0 0
      %682 = vmatprep.subr.bf16.mxu0 0
      %683 = vmatpush1.bf16.msra.mxu0 0
      %684 = vmatprep.subr.bf16.mxu0 0
      %685 = vmatpush1.bf16.msra.mxu0 0
      %686 = vmatprep.subr.bf16.mxu0 0
      %687 = vmatpush1.bf16.msra.mxu0 0
      %688 = vmatprep.subr.bf16.mxu0 0
      %689 = vmatpush1.bf16.msra.mxu0 0
      %690 = vmatprep.subr.bf16.mxu0 0
      %691 = vmatpush1.bf16.msra.mxu0 0
      %692 = vmatprep.subr.bf16.mxu0 0
      %693 = vmatpush1.bf16.msra.mxu0 0
      %694 = vmatprep.subr.bf16.mxu0 0
      %695 = vmatpush1.bf16.msra.mxu0 0
      %696 = vmatprep.subr.bf16.mxu0 0
      %697 = vmatpush1.bf16.msra.mxu0 0
      %698 = vmatprep.subr.bf16.mxu0 0
      %699 = vmatpush1.bf16.msra.mxu0 0
      %700 = vmatprep.mubr.bf16.mxu0 0
      %701 = vmatmul.mubr.bf16.gmra.mrb[0].mxu0 %v471
      %v702 = vpop.f32.mrb[0].mxu0
      %v703 = vadd.f32 0.0, %v702
      %v704 = vpop.f32.mrb[0].mxu0
      %v705 = vadd.f32 0.0, %v704
      %v706 = vpop.f32.mrb[0].mxu0
      %v707 = vpop.f32.mrb[0].mxu0
      %708 = vdwg.mxu0
      %v710 = vsel %vm469, %v432, 0
      %v713 = vsel %vm473, %v397, 0
      %v716 = vsel %vm473, %v405, 0
      %v719 = vsel %vm473, %v404, 0
      %v722 = vsel %vm473, %v406, 0
      %v725 = vsel %vm473, %v414, 0
      %v728 = vsel %vm473, %v422, 0
      %v731 = vsel %vm473, %v421, 0
      %v734 = vsel %vm473, %v423, 0
      %v737 = vsel %vm473, %v430, 0
      %v740 = vsel %vm473, %v431, 0
      %742 = vmatprep.subr.bf16.mxu0 %v716
      %743 = vmatpush1.bf16.msra.mxu0 %v713
      %744 = vmatprep.subr.bf16.mxu0 0
      %745 = vmatpush1.bf16.msra.mxu0 0
      %746 = vmatprep.subr.bf16.mxu0 0
      %747 = vmatpush1.bf16.msra.mxu0 0
      %748 = vmatprep.subr.bf16.mxu0 0
      %749 = vmatpush1.bf16.msra.mxu0 0
      %750 = vmatprep.subr.bf16.mxu0 0
      %751 = vmatpush1.bf16.msra.mxu0 0
      %752 = vmatprep.subr.bf16.mxu0 0
      %753 = vmatpush1.bf16.msra.mxu0 0
      %754 = vmatprep.subr.bf16.mxu0 0
      %755 = vmatpush1.bf16.msra.mxu0 0
      %756 = vmatprep.subr.bf16.mxu0 0
      %757 = vmatpush1.bf16.msra.mxu0 0
      %758 = vmatprep.subr.bf16.mxu0 0
      %759 = vmatpush1.bf16.msra.mxu0 0
      %760 = vmatprep.subr.bf16.mxu0 0
      %761 = vmatpush1.bf16.msra.mxu0 0
      %762 = vmatprep.subr.bf16.mxu0 0
      %763 = vmatpush1.bf16.msra.mxu0 0
      %764 = vmatprep.subr.bf16.mxu0 0
      %765 = vmatpush1.bf16.msra.mxu0 0
      %766 = vmatprep.subr.bf16.mxu0 0
      %767 = vmatpush1.bf16.msra.mxu0 0
      %768 = vmatprep.subr.bf16.mxu0 0
      %769 = vmatpush1.bf16.msra.mxu0 0
      %770 = vmatprep.subr.bf16.mxu0 0
      %771 = vmatpush1.bf16.msra.mxu0 0
      %772 = vmatprep.subr.bf16.mxu0 0
      %773 = vmatpush1.bf16.msra.mxu0 0
      %774 = vmatprep.mubr.bf16.mxu0 0
      %775 = vmatmul.mubr.bf16.gmra.mrb[0].mxu0 %v710
      %v776 = vpop.f32.mrb[0].mxu0
      %v777 = vadd.f32 %v539, %v776
      %v778 = vpop.f32.mrb[0].mxu0
      %v779 = vadd.f32 %v541, %v778
      %v780 = vpop.f32.mrb[0].mxu0
      %v781 = vpop.f32.mrb[0].mxu0
      %782 = vdwg.mxu0
      %783 = vmatprep.subr.bf16.mxu0 %v722
      %784 = vmatpush1.bf16.msra.mxu0 %v719
      %785 = vmatprep.subr.bf16.mxu0 0
      %786 = vmatpush1.bf16.msra.mxu0 0
      %787 = vmatprep.subr.bf16.mxu0 0
      %788 = vmatpush1.bf16.msra.mxu0 0
      %789 = vmatprep.subr.bf16.mxu0 0
      %790 = vmatpush1.bf16.msra.mxu0 0
      %791 = vmatprep.subr.bf16.mxu0 0
      %792 = vmatpush1.bf16.msra.mxu0 0
      %793 = vmatprep.subr.bf16.mxu0 0
      %794 = vmatpush1.bf16.msra.mxu0 0
      %795 = vmatprep.subr.bf16.mxu0 0
      %796 = vmatpush1.bf16.msra.mxu0 0
      %797 = vmatprep.subr.bf16.mxu0 0
      %798 = vmatpush1.bf16.msra.mxu0 0
      %799 = vmatprep.subr.bf16.mxu0 0
      %800 = vmatpush1.bf16.msra.mxu0 0
      %801 = vmatprep.subr.bf16.mxu0 0
      %802 = vmatpush1.bf16.msra.mxu0 0
      %803 = vmatprep.subr.bf16.mxu0 0
      %804 = vmatpush1.bf16.msra.mxu0 0
      %805 = vmatprep.subr.bf16.mxu0 0
      %806 = vmatpush1.bf16.msra.mxu0 0
      %807 = vmatprep.subr.bf16.mxu0 0
      %808 = vmatpush1.bf16.msra.mxu0 0
      %809 = vmatprep.subr.bf16.mxu0 0
      %810 = vmatpush1.bf16.msra.mxu0 0
      %811 = vmatprep.subr.bf16.mxu0 0
      %812 = vmatpush1.bf16.msra.mxu0 0
      %813 = vmatprep.subr.bf16.mxu0 0
      %814 = vmatpush1.bf16.msra.mxu0 0
      %815 = vmatprep.mubr.bf16.mxu0 0
      %816 = vmatmul.mubr.bf16.gmra.mrb[0].mxu0 %v710
      %v817 = vpop.f32.mrb[0].mxu0
      %v818 = vadd.f32 %v580, %v817
      %v819 = vpop.f32.mrb[0].mxu0
      %v820 = vadd.f32 %v582, %v819
      %v821 = vpop.f32.mrb[0].mxu0
      %v822 = vpop.f32.mrb[0].mxu0
      %823 = vdwg.mxu0
      %824 = vmatprep.subr.bf16.mxu0 %v728
      %825 = vmatpush1.bf16.msra.mxu0 %v725
      %826 = vmatprep.subr.bf16.mxu0 0
      %827 = vmatpush1.bf16.msra.mxu0 0
      %828 = vmatprep.subr.bf16.mxu0 0
      %829 = vmatpush1.bf16.msra.mxu0 0
      %830 = vmatprep.subr.bf16.mxu0 0
      %831 = vmatpush1.bf16.msra.mxu0 0
      %832 = vmatprep.subr.bf16.mxu0 0
      %833 = vmatpush1.bf16.msra.mxu0 0
      %834 = vmatprep.subr.bf16.mxu0 0
      %835 = vmatpush1.bf16.msra.mxu0 0
      %836 = vmatprep.subr.bf16.mxu0 0
      %837 = vmatpush1.bf16.msra.mxu0 0
      %838 = vmatprep.subr.bf16.mxu0 0
      %839 = vmatpush1.bf16.msra.mxu0 0
      %840 = vmatprep.subr.bf16.mxu0 0
      %841 = vmatpush1.bf16.msra.mxu0 0
      %842 = vmatprep.subr.bf16.mxu0 0
      %843 = vmatpush1.bf16.msra.mxu0 0
      %844 = vmatprep.subr.bf16.mxu0 0
      %845 = vmatpush1.bf16.msra.mxu0 0
      %846 = vmatprep.subr.bf16.mxu0 0
      %847 = vmatpush1.bf16.msra.mxu0 0
      %848 = vmatprep.subr.bf16.mxu0 0
      %849 = vmatpush1.bf16.msra.mxu0 0
      %850 = vmatprep.subr.bf16.mxu0 0
      %851 = vmatpush1.bf16.msra.mxu0 0
      %852 = vmatprep.subr.bf16.mxu0 0
      %853 = vmatpush1.bf16.msra.mxu0 0
      %854 = vmatprep.subr.bf16.mxu0 0
      %855 = vmatpush1.bf16.msra.mxu0 0
      %856 = vmatprep.mubr.bf16.mxu0 0
      %857 = vmatmul.mubr.bf16.gmra.mrb[0].mxu0 %v710
      %v858 = vpop.f32.mrb[0].mxu0
      %v859 = vadd.f32 %v621, %v858
      %v860 = vpop.f32.mrb[0].mxu0
      %v861 = vadd.f32 %v623, %v860
      %v862 = vpop.f32.mrb[0].mxu0
      %v863 = vpop.f32.mrb[0].mxu0
      %864 = vdwg.mxu0
      %865 = vmatprep.subr.bf16.mxu0 %v734
      %866 = vmatpush1.bf16.msra.mxu0 %v731
      %867 = vmatprep.subr.bf16.mxu0 0
      %868 = vmatpush1.bf16.msra.mxu0 0
      %869 = vmatprep.subr.bf16.mxu0 0
      %870 = vmatpush1.bf16.msra.mxu0 0
      %871 = vmatprep.subr.bf16.mxu0 0
      %872 = vmatpush1.bf16.msra.mxu0 0
      %873 = vmatprep.subr.bf16.mxu0 0
      %874 = vmatpush1.bf16.msra.mxu0 0
      %875 = vmatprep.subr.bf16.mxu0 0
      %876 = vmatpush1.bf16.msra.mxu0 0
      %877 = vmatprep.subr.bf16.mxu0 0
      %878 = vmatpush1.bf16.msra.mxu0 0
      %879 = vmatprep.subr.bf16.mxu0 0
      %880 = vmatpush1.bf16.msra.mxu0 0
      %881 = vmatprep.subr.bf16.mxu0 0
      %882 = vmatpush1.bf16.msra.mxu0 0
      %883 = vmatprep.subr.bf16.mxu0 0
      %884 = vmatpush1.bf16.msra.mxu0 0
      %885 = vmatprep.subr.bf16.mxu0 0
      %886 = vmatpush1.bf16.msra.mxu0 0
      %887 = vmatprep.subr.bf16.mxu0 0
      %888 = vmatpush1.bf16.msra.mxu0 0
      %889 = vmatprep.subr.bf16.mxu0 0
      %890 = vmatpush1.bf16.msra.mxu0 0
      %891 = vmatprep.subr.bf16.mxu0 0
      %892 = vmatpush1.bf16.msra.mxu0 0
      %893 = vmatprep.subr.bf16.mxu0 0
      %894 = vmatpush1.bf16.msra.mxu0 0
      %895 = vmatprep.subr.bf16.mxu0 0
      %896 = vmatpush1.bf16.msra.mxu0 0
      %897 = vmatprep.mubr.bf16.mxu0 0
      %898 = vmatmul.mubr.bf16.gmra.mrb[0].mxu0 %v710
      %v899 = vpop.f32.mrb[0].mxu0
      %v900 = vadd.f32 %v662, %v899
      %v901 = vpop.f32.mrb[0].mxu0
      %v902 = vadd.f32 %v664, %v901
      %v903 = vpop.f32.mrb[0].mxu0
      %v904 = vpop.f32.mrb[0].mxu0
      %905 = vdwg.mxu0
      %906 = vmatprep.subr.bf16.mxu0 %v740
      %907 = vmatpush1.bf16.msra.mxu0 %v737
      %908 = vmatprep.subr.bf16.mxu0 0
      %909 = vmatpush1.bf16.msra.mxu0 0
      %910 = vmatprep.subr.bf16.mxu0 0
      %911 = vmatpush1.bf16.msra.mxu0 0
      %912 = vmatprep.subr.bf16.mxu0 0
      %913 = vmatpush1.bf16.msra.mxu0 0
      %914 = vmatprep.subr.bf16.mxu0 0
      %915 = vmatpush1.bf16.msra.mxu0 0
      %916 = vmatprep.subr.bf16.mxu0 0
      %917 = vmatpush1.bf16.msra.mxu0 0
      %918 = vmatprep.subr.bf16.mxu0 0
      %919 = vmatpush1.bf16.msra.mxu0 0
      %920 = vmatprep.subr.bf16.mxu0 0
      %921 = vmatpush1.bf16.msra.mxu0 0
      %922 = vmatprep.subr.bf16.mxu0 0
      %923 = vmatpush1.bf16.msra.mxu0 0
      %924 = vmatprep.subr.bf16.mxu0 0
      %925 = vmatpush1.bf16.msra.mxu0 0
      %926 = vmatprep.subr.bf16.mxu0 0
      %927 = vmatpush1.bf16.msra.mxu0 0
      %928 = vmatprep.subr.bf16.mxu0 0
      %929 = vmatpush1.bf16.msra.mxu0 0
      %930 = vmatprep.subr.bf16.mxu0 0
      %931 = vmatpush1.bf16.msra.mxu0 0
      %932 = vmatprep.subr.bf16.mxu0 0
      %933 = vmatpush1.bf16.msra.mxu0 0
      %934 = vmatprep.subr.bf16.mxu0 0
      %935 = vmatpush1.bf16.msra.mxu0 0
      %936 = vmatprep.subr.bf16.mxu0 0
      %937 = vmatpush1.bf16.msra.mxu0 0
      %938 = vmatprep.mubr.bf16.mxu0 0
      %939 = vmatmul.mubr.bf16.gmra.mrb[0].mxu0 %v710
      %v940 = vpop.f32.mrb[0].mxu0
      %v941 = vadd.f32 %v703, %v940
      %v942 = vpop.f32.mrb[0].mxu0
      %v943 = vadd.f32 %v705, %v942
      %v944 = vpop.f32.mrb[0].mxu0
      %v945 = vpop.f32.mrb[0].mxu0
      %946 = vdwg.mxu0
      %s947 = scalar_lea.vmem %s2, 8
      %v948 = vld [vmem:[%s947] sm:$0xf]
      %949 = vrot.lane.b32.xlu0 %v397, 126
      %v950 = vpop.permute.xlu0 %949
      %951 = vrot.lane.b32.xlu0 %v405, 126
      %v952 = vpop.permute.xlu0 %951
      %953 = vrot.lane.b32.xlu0 %v404, 126
      %v954 = vpop.permute.xlu0 %953
      %955 = vrot.lane.b32.xlu0 %v406, 126
      %v956 = vpop.permute.xlu0 %955
      %957 = vrot.lane.b32.xlu0 %v414, 126
      %v958 = vpop.permute.xlu0 %957
      %959 = vrot.lane.b32.xlu0 %v422, 126
      %v960 = vpop.permute.xlu0 %959
      %961 = vrot.lane.b32.xlu0 %v421, 126
      %v962 = vpop.permute.xlu0 %961
      %963 = vrot.lane.b32.xlu0 %v423, 126
      %v964 = vpop.permute.xlu0 %963
      %965 = vrot.lane.b32.xlu0 %v430, 126
      %v966 = vpop.permute.xlu0 %965
      %967 = vrot.lane.b32.xlu0 %v431, 126
      %v968 = vpop.permute.xlu0 %967
      %969 = vrot.lane.b32.xlu0 %v386, 126
      %v970 = vpop.permute.xlu0 %969
      %vm971 = vcmask 1031168
      %v972 = vsel %vm971, %v950, %v952
      %v973 = vsel %vm971, %v952, %v954
      %v974 = vsel %vm971, %v954, %v956
      %v975 = vsel %vm971, %v956, %v958
      %v976 = vsel %vm971, %v958, %v960
      %v977 = vsel %vm971, %v960, %v962
      %v978 = vsel %vm971, %v962, %v964
      %v979 = vsel %vm971, %v964, %v966
      %v980 = vsel %vm971, %v966, %v968
      %v981 = vsel %vm971, %v968, %v970
      %v983 = vsel %vm469, %v948, 0
      %v986 = vsel %vm473, %v972, 0
      %v989 = vsel %vm473, %v973, 0
      %v992 = vsel %vm473, %v974, 0
      %v995 = vsel %vm473, %v975, 0
      %v998 = vsel %vm473, %v976, 0
      %v1001 = vsel %vm473, %v977, 0
      %v1004 = vsel %vm473, %v978, 0
      %v1007 = vsel %vm473, %v979, 0
      %v1010 = vsel %vm473, %v980, 0
      %v1013 = vsel %vm473, %v981, 0
      %1015 = vmatprep.subr.bf16.mxu0 %v989
      %1016 = vmatpush1.bf16.msra.mxu0 %v986
      %1017 = vmatprep.subr.bf16.mxu0 0
      %1018 = vmatpush1.bf16.msra.mxu0 0
      %1019 = vmatprep.subr.bf16.mxu0 0
      %1020 = vmatpush1.bf16.msra.mxu0 0
      %1021 = vmatprep.subr.bf16.mxu0 0
      %1022 = vmatpush1.bf16.msra.mxu0 0
      %1023 = vmatprep.subr.bf16.mxu0 0
      %1024 = vmatpush1.bf16.msra.mxu0 0
      %1025 = vmatprep.subr.bf16.mxu0 0
      %1026 = vmatpush1.bf16.msra.mxu0 0
      %1027 = vmatprep.subr.bf16.mxu0 0
      %1028 = vmatpush1.bf16.msra.mxu0 0
      %1029 = vmatprep.subr.bf16.mxu0 0
      %1030 = vmatpush1.bf16.msra.mxu0 0
      %1031 = vmatprep.subr.bf16.mxu0 0
      %1032 = vmatpush1.bf16.msra.mxu0 0
      %1033 = vmatprep.subr.bf16.mxu0 0
      %1034 = vmatpush1.bf16.msra.mxu0 0
      %1035 = vmatprep.subr.bf16.mxu0 0
      %1036 = vmatpush1.bf16.msra.mxu0 0
      %1037 = vmatprep.subr.bf16.mxu0 0
      %1038 = vmatpush1.bf16.msra.mxu0 0
      %1039 = vmatprep.subr.bf16.mxu0 0
      %1040 = vmatpush1.bf16.msra.mxu0 0
      %1041 = vmatprep.subr.bf16.mxu0 0
      %1042 = vmatpush1.bf16.msra.mxu0 0
      %1043 = vmatprep.subr.bf16.mxu0 0
      %1044 = vmatpush1.bf16.msra.mxu0 0
      %1045 = vmatprep.subr.bf16.mxu0 0
      %1046 = vmatpush1.bf16.msra.mxu0 0
      %1047 = vmatprep.mubr.bf16.mxu0 0
      %1048 = vmatmul.mubr.bf16.gmra.mrb[0].mxu0 %v983
      %v1049 = vpop.f32.mrb[0].mxu0
      %v1050 = vadd.f32 0.0, %v1049
      %v1051 = vpop.f32.mrb[0].mxu0
      %v1052 = vadd.f32 0.0, %v1051
      %v1053 = vpop.f32.mrb[0].mxu0
      %v1054 = vpop.f32.mrb[0].mxu0
      %1055 = vdwg.mxu0
      %1056 = vmatprep.subr.bf16.mxu0 %v995
      %1057 = vmatpush1.bf16.msra.mxu0 %v992
      %1058 = vmatprep.subr.bf16.mxu0 0
      %1059 = vmatpush1.bf16.msra.mxu0 0
      %1060 = vmatprep.subr.bf16.mxu0 0
      %1061 = vmatpush1.bf16.msra.mxu0 0
      %1062 = vmatprep.subr.bf16.mxu0 0
      %1063 = vmatpush1.bf16.msra.mxu0 0
      %1064 = vmatprep.subr.bf16.mxu0 0
      %1065 = vmatpush1.bf16.msra.mxu0 0
      %1066 = vmatprep.subr.bf16.mxu0 0
      %1067 = vmatpush1.bf16.msra.mxu0 0
      %1068 = vmatprep.subr.bf16.mxu0 0
      %1069 = vmatpush1.bf16.msra.mxu0 0
      %1070 = vmatprep.subr.bf16.mxu0 0
      %1071 = vmatpush1.bf16.msra.mxu0 0
      %1072 = vmatprep.subr.bf16.mxu0 0
      %1073 = vmatpush1.bf16.msra.mxu0 0
      %1074 = vmatprep.subr.bf16.mxu0 0
      %1075 = vmatpush1.bf16.msra.mxu0 0
      %1076 = vmatprep.subr.bf16.mxu0 0
      %1077 = vmatpush1.bf16.msra.mxu0 0
      %1078 = vmatprep.subr.bf16.mxu0 0
      %1079 = vmatpush1.bf16.msra.mxu0 0
      %1080 = vmatprep.subr.bf16.mxu0 0
      %1081 = vmatpush1.bf16.msra.mxu0 0
      %1082 = vmatprep.subr.bf16.mxu0 0
      %1083 = vmatpush1.bf16.msra.mxu0 0
      %1084 = vmatprep.subr.bf16.mxu0 0
      %1085 = vmatpush1.bf16.msra.mxu0 0
      %1086 = vmatprep.subr.bf16.mxu0 0
      %1087 = vmatpush1.bf16.msra.mxu0 0
      %1088 = vmatprep.mubr.bf16.mxu0 0
      %1089 = vmatmul.mubr.bf16.gmra.mrb[0].mxu0 %v983
      %v1090 = vpop.f32.mrb[0].mxu0
      %v1091 = vadd.f32 0.0, %v1090
      %v1092 = vpop.f32.mrb[0].mxu0
      %v1093 = vadd.f32 0.0, %v1092
      %v1094 = vpop.f32.mrb[0].mxu0
      %v1095 = vpop.f32.mrb[0].mxu0
      %1096 = vdwg.mxu0
      %1097 = vmatprep.subr.bf16.mxu0 %v1001
      %1098 = vmatpush1.bf16.msra.mxu0 %v998
      %1099 = vmatprep.subr.bf16.mxu0 0
      %1100 = vmatpush1.bf16.msra.mxu0 0
      %1101 = vmatprep.subr.bf16.mxu0 0
      %1102 = vmatpush1.bf16.msra.mxu0 0
      %1103 = vmatprep.subr.bf16.mxu0 0
      %1104 = vmatpush1.bf16.msra.mxu0 0
      %1105 = vmatprep.subr.bf16.mxu0 0
      %1106 = vmatpush1.bf16.msra.mxu0 0
      %1107 = vmatprep.subr.bf16.mxu0 0
      %1108 = vmatpush1.bf16.msra.mxu0 0
      %1109 = vmatprep.subr.bf16.mxu0 0
      %1110 = vmatpush1.bf16.msra.mxu0 0
      %1111 = vmatprep.subr.bf16.mxu0 0
      %1112 = vmatpush1.bf16.msra.mxu0 0
      %1113 = vmatprep.subr.bf16.mxu0 0
      %1114 = vmatpush1.bf16.msra.mxu0 0
      %1115 = vmatprep.subr.bf16.mxu0 0
      %1116 = vmatpush1.bf16.msra.mxu0 0
      %1117 = vmatprep.subr.bf16.mxu0 0
      %1118 = vmatpush1.bf16.msra.mxu0 0
      %1119 = vmatprep.subr.bf16.mxu0 0
      %1120 = vmatpush1.bf16.msra.mxu0 0
      %1121 = vmatprep.subr.bf16.mxu0 0
      %1122 = vmatpush1.bf16.msra.mxu0 0
      %1123 = vmatprep.subr.bf16.mxu0 0
      %1124 = vmatpush1.bf16.msra.mxu0 0
      %1125 = vmatprep.subr.bf16.mxu0 0
      %1126 = vmatpush1.bf16.msra.mxu0 0
      %1127 = vmatprep.subr.bf16.mxu0 0
      %1128 = vmatpush1.bf16.msra.mxu0 0
      %1129 = vmatprep.mubr.bf16.mxu0 0
      %1130 = vmatmul.mubr.bf16.gmra.mrb[0].mxu0 %v983
      %v1131 = vpop.f32.mrb[0].mxu0
      %v1132 = vadd.f32 0.0, %v1131
      %v1133 = vpop.f32.mrb[0].mxu0
      %v1134 = vadd.f32 0.0, %v1133
      %v1135 = vpop.f32.mrb[0].mxu0
      %v1136 = vpop.f32.mrb[0].mxu0
      %1137 = vdwg.mxu0
      %1138 = vmatprep.subr.bf16.mxu0 %v1007
      %1139 = vmatpush1.bf16.msra.mxu0 %v1004
      %1140 = vmatprep.subr.bf16.mxu0 0
      %1141 = vmatpush1.bf16.msra.mxu0 0
      %1142 = vmatprep.subr.bf16.mxu0 0
      %1143 = vmatpush1.bf16.msra.mxu0 0
      %1144 = vmatprep.subr.bf16.mxu0 0
      %1145 = vmatpush1.bf16.msra.mxu0 0
      %1146 = vmatprep.subr.bf16.mxu0 0
      %1147 = vmatpush1.bf16.msra.mxu0 0
      %1148 = vmatprep.subr.bf16.mxu0 0
      %1149 = vmatpush1.bf16.msra.mxu0 0
      %1150 = vmatprep.subr.bf16.mxu0 0
      %1151 = vmatpush1.bf16.msra.mxu0 0
      %1152 = vmatprep.subr.bf16.mxu0 0
      %1153 = vmatpush1.bf16.msra.mxu0 0
      %1154 = vmatprep.subr.bf16.mxu0 0
      %1155 = vmatpush1.bf16.msra.mxu0 0
      %1156 = vmatprep.subr.bf16.mxu0 0
      %1157 = vmatpush1.bf16.msra.mxu0 0
      %1158 = vmatprep.subr.bf16.mxu0 0
      %1159 = vmatpush1.bf16.msra.mxu0 0
      %1160 = vmatprep.subr.bf16.mxu0 0
      %1161 = vmatpush1.bf16.msra.mxu0 0
      %1162 = vmatprep.subr.bf16.mxu0 0
      %1163 = vmatpush1.bf16.msra.mxu0 0
      %1164 = vmatprep.subr.bf16.mxu0 0
      %1165 = vmatpush1.bf16.msra.mxu0 0
      %1166 = vmatprep.subr.bf16.mxu0 0
      %1167 = vmatpush1.bf16.msra.mxu0 0
      %1168 = vmatprep.subr.bf16.mxu0 0
      %1169 = vmatpush1.bf16.msra.mxu0 0
      %1170 = vmatprep.mubr.bf16.mxu0 0
      %1171 = vmatmul.mubr.bf16.gmra.mrb[0].mxu0 %v983
      %v1172 = vpop.f32.mrb[0].mxu0
      %v1173 = vadd.f32 0.0, %v1172
      %v1174 = vpop.f32.mrb[0].mxu0
      %v1175 = vadd.f32 0.0, %v1174
      %v1176 = vpop.f32.mrb[0].mxu0
      %v1177 = vpop.f32.mrb[0].mxu0
      %1178 = vdwg.mxu0
      %1179 = vmatprep.subr.bf16.mxu0 %v1013
      %1180 = vmatpush1.bf16.msra.mxu0 %v1010
      %1181 = vmatprep.subr.bf16.mxu0 0
      %1182 = vmatpush1.bf16.msra.mxu0 0
      %1183 = vmatprep.subr.bf16.mxu0 0
      %1184 = vmatpush1.bf16.msra.mxu0 0
      %1185 = vmatprep.subr.bf16.mxu0 0
      %1186 = vmatpush1.bf16.msra.mxu0 0
      %1187 = vmatprep.subr.bf16.mxu0 0
      %1188 = vmatpush1.bf16.msra.mxu0 0
      %1189 = vmatprep.subr.bf16.mxu0 0
      %1190 = vmatpush1.bf16.msra.mxu0 0
      %1191 = vmatprep.subr.bf16.mxu0 0
      %1192 = vmatpush1.bf16.msra.mxu0 0
      %1193 = vmatprep.subr.bf16.mxu0 0
      %1194 = vmatpush1.bf16.msra.mxu0 0
      %1195 = vmatprep.subr.bf16.mxu0 0
      %1196 = vmatpush1.bf16.msra.mxu0 0
      %1197 = vmatprep.subr.bf16.mxu0 0
      %1198 = vmatpush1.bf16.msra.mxu0 0
      %1199 = vmatprep.subr.bf16.mxu0 0
      %1200 = vmatpush1.bf16.msra.mxu0 0
      %1201 = vmatprep.subr.bf16.mxu0 0
      %1202 = vmatpush1.bf16.msra.mxu0 0
      %1203 = vmatprep.subr.bf16.mxu0 0
      %1204 = vmatpush1.bf16.msra.mxu0 0
      %1205 = vmatprep.subr.bf16.mxu0 0
      %1206 = vmatpush1.bf16.msra.mxu0 0
      %1207 = vmatprep.subr.bf16.mxu0 0
      %1208 = vmatpush1.bf16.msra.mxu0 0
      %1209 = vmatprep.subr.bf16.mxu0 0
      %1210 = vmatpush1.bf16.msra.mxu0 0
      %1211 = vmatprep.mubr.bf16.mxu0 0
      %1212 = vmatmul.mubr.bf16.gmra.mrb[0].mxu0 %v983
      %v1213 = vpop.f32.mrb[0].mxu0
      %v1214 = vadd.f32 0.0, %v1213
      %v1215 = vpop.f32.mrb[0].mxu0
      %v1216 = vadd.f32 0.0, %v1215
      %v1217 = vpop.f32.mrb[0].mxu0
      %v1218 = vpop.f32.mrb[0].mxu0
      %1219 = vdwg.mxu0
      %v1220 = vadd.f32 %v777, %v1050
      %v1221 = vadd.f32 %v779, %v1052
      %v1222 = vadd.f32 %v818, %v1091
      %v1223 = vadd.f32 %v820, %v1093
      %v1224 = vadd.f32 %v859, %v1132
      %v1225 = vadd.f32 %v861, %v1134
      %v1226 = vadd.f32 %v900, %v1173
      %v1227 = vadd.f32 %v902, %v1175
      %v1228 = vadd.f32 %v941, %v1214
      %v1229 = vadd.f32 %v943, %v1216
      %s1230 = scalar_lea.vmem %s2, 12
      %v1231 = vld [vmem:[%s1230] sm:$0xf]
      %1232 = vrot.lane.b32.xlu0 %v397, 88
      %v1233 = vpop.permute.xlu0 %1232
      %1234 = vrot.lane.b32.xlu0 %v405, 88
      %v1235 = vpop.permute.xlu0 %1234
      %1236 = vrot.lane.b32.xlu0 %v404, 88
      %v1237 = vpop.permute.xlu0 %1236
      %1238 = vrot.lane.b32.xlu0 %v406, 88
      %v1239 = vpop.permute.xlu0 %1238
      %1240 = vrot.lane.b32.xlu0 %v414, 88
      %v1241 = vpop.permute.xlu0 %1240
      %1242 = vrot.lane.b32.xlu0 %v422, 88
      %v1243 = vpop.permute.xlu0 %1242
      %1244 = vrot.lane.b32.xlu0 %v421, 88
      %v1245 = vpop.permute.xlu0 %1244
      %1246 = vrot.lane.b32.xlu0 %v423, 88
      %v1247 = vpop.permute.xlu0 %1246
      %1248 = vrot.lane.b32.xlu0 %v430, 88
      %v1249 = vpop.permute.xlu0 %1248
      %1250 = vrot.lane.b32.xlu0 %v431, 88
      %v1251 = vpop.permute.xlu0 %1250
      %1252 = vrot.lane.b32.xlu0 %v386, 88
      %v1253 = vpop.permute.xlu0 %1252
      %vm1254 = vcmask 719872
      %v1255 = vsel %vm1254, %v1233, %v1235
      %v1256 = vsel %vm1254, %v1235, %v1237
      %v1257 = vsel %vm1254, %v1237, %v1239
      %v1258 = vsel %vm1254, %v1239, %v1241
      %v1259 = vsel %vm1254, %v1241, %v1243
      %v1260 = vsel %vm1254, %v1243, %v1245
      %v1261 = vsel %vm1254, %v1245, %v1247
      %v1262 = vsel %vm1254, %v1247, %v1249
      %v1263 = vsel %vm1254, %v1249, %v1251
      %v1264 = vsel %vm1254, %v1251, %v1253
      %v1266 = vsel %vm469, %v1231, 0
      %v1269 = vsel %vm473, %v1255, 0
      %v1272 = vsel %vm473, %v1256, 0
      %v1275 = vsel %vm473, %v1257, 0
      %v1278 = vsel %vm473, %v1258, 0
      %v1281 = vsel %vm473, %v1259, 0
      %v1284 = vsel %vm473, %v1260, 0
      %v1287 = vsel %vm473, %v1261, 0
      %v1290 = vsel %vm473, %v1262, 0
      %v1293 = vsel %vm473, %v1263, 0
      %v1296 = vsel %vm473, %v1264, 0
      %1298 = vmatprep.subr.bf16.mxu0 %v1272
      %1299 = vmatpush1.bf16.msra.mxu0 %v1269
      %1300 = vmatprep.subr.bf16.mxu0 0
      %1301 = vmatpush1.bf16.msra.mxu0 0
      %1302 = vmatprep.subr.bf16.mxu0 0
      %1303 = vmatpush1.bf16.msra.mxu0 0
      %1304 = vmatprep.subr.bf16.mxu0 0
      %1305 = vmatpush1.bf16.msra.mxu0 0
      %1306 = vmatprep.subr.bf16.mxu0 0
      %1307 = vmatpush1.bf16.msra.mxu0 0
      %1308 = vmatprep.subr.bf16.mxu0 0
      %1309 = vmatpush1.bf16.msra.mxu0 0
      %1310 = vmatprep.subr.bf16.mxu0 0
      %1311 = vmatpush1.bf16.msra.mxu0 0
      %1312 = vmatprep.subr.bf16.mxu0 0
      %1313 = vmatpush1.bf16.msra.mxu0 0
      %1314 = vmatprep.subr.bf16.mxu0 0
      %1315 = vmatpush1.bf16.msra.mxu0 0
      %1316 = vmatprep.subr.bf16.mxu0 0
      %1317 = vmatpush1.bf16.msra.mxu0 0
      %1318 = vmatprep.subr.bf16.mxu0 0
      %1319 = vmatpush1.bf16.msra.mxu0 0
      %1320 = vmatprep.subr.bf16.mxu0 0
      %1321 = vmatpush1.bf16.msra.mxu0 0
      %1322 = vmatprep.subr.bf16.mxu0 0
      %1323 = vmatpush1.bf16.msra.mxu0 0
      %1324 = vmatprep.subr.bf16.mxu0 0
      %1325 = vmatpush1.bf16.msra.mxu0 0
      %1326 = vmatprep.subr.bf16.mxu0 0
      %1327 = vmatpush1.bf16.msra.mxu0 0
      %1328 = vmatprep.subr.bf16.mxu0 0
      %1329 = vmatpush1.bf16.msra.mxu0 0
      %1330 = vmatprep.mubr.bf16.mxu0 0
      %1331 = vmatmul.mubr.bf16.gmra.mrb[0].mxu0 %v1266
      %v1332 = vpop.f32.mrb[0].mxu0
      %v1333 = vadd.f32 0.0, %v1332
      %v1334 = vpop.f32.mrb[0].mxu0
      %v1335 = vadd.f32 0.0, %v1334
      %v1336 = vpop.f32.mrb[0].mxu0
      %v1337 = vpop.f32.mrb[0].mxu0
      %1338 = vdwg.mxu0
      %1339 = vmatprep.subr.bf16.mxu0 %v1278
      %1340 = vmatpush1.bf16.msra.mxu0 %v1275
      %1341 = vmatprep.subr.bf16.mxu0 0
      %1342 = vmatpush1.bf16.msra.mxu0 0
      %1343 = vmatprep.subr.bf16.mxu0 0
      %1344 = vmatpush1.bf16.msra.mxu0 0
      %1345 = vmatprep.subr.bf16.mxu0 0
      %1346 = vmatpush1.bf16.msra.mxu0 0
      %1347 = vmatprep.subr.bf16.mxu0 0
      %1348 = vmatpush1.bf16.msra.mxu0 0
      %1349 = vmatprep.subr.bf16.mxu0 0
      %1350 = vmatpush1.bf16.msra.mxu0 0
      %1351 = vmatprep.subr.bf16.mxu0 0
      %1352 = vmatpush1.bf16.msra.mxu0 0
      %1353 = vmatprep.subr.bf16.mxu0 0
      %1354 = vmatpush1.bf16.msra.mxu0 0
      %1355 = vmatprep.subr.bf16.mxu0 0
      %1356 = vmatpush1.bf16.msra.mxu0 0
      %1357 = vmatprep.subr.bf16.mxu0 0
      %1358 = vmatpush1.bf16.msra.mxu0 0
      %1359 = vmatprep.subr.bf16.mxu0 0
      %1360 = vmatpush1.bf16.msra.mxu0 0
      %1361 = vmatprep.subr.bf16.mxu0 0
      %1362 = vmatpush1.bf16.msra.mxu0 0
      %1363 = vmatprep.subr.bf16.mxu0 0
      %1364 = vmatpush1.bf16.msra.mxu0 0
      %1365 = vmatprep.subr.bf16.mxu0 0
      %1366 = vmatpush1.bf16.msra.mxu0 0
      %1367 = vmatprep.subr.bf16.mxu0 0
      %1368 = vmatpush1.bf16.msra.mxu0 0
      %1369 = vmatprep.subr.bf16.mxu0 0
      %1370 = vmatpush1.bf16.msra.mxu0 0
      %1371 = vmatprep.mubr.bf16.mxu0 0
      %1372 = vmatmul.mubr.bf16.gmra.mrb[0].mxu0 %v1266
      %v1373 = vpop.f32.mrb[0].mxu0
      %v1374 = vadd.f32 0.0, %v1373
      %v1375 = vpop.f32.mrb[0].mxu0
      %v1376 = vadd.f32 0.0, %v1375
      %v1377 = vpop.f32.mrb[0].mxu0
      %v1378 = vpop.f32.mrb[0].mxu0
      %1379 = vdwg.mxu0
      %1380 = vmatprep.subr.bf16.mxu0 %v1284
      %1381 = vmatpush1.bf16.msra.mxu0 %v1281
      %1382 = vmatprep.subr.bf16.mxu0 0
      %1383 = vmatpush1.bf16.msra.mxu0 0
      %1384 = vmatprep.subr.bf16.mxu0 0
      %1385 = vmatpush1.bf16.msra.mxu0 0
      %1386 = vmatprep.subr.bf16.mxu0 0
      %1387 = vmatpush1.bf16.msra.mxu0 0
      %1388 = vmatprep.subr.bf16.mxu0 0
      %1389 = vmatpush1.bf16.msra.mxu0 0
      %1390 = vmatprep.subr.bf16.mxu0 0
      %1391 = vmatpush1.bf16.msra.mxu0 0
      %1392 = vmatprep.subr.bf16.mxu0 0
      %1393 = vmatpush1.bf16.msra.mxu0 0
      %1394 = vmatprep.subr.bf16.mxu0 0
      %1395 = vmatpush1.bf16.msra.mxu0 0
      %1396 = vmatprep.subr.bf16.mxu0 0
      %1397 = vmatpush1.bf16.msra.mxu0 0
      %1398 = vmatprep.subr.bf16.mxu0 0
      %1399 = vmatpush1.bf16.msra.mxu0 0
      %1400 = vmatprep.subr.bf16.mxu0 0
      %1401 = vmatpush1.bf16.msra.mxu0 0
      %1402 = vmatprep.subr.bf16.mxu0 0
      %1403 = vmatpush1.bf16.msra.mxu0 0
      %1404 = vmatprep.subr.bf16.mxu0 0
      %1405 = vmatpush1.bf16.msra.mxu0 0
      %1406 = vmatprep.subr.bf16.mxu0 0
      %1407 = vmatpush1.bf16.msra.mxu0 0
      %1408 = vmatprep.subr.bf16.mxu0 0
      %1409 = vmatpush1.bf16.msra.mxu0 0
      %1410 = vmatprep.subr.bf16.mxu0 0
      %1411 = vmatpush1.bf16.msra.mxu0 0
      %1412 = vmatprep.mubr.bf16.mxu0 0
      %1413 = vmatmul.mubr.bf16.gmra.mrb[0].mxu0 %v1266
      %v1414 = vpop.f32.mrb[0].mxu0
      %v1415 = vadd.f32 0.0, %v1414
      %v1416 = vpop.f32.mrb[0].mxu0
      %v1417 = vadd.f32 0.0, %v1416
      %v1418 = vpop.f32.mrb[0].mxu0
      %v1419 = vpop.f32.mrb[0].mxu0
      %1420 = vdwg.mxu0
      %1421 = vmatprep.subr.bf16.mxu0 %v1290
      %1422 = vmatpush1.bf16.msra.mxu0 %v1287
      %1423 = vmatprep.subr.bf16.mxu0 0
      %1424 = vmatpush1.bf16.msra.mxu0 0
      %1425 = vmatprep.subr.bf16.mxu0 0
      %1426 = vmatpush1.bf16.msra.mxu0 0
      %1427 = vmatprep.subr.bf16.mxu0 0
      %1428 = vmatpush1.bf16.msra.mxu0 0
      %1429 = vmatprep.subr.bf16.mxu0 0
      %1430 = vmatpush1.bf16.msra.mxu0 0
      %1431 = vmatprep.subr.bf16.mxu0 0
      %1432 = vmatpush1.bf16.msra.mxu0 0
      %1433 = vmatprep.subr.bf16.mxu0 0
      %1434 = vmatpush1.bf16.msra.mxu0 0
      %1435 = vmatprep.subr.bf16.mxu0 0
      %1436 = vmatpush1.bf16.msra.mxu0 0
      %1437 = vmatprep.subr.bf16.mxu0 0
      %1438 = vmatpush1.bf16.msra.mxu0 0
      %1439 = vmatprep.subr.bf16.mxu0 0
      %1440 = vmatpush1.bf16.msra.mxu0 0
      %1441 = vmatprep.subr.bf16.mxu0 0
      %1442 = vmatpush1.bf16.msra.mxu0 0
      %1443 = vmatprep.subr.bf16.mxu0 0
      %1444 = vmatpush1.bf16.msra.mxu0 0
      %1445 = vmatprep.subr.bf16.mxu0 0
      %1446 = vmatpush1.bf16.msra.mxu0 0
      %1447 = vmatprep.subr.bf16.mxu0 0
      %1448 = vmatpush1.bf16.msra.mxu0 0
      %1449 = vmatprep.subr.bf16.mxu0 0
      %1450 = vmatpush1.bf16.msra.mxu0 0
      %1451 = vmatprep.subr.bf16.mxu0 0
      %1452 = vmatpush1.bf16.msra.mxu0 0
      %1453 = vmatprep.mubr.bf16.mxu0 0
      %1454 = vmatmul.mubr.bf16.gmra.mrb[0].mxu0 %v1266
      %v1455 = vpop.f32.mrb[0].mxu0
      %v1456 = vadd.f32 0.0, %v1455
      %v1457 = vpop.f32.mrb[0].mxu0
      %v1458 = vadd.f32 0.0, %v1457
      %v1459 = vpop.f32.mrb[0].mxu0
      %v1460 = vpop.f32.mrb[0].mxu0
      %1461 = vdwg.mxu0
      %1462 = vmatprep.subr.bf16.mxu0 %v1296
      %1463 = vmatpush1.bf16.msra.mxu0 %v1293
      %1464 = vmatprep.subr.bf16.mxu0 0
      %1465 = vmatpush1.bf16.msra.mxu0 0
      %1466 = vmatprep.subr.bf16.mxu0 0
      %1467 = vmatpush1.bf16.msra.mxu0 0
      %1468 = vmatprep.subr.bf16.mxu0 0
      %1469 = vmatpush1.bf16.msra.mxu0 0
      %1470 = vmatprep.subr.bf16.mxu0 0
      %1471 = vmatpush1.bf16.msra.mxu0 0
      %1472 = vmatprep.subr.bf16.mxu0 0
      %1473 = vmatpush1.bf16.msra.mxu0 0
      %1474 = vmatprep.subr.bf16.mxu0 0
      %1475 = vmatpush1.bf16.msra.mxu0 0
      %1476 = vmatprep.subr.bf16.mxu0 0
      %1477 = vmatpush1.bf16.msra.mxu0 0
      %1478 = vmatprep.subr.bf16.mxu0 0
      %1479 = vmatpush1.bf16.msra.mxu0 0
      %1480 = vmatprep.subr.bf16.mxu0 0
      %1481 = vmatpush1.bf16.msra.mxu0 0
      %1482 = vmatprep.subr.bf16.mxu0 0
      %1483 = vmatpush1.bf16.msra.mxu0 0
      %1484 = vmatprep.subr.bf16.mxu0 0
      %1485 = vmatpush1.bf16.msra.mxu0 0
      %1486 = vmatprep.subr.bf16.mxu0 0
      %1487 = vmatpush1.bf16.msra.mxu0 0
      %1488 = vmatprep.subr.bf16.mxu0 0
      %1489 = vmatpush1.bf16.msra.mxu0 0
      %1490 = vmatprep.subr.bf16.mxu0 0
      %1491 = vmatpush1.bf16.msra.mxu0 0
      %1492 = vmatprep.subr.bf16.mxu0 0
      %1493 = vmatpush1.bf16.msra.mxu0 0
      %1494 = vmatprep.mubr.bf16.mxu0 0
      %1495 = vmatmul.mubr.bf16.gmra.mrb[0].mxu0 %v1266
      %v1496 = vpop.f32.mrb[0].mxu0
      %v1497 = vadd.f32 0.0, %v1496
      %v1498 = vpop.f32.mrb[0].mxu0
      %v1499 = vadd.f32 0.0, %v1498
      %v1500 = vpop.f32.mrb[0].mxu0
      %v1501 = vpop.f32.mrb[0].mxu0
      %1502 = vdwg.mxu0
      %v1503 = vadd.f32 %v1220, %v1333
      %v1504 = vadd.f32 %v1221, %v1335
      %v1505 = vadd.f32 %v1222, %v1374
      %v1506 = vadd.f32 %v1223, %v1376
      %v1507 = vadd.f32 %v1224, %v1415
      %v1508 = vadd.f32 %v1225, %v1417
      %v1509 = vadd.f32 %v1226, %v1456
      %v1510 = vadd.f32 %v1227, %v1458
      %v1511 = vadd.f32 %v1228, %v1497
      %v1512 = vadd.f32 %v1229, %v1499
      %s1513 = scalar_lea.vmem %s2, 16
      %v1514 = vld [vmem:[%s1513] sm:$0xf]
      %1515 = vrot.lane.b32.xlu0 %v397, 87
      %v1516 = vpop.permute.xlu0 %1515
      %1517 = vrot.lane.b32.xlu0 %v405, 87
      %v1518 = vpop.permute.xlu0 %1517
      %1519 = vrot.lane.b32.xlu0 %v404, 87
      %v1520 = vpop.permute.xlu0 %1519
      %1521 = vrot.lane.b32.xlu0 %v406, 87
      %v1522 = vpop.permute.xlu0 %1521
      %1523 = vrot.lane.b32.xlu0 %v414, 87
      %v1524 = vpop.permute.xlu0 %1523
      %1525 = vrot.lane.b32.xlu0 %v422, 87
      %v1526 = vpop.permute.xlu0 %1525
      %1527 = vrot.lane.b32.xlu0 %v421, 87
      %v1528 = vpop.permute.xlu0 %1527
      %1529 = vrot.lane.b32.xlu0 %v423, 87
      %v1530 = vpop.permute.xlu0 %1529
      %1531 = vrot.lane.b32.xlu0 %v430, 87
      %v1532 = vpop.permute.xlu0 %1531
      %1533 = vrot.lane.b32.xlu0 %v431, 87
      %v1534 = vpop.permute.xlu0 %1533
      %1535 = vrot.lane.b32.xlu0 %v386, 87
      %v1536 = vpop.permute.xlu0 %1535
      %vm1537 = vcmask 711680
      %v1538 = vsel %vm1537, %v1516, %v1518
      %v1539 = vsel %vm1537, %v1518, %v1520
      %v1540 = vsel %vm1537, %v1520, %v1522
      %v1541 = vsel %vm1537, %v1522, %v1524
      %v1542 = vsel %vm1537, %v1524, %v1526
      %v1543 = vsel %vm1537, %v1526, %v1528
      %v1544 = vsel %vm1537, %v1528, %v1530
      %v1545 = vsel %vm1537, %v1530, %v1532
      %v1546 = vsel %vm1537, %v1532, %v1534
      %v1547 = vsel %vm1537, %v1534, %v1536
      %v1549 = vsel %vm469, %v1514, 0
      %v1552 = vsel %vm473, %v1538, 0
      %v1555 = vsel %vm473, %v1539, 0
      %v1558 = vsel %vm473, %v1540, 0
      %v1561 = vsel %vm473, %v1541, 0
      %v1564 = vsel %vm473, %v1542, 0
      %v1567 = vsel %vm473, %v1543, 0
      %v1570 = vsel %vm473, %v1544, 0
      %v1573 = vsel %vm473, %v1545, 0
      %v1576 = vsel %vm473, %v1546, 0
      %v1579 = vsel %vm473, %v1547, 0
      %1581 = vmatprep.subr.bf16.mxu0 %v1555
      %1582 = vmatpush1.bf16.msra.mxu0 %v1552
      %1583 = vmatprep.subr.bf16.mxu0 0
      %1584 = vmatpush1.bf16.msra.mxu0 0
      %1585 = vmatprep.subr.bf16.mxu0 0
      %1586 = vmatpush1.bf16.msra.mxu0 0
      %1587 = vmatprep.subr.bf16.mxu0 0
      %1588 = vmatpush1.bf16.msra.mxu0 0
      %1589 = vmatprep.subr.bf16.mxu0 0
      %1590 = vmatpush1.bf16.msra.mxu0 0
      %1591 = vmatprep.subr.bf16.mxu0 0
      %1592 = vmatpush1.bf16.msra.mxu0 0
      %1593 = vmatprep.subr.bf16.mxu0 0
      %1594 = vmatpush1.bf16.msra.mxu0 0
      %1595 = vmatprep.subr.bf16.mxu0 0
      %1596 = vmatpush1.bf16.msra.mxu0 0
      %1597 = vmatprep.subr.bf16.mxu0 0
      %1598 = vmatpush1.bf16.msra.mxu0 0
      %1599 = vmatprep.subr.bf16.mxu0 0
      %1600 = vmatpush1.bf16.msra.mxu0 0
      %1601 = vmatprep.subr.bf16.mxu0 0
      %1602 = vmatpush1.bf16.msra.mxu0 0
      %1603 = vmatprep.subr.bf16.mxu0 0
      %1604 = vmatpush1.bf16.msra.mxu0 0
      %1605 = vmatprep.subr.bf16.mxu0 0
      %1606 = vmatpush1.bf16.msra.mxu0 0
      %1607 = vmatprep.subr.bf16.mxu0 0
      %1608 = vmatpush1.bf16.msra.mxu0 0
      %1609 = vmatprep.subr.bf16.mxu0 0
      %1610 = vmatpush1.bf16.msra.mxu0 0
      %1611 = vmatprep.subr.bf16.mxu0 0
      %1612 = vmatpush1.bf16.msra.mxu0 0
      %1613 = vmatprep.mubr.bf16.mxu0 0
      %1614 = vmatmul.mubr.bf16.gmra.mrb[0].mxu0 %v1549
      %v1615 = vpop.f32.mrb[0].mxu0
      %v1616 = vadd.f32 0.0, %v1615
      %v1617 = vpop.f32.mrb[0].mxu0
      %v1618 = vadd.f32 0.0, %v1617
      %v1619 = vpop.f32.mrb[0].mxu0
      %v1620 = vpop.f32.mrb[0].mxu0
      %1621 = vdwg.mxu0
      %1622 = vmatprep.subr.bf16.mxu0 %v1561
      %1623 = vmatpush1.bf16.msra.mxu0 %v1558
      %1624 = vmatprep.subr.bf16.mxu0 0
      %1625 = vmatpush1.bf16.msra.mxu0 0
      %1626 = vmatprep.subr.bf16.mxu0 0
      %1627 = vmatpush1.bf16.msra.mxu0 0
      %1628 = vmatprep.subr.bf16.mxu0 0
      %1629 = vmatpush1.bf16.msra.mxu0 0
      %1630 = vmatprep.subr.bf16.mxu0 0
      %1631 = vmatpush1.bf16.msra.mxu0 0
      %1632 = vmatprep.subr.bf16.mxu0 0
      %1633 = vmatpush1.bf16.msra.mxu0 0
      %1634 = vmatprep.subr.bf16.mxu0 0
      %1635 = vmatpush1.bf16.msra.mxu0 0
      %1636 = vmatprep.subr.bf16.mxu0 0
      %1637 = vmatpush1.bf16.msra.mxu0 0
      %1638 = vmatprep.subr.bf16.mxu0 0
      %1639 = vmatpush1.bf16.msra.mxu0 0
      %1640 = vmatprep.subr.bf16.mxu0 0
      %1641 = vmatpush1.bf16.msra.mxu0 0
      %1642 = vmatprep.subr.bf16.mxu0 0
      %1643 = vmatpush1.bf16.msra.mxu0 0
      %1644 = vmatprep.subr.bf16.mxu0 0
      %1645 = vmatpush1.bf16.msra.mxu0 0
      %1646 = vmatprep.subr.bf16.mxu0 0
      %1647 = vmatpush1.bf16.msra.mxu0 0
      %1648 = vmatprep.subr.bf16.mxu0 0
      %1649 = vmatpush1.bf16.msra.mxu0 0
      %1650 = vmatprep.subr.bf16.mxu0 0
      %1651 = vmatpush1.bf16.msra.mxu0 0
      %1652 = vmatprep.subr.bf16.mxu0 0
      %1653 = vmatpush1.bf16.msra.mxu0 0
      %1654 = vmatprep.mubr.bf16.mxu0 0
      %1655 = vmatmul.mubr.bf16.gmra.mrb[0].mxu0 %v1549
      %v1656 = vpop.f32.mrb[0].mxu0
      %v1657 = vadd.f32 0.0, %v1656
      %v1658 = vpop.f32.mrb[0].mxu0
      %v1659 = vadd.f32 0.0, %v1658
      %v1660 = vpop.f32.mrb[0].mxu0
      %v1661 = vpop.f32.mrb[0].mxu0
      %1662 = vdwg.mxu0
      %1663 = vmatprep.subr.bf16.mxu0 %v1567
      %1664 = vmatpush1.bf16.msra.mxu0 %v1564
      %1665 = vmatprep.subr.bf16.mxu0 0
      %1666 = vmatpush1.bf16.msra.mxu0 0
      %1667 = vmatprep.subr.bf16.mxu0 0
      %1668 = vmatpush1.bf16.msra.mxu0 0
      %1669 = vmatprep.subr.bf16.mxu0 0
      %1670 = vmatpush1.bf16.msra.mxu0 0
      %1671 = vmatprep.subr.bf16.mxu0 0
      %1672 = vmatpush1.bf16.msra.mxu0 0
      %1673 = vmatprep.subr.bf16.mxu0 0
      %1674 = vmatpush1.bf16.msra.mxu0 0
      %1675 = vmatprep.subr.bf16.mxu0 0
      %1676 = vmatpush1.bf16.msra.mxu0 0
      %1677 = vmatprep.subr.bf16.mxu0 0
      %1678 = vmatpush1.bf16.msra.mxu0 0
      %1679 = vmatprep.subr.bf16.mxu0 0
      %1680 = vmatpush1.bf16.msra.mxu0 0
      %1681 = vmatprep.subr.bf16.mxu0 0
      %1682 = vmatpush1.bf16.msra.mxu0 0
      %1683 = vmatprep.subr.bf16.mxu0 0
      %1684 = vmatpush1.bf16.msra.mxu0 0
      %1685 = vmatprep.subr.bf16.mxu0 0
      %1686 = vmatpush1.bf16.msra.mxu0 0
      %1687 = vmatprep.subr.bf16.mxu0 0
      %1688 = vmatpush1.bf16.msra.mxu0 0
      %1689 = vmatprep.subr.bf16.mxu0 0
      %1690 = vmatpush1.bf16.msra.mxu0 0
      %1691 = vmatprep.subr.bf16.mxu0 0
      %1692 = vmatpush1.bf16.msra.mxu0 0
      %1693 = vmatprep.subr.bf16.mxu0 0
      %1694 = vmatpush1.bf16.msra.mxu0 0
      %1695 = vmatprep.mubr.bf16.mxu0 0
      %1696 = vmatmul.mubr.bf16.gmra.mrb[0].mxu0 %v1549
      %v1697 = vpop.f32.mrb[0].mxu0
      %v1698 = vadd.f32 0.0, %v1697
      %v1699 = vpop.f32.mrb[0].mxu0
      %v1700 = vadd.f32 0.0, %v1699
      %v1701 = vpop.f32.mrb[0].mxu0
      %v1702 = vpop.f32.mrb[0].mxu0
      %1703 = vdwg.mxu0
      %1704 = vmatprep.subr.bf16.mxu0 %v1573
      %1705 = vmatpush1.bf16.msra.mxu0 %v1570
      %1706 = vmatprep.subr.bf16.mxu0 0
      %1707 = vmatpush1.bf16.msra.mxu0 0
      %1708 = vmatprep.subr.bf16.mxu0 0
      %1709 = vmatpush1.bf16.msra.mxu0 0
      %1710 = vmatprep.subr.bf16.mxu0 0
      %1711 = vmatpush1.bf16.msra.mxu0 0
      %1712 = vmatprep.subr.bf16.mxu0 0
      %1713 = vmatpush1.bf16.msra.mxu0 0
      %1714 = vmatprep.subr.bf16.mxu0 0
      %1715 = vmatpush1.bf16.msra.mxu0 0
      %1716 = vmatprep.subr.bf16.mxu0 0
      %1717 = vmatpush1.bf16.msra.mxu0 0
      %1718 = vmatprep.subr.bf16.mxu0 0
      %1719 = vmatpush1.bf16.msra.mxu0 0
      %1720 = vmatprep.subr.bf16.mxu0 0
      %1721 = vmatpush1.bf16.msra.mxu0 0
      %1722 = vmatprep.subr.bf16.mxu0 0
      %1723 = vmatpush1.bf16.msra.mxu0 0
      %1724 = vmatprep.subr.bf16.mxu0 0
      %1725 = vmatpush1.bf16.msra.mxu0 0
      %1726 = vmatprep.subr.bf16.mxu0 0
      %1727 = vmatpush1.bf16.msra.mxu0 0
      %1728 = vmatprep.subr.bf16.mxu0 0
      %1729 = vmatpush1.bf16.msra.mxu0 0
      %1730 = vmatprep.subr.bf16.mxu0 0
      %1731 = vmatpush1.bf16.msra.mxu0 0
      %1732 = vmatprep.subr.bf16.mxu0 0
      %1733 = vmatpush1.bf16.msra.mxu0 0
      %1734 = vmatprep.subr.bf16.mxu0 0
      %1735 = vmatpush1.bf16.msra.mxu0 0
      %1736 = vmatprep.mubr.bf16.mxu0 0
      %1737 = vmatmul.mubr.bf16.gmra.mrb[0].mxu0 %v1549
      %v1738 = vpop.f32.mrb[0].mxu0
      %v1739 = vadd.f32 0.0, %v1738
      %v1740 = vpop.f32.mrb[0].mxu0
      %v1741 = vadd.f32 0.0, %v1740
      %v1742 = vpop.f32.mrb[0].mxu0
      %v1743 = vpop.f32.mrb[0].mxu0
      %1744 = vdwg.mxu0
      %1745 = vmatprep.subr.bf16.mxu0 %v1579
      %1746 = vmatpush1.bf16.msra.mxu0 %v1576
      %1747 = vmatprep.subr.bf16.mxu0 0
      %1748 = vmatpush1.bf16.msra.mxu0 0
      %1749 = vmatprep.subr.bf16.mxu0 0
      %1750 = vmatpush1.bf16.msra.mxu0 0
      %1751 = vmatprep.subr.bf16.mxu0 0
      %1752 = vmatpush1.bf16.msra.mxu0 0
      %1753 = vmatprep.subr.bf16.mxu0 0
      %1754 = vmatpush1.bf16.msra.mxu0 0
      %1755 = vmatprep.subr.bf16.mxu0 0
      %1756 = vmatpush1.bf16.msra.mxu0 0
      %1757 = vmatprep.subr.bf16.mxu0 0
      %1758 = vmatpush1.bf16.msra.mxu0 0
      %1759 = vmatprep.subr.bf16.mxu0 0
      %1760 = vmatpush1.bf16.msra.mxu0 0
      %1761 = vmatprep.subr.bf16.mxu0 0
      %1762 = vmatpush1.bf16.msra.mxu0 0
      %1763 = vmatprep.subr.bf16.mxu0 0
      %1764 = vmatpush1.bf16.msra.mxu0 0
      %1765 = vmatprep.subr.bf16.mxu0 0
      %1766 = vmatpush1.bf16.msra.mxu0 0
      %1767 = vmatprep.subr.bf16.mxu0 0
      %1768 = vmatpush1.bf16.msra.mxu0 0
      %1769 = vmatprep.subr.bf16.mxu0 0
      %1770 = vmatpush1.bf16.msra.mxu0 0
      %1771 = vmatprep.subr.bf16.mxu0 0
      %1772 = vmatpush1.bf16.msra.mxu0 0
      %1773 = vmatprep.subr.bf16.mxu0 0
      %1774 = vmatpush1.bf16.msra.mxu0 0
      %1775 = vmatprep.subr.bf16.mxu0 0
      %1776 = vmatpush1.bf16.msra.mxu0 0
      %1777 = vmatprep.mubr.bf16.mxu0 0
      %1778 = vmatmul.mubr.bf16.gmra.mrb[0].mxu0 %v1549
      %v1779 = vpop.f32.mrb[0].mxu0
      %v1780 = vadd.f32 0.0, %v1779
      %v1781 = vpop.f32.mrb[0].mxu0
      %v1782 = vadd.f32 0.0, %v1781
      %v1783 = vpop.f32.mrb[0].mxu0
      %v1784 = vpop.f32.mrb[0].mxu0
      %1785 = vdwg.mxu0
      %v1786 = vadd.f32 %v1503, %v1616
      %v1787 = vadd.f32 %v1504, %v1618
      %v1788 = vadd.f32 %v1505, %v1657
      %v1789 = vadd.f32 %v1506, %v1659
      %v1790 = vadd.f32 %v1507, %v1698
      %v1791 = vadd.f32 %v1508, %v1700
      %v1792 = vadd.f32 %v1509, %v1739
      %v1793 = vadd.f32 %v1510, %v1741
      %v1794 = vadd.f32 %v1511, %v1780
      %v1795 = vadd.f32 %v1512, %v1782
      %s1796 = scalar_lea.vmem %s2, 20
      %v1797 = vld [vmem:[%s1796] sm:$0xf]
      %1798 = vrot.lane.b32.xlu0 %v397, 86
      %v1799 = vpop.permute.xlu0 %1798
      %1800 = vrot.lane.b32.xlu0 %v405, 86
      %v1801 = vpop.permute.xlu0 %1800
      %1802 = vrot.lane.b32.xlu0 %v404, 86
      %v1803 = vpop.permute.xlu0 %1802
      %1804 = vrot.lane.b32.xlu0 %v406, 86
      %v1805 = vpop.permute.xlu0 %1804
      %1806 = vrot.lane.b32.xlu0 %v414, 86
      %v1807 = vpop.permute.xlu0 %1806
      %1808 = vrot.lane.b32.xlu0 %v422, 86
      %v1809 = vpop.permute.xlu0 %1808
      %1810 = vrot.lane.b32.xlu0 %v421, 86
      %v1811 = vpop.permute.xlu0 %1810
      %1812 = vrot.lane.b32.xlu0 %v423, 86
      %v1813 = vpop.permute.xlu0 %1812
      %1814 = vrot.lane.b32.xlu0 %v430, 86
      %v1815 = vpop.permute.xlu0 %1814
      %1816 = vrot.lane.b32.xlu0 %v431, 86
      %v1817 = vpop.permute.xlu0 %1816
      %1818 = vrot.lane.b32.xlu0 %v386, 86
      %v1819 = vpop.permute.xlu0 %1818
      %vm1820 = vcmask 703488
      %v1821 = vsel %vm1820, %v1799, %v1801
      %v1822 = vsel %vm1820, %v1801, %v1803
      %v1823 = vsel %vm1820, %v1803, %v1805
      %v1824 = vsel %vm1820, %v1805, %v1807
      %v1825 = vsel %vm1820, %v1807, %v1809
      %v1826 = vsel %vm1820, %v1809, %v1811
      %v1827 = vsel %vm1820, %v1811, %v1813
      %v1828 = vsel %vm1820, %v1813, %v1815
      %v1829 = vsel %vm1820, %v1815, %v1817
      %v1830 = vsel %vm1820, %v1817, %v1819
      %v1832 = vsel %vm469, %v1797, 0
      %v1835 = vsel %vm473, %v1821, 0
      %v1838 = vsel %vm473, %v1822, 0
      %v1841 = vsel %vm473, %v1823, 0
      %v1844 = vsel %vm473, %v1824, 0
      %v1847 = vsel %vm473, %v1825, 0
      %v1850 = vsel %vm473, %v1826, 0
      %v1853 = vsel %vm473, %v1827, 0
      %v1856 = vsel %vm473, %v1828, 0
      %v1859 = vsel %vm473, %v1829, 0
      %v1862 = vsel %vm473, %v1830, 0
      %1864 = vmatprep.subr.bf16.mxu0 %v1838
      %1865 = vmatpush1.bf16.msra.mxu0 %v1835
      %1866 = vmatprep.subr.bf16.mxu0 0
      %1867 = vmatpush1.bf16.msra.mxu0 0
      %1868 = vmatprep.subr.bf16.mxu0 0
      %1869 = vmatpush1.bf16.msra.mxu0 0
      %1870 = vmatprep.subr.bf16.mxu0 0
      %1871 = vmatpush1.bf16.msra.mxu0 0
      %1872 = vmatprep.subr.bf16.mxu0 0
      %1873 = vmatpush1.bf16.msra.mxu0 0
      %1874 = vmatprep.subr.bf16.mxu0 0
      %1875 = vmatpush1.bf16.msra.mxu0 0
      %1876 = vmatprep.subr.bf16.mxu0 0
      %1877 = vmatpush1.bf16.msra.mxu0 0
      %1878 = vmatprep.subr.bf16.mxu0 0
      %1879 = vmatpush1.bf16.msra.mxu0 0
      %1880 = vmatprep.subr.bf16.mxu0 0
      %1881 = vmatpush1.bf16.msra.mxu0 0
      %1882 = vmatprep.subr.bf16.mxu0 0
      %1883 = vmatpush1.bf16.msra.mxu0 0
      %1884 = vmatprep.subr.bf16.mxu0 0
      %1885 = vmatpush1.bf16.msra.mxu0 0
      %1886 = vmatprep.subr.bf16.mxu0 0
      %1887 = vmatpush1.bf16.msra.mxu0 0
      %1888 = vmatprep.subr.bf16.mxu0 0
      %1889 = vmatpush1.bf16.msra.mxu0 0
      %1890 = vmatprep.subr.bf16.mxu0 0
      %1891 = vmatpush1.bf16.msra.mxu0 0
      %1892 = vmatprep.subr.bf16.mxu0 0
      %1893 = vmatpush1.bf16.msra.mxu0 0
      %1894 = vmatprep.subr.bf16.mxu0 0
      %1895 = vmatpush1.bf16.msra.mxu0 0
      %1896 = vmatprep.mubr.bf16.mxu0 0
      %1897 = vmatmul.mubr.bf16.gmra.mrb[0].mxu0 %v1832
      %v1898 = vpop.f32.mrb[0].mxu0
      %v1899 = vadd.f32 0.0, %v1898
      %v1900 = vpop.f32.mrb[0].mxu0
      %v1901 = vadd.f32 0.0, %v1900
      %v1902 = vpop.f32.mrb[0].mxu0
      %v1903 = vpop.f32.mrb[0].mxu0
      %1904 = vdwg.mxu0
      %1905 = vmatprep.subr.bf16.mxu0 %v1844
      %1906 = vmatpush1.bf16.msra.mxu0 %v1841
      %1907 = vmatprep.subr.bf16.mxu0 0
      %1908 = vmatpush1.bf16.msra.mxu0 0
      %1909 = vmatprep.subr.bf16.mxu0 0
      %1910 = vmatpush1.bf16.msra.mxu0 0
      %1911 = vmatprep.subr.bf16.mxu0 0
      %1912 = vmatpush1.bf16.msra.mxu0 0
      %1913 = vmatprep.subr.bf16.mxu0 0
      %1914 = vmatpush1.bf16.msra.mxu0 0
      %1915 = vmatprep.subr.bf16.mxu0 0
      %1916 = vmatpush1.bf16.msra.mxu0 0
      %1917 = vmatprep.subr.bf16.mxu0 0
      %1918 = vmatpush1.bf16.msra.mxu0 0
      %1919 = vmatprep.subr.bf16.mxu0 0
      %1920 = vmatpush1.bf16.msra.mxu0 0
      %1921 = vmatprep.subr.bf16.mxu0 0
      %1922 = vmatpush1.bf16.msra.mxu0 0
      %1923 = vmatprep.subr.bf16.mxu0 0
      %1924 = vmatpush1.bf16.msra.mxu0 0
      %1925 = vmatprep.subr.bf16.mxu0 0
      %1926 = vmatpush1.bf16.msra.mxu0 0
      %1927 = vmatprep.subr.bf16.mxu0 0
      %1928 = vmatpush1.bf16.msra.mxu0 0
      %1929 = vmatprep.subr.bf16.mxu0 0
      %1930 = vmatpush1.bf16.msra.mxu0 0
      %1931 = vmatprep.subr.bf16.mxu0 0
      %1932 = vmatpush1.bf16.msra.mxu0 0
      %1933 = vmatprep.subr.bf16.mxu0 0
      %1934 = vmatpush1.bf16.msra.mxu0 0
      %1935 = vmatprep.subr.bf16.mxu0 0
      %1936 = vmatpush1.bf16.msra.mxu0 0
      %1937 = vmatprep.mubr.bf16.mxu0 0
      %1938 = vmatmul.mubr.bf16.gmra.mrb[0].mxu0 %v1832
      %v1939 = vpop.f32.mrb[0].mxu0
      %v1940 = vadd.f32 0.0, %v1939
      %v1941 = vpop.f32.mrb[0].mxu0
      %v1942 = vadd.f32 0.0, %v1941
      %v1943 = vpop.f32.mrb[0].mxu0
      %v1944 = vpop.f32.mrb[0].mxu0
      %1945 = vdwg.mxu0
      %1946 = vmatprep.subr.bf16.mxu0 %v1850
      %1947 = vmatpush1.bf16.msra.mxu0 %v1847
      %1948 = vmatprep.subr.bf16.mxu0 0
      %1949 = vmatpush1.bf16.msra.mxu0 0
      %1950 = vmatprep.subr.bf16.mxu0 0
      %1951 = vmatpush1.bf16.msra.mxu0 0
      %1952 = vmatprep.subr.bf16.mxu0 0
      %1953 = vmatpush1.bf16.msra.mxu0 0
      %1954 = vmatprep.subr.bf16.mxu0 0
      %1955 = vmatpush1.bf16.msra.mxu0 0
      %1956 = vmatprep.subr.bf16.mxu0 0
      %1957 = vmatpush1.bf16.msra.mxu0 0
      %1958 = vmatprep.subr.bf16.mxu0 0
      %1959 = vmatpush1.bf16.msra.mxu0 0
      %1960 = vmatprep.subr.bf16.mxu0 0
      %1961 = vmatpush1.bf16.msra.mxu0 0
      %1962 = vmatprep.subr.bf16.mxu0 0
      %1963 = vmatpush1.bf16.msra.mxu0 0
      %1964 = vmatprep.subr.bf16.mxu0 0
      %1965 = vmatpush1.bf16.msra.mxu0 0
      %1966 = vmatprep.subr.bf16.mxu0 0
      %1967 = vmatpush1.bf16.msra.mxu0 0
      %1968 = vmatprep.subr.bf16.mxu0 0
      %1969 = vmatpush1.bf16.msra.mxu0 0
      %1970 = vmatprep.subr.bf16.mxu0 0
      %1971 = vmatpush1.bf16.msra.mxu0 0
      %1972 = vmatprep.subr.bf16.mxu0 0
      %1973 = vmatpush1.bf16.msra.mxu0 0
      %1974 = vmatprep.subr.bf16.mxu0 0
      %1975 = vmatpush1.bf16.msra.mxu0 0
      %1976 = vmatprep.subr.bf16.mxu0 0
      %1977 = vmatpush1.bf16.msra.mxu0 0
      %1978 = vmatprep.mubr.bf16.mxu0 0
      %1979 = vmatmul.mubr.bf16.gmra.mrb[0].mxu0 %v1832
      %v1980 = vpop.f32.mrb[0].mxu0
      %v1981 = vadd.f32 0.0, %v1980
      %v1982 = vpop.f32.mrb[0].mxu0
      %v1983 = vadd.f32 0.0, %v1982
      %v1984 = vpop.f32.mrb[0].mxu0
      %v1985 = vpop.f32.mrb[0].mxu0
      %1986 = vdwg.mxu0
      %1987 = vmatprep.subr.bf16.mxu0 %v1856
      %1988 = vmatpush1.bf16.msra.mxu0 %v1853
      %1989 = vmatprep.subr.bf16.mxu0 0
      %1990 = vmatpush1.bf16.msra.mxu0 0
      %1991 = vmatprep.subr.bf16.mxu0 0
      %1992 = vmatpush1.bf16.msra.mxu0 0
      %1993 = vmatprep.subr.bf16.mxu0 0
      %1994 = vmatpush1.bf16.msra.mxu0 0
      %1995 = vmatprep.subr.bf16.mxu0 0
      %1996 = vmatpush1.bf16.msra.mxu0 0
      %1997 = vmatprep.subr.bf16.mxu0 0
      %1998 = vmatpush1.bf16.msra.mxu0 0
      %1999 = vmatprep.subr.bf16.mxu0 0
      %2000 = vmatpush1.bf16.msra.mxu0 0
      %2001 = vmatprep.subr.bf16.mxu0 0
      %2002 = vmatpush1.bf16.msra.mxu0 0
      %2003 = vmatprep.subr.bf16.mxu0 0
      %2004 = vmatpush1.bf16.msra.mxu0 0
      %2005 = vmatprep.subr.bf16.mxu0 0
      %2006 = vmatpush1.bf16.msra.mxu0 0
      %2007 = vmatprep.subr.bf16.mxu0 0
      %2008 = vmatpush1.bf16.msra.mxu0 0
      %2009 = vmatprep.subr.bf16.mxu0 0
      %2010 = vmatpush1.bf16.msra.mxu0 0
      %2011 = vmatprep.subr.bf16.mxu0 0
      %2012 = vmatpush1.bf16.msra.mxu0 0
      %2013 = vmatprep.subr.bf16.mxu0 0
      %2014 = vmatpush1.bf16.msra.mxu0 0
      %2015 = vmatprep.subr.bf16.mxu0 0
      %2016 = vmatpush1.bf16.msra.mxu0 0
      %2017 = vmatprep.subr.bf16.mxu0 0
      %2018 = vmatpush1.bf16.msra.mxu0 0
      %2019 = vmatprep.mubr.bf16.mxu0 0
      %2020 = vmatmul.mubr.bf16.gmra.mrb[0].mxu0 %v1832
      %v2021 = vpop.f32.mrb[0].mxu0
      %v2022 = vadd.f32 0.0, %v2021
      %v2023 = vpop.f32.mrb[0].mxu0
      %v2024 = vadd.f32 0.0, %v2023
      %v2025 = vpop.f32.mrb[0].mxu0
      %v2026 = vpop.f32.mrb[0].mxu0
      %2027 = vdwg.mxu0
      %2028 = vmatprep.subr.bf16.mxu0 %v1862
      %2029 = vmatpush1.bf16.msra.mxu0 %v1859
      %2030 = vmatprep.subr.bf16.mxu0 0
      %2031 = vmatpush1.bf16.msra.mxu0 0
      %2032 = vmatprep.subr.bf16.mxu0 0
      %2033 = vmatpush1.bf16.msra.mxu0 0
      %2034 = vmatprep.subr.bf16.mxu0 0
      %2035 = vmatpush1.bf16.msra.mxu0 0
      %2036 = vmatprep.subr.bf16.mxu0 0
      %2037 = vmatpush1.bf16.msra.mxu0 0
      %2038 = vmatprep.subr.bf16.mxu0 0
      %2039 = vmatpush1.bf16.msra.mxu0 0
      %2040 = vmatprep.subr.bf16.mxu0 0
      %2041 = vmatpush1.bf16.msra.mxu0 0
      %2042 = vmatprep.subr.bf16.mxu0 0
      %2043 = vmatpush1.bf16.msra.mxu0 0
      %2044 = vmatprep.subr.bf16.mxu0 0
      %2045 = vmatpush1.bf16.msra.mxu0 0
      %2046 = vmatprep.subr.bf16.mxu0 0
      %2047 = vmatpush1.bf16.msra.mxu0 0
      %2048 = vmatprep.subr.bf16.mxu0 0
      %2049 = vmatpush1.bf16.msra.mxu0 0
      %2050 = vmatprep.subr.bf16.mxu0 0
      %2051 = vmatpush1.bf16.msra.mxu0 0
      %2052 = vmatprep.subr.bf16.mxu0 0
      %2053 = vmatpush1.bf16.msra.mxu0 0
      %2054 = vmatprep.subr.bf16.mxu0 0
      %2055 = vmatpush1.bf16.msra.mxu0 0
      %2056 = vmatprep.subr.bf16.mxu0 0
      %2057 = vmatpush1.bf16.msra.mxu0 0
      %2058 = vmatprep.subr.bf16.mxu0 0
      %2059 = vmatpush1.bf16.msra.mxu0 0
      %2060 = vmatprep.mubr.bf16.mxu0 0
      %2061 = vmatmul.mubr.bf16.gmra.mrb[0].mxu0 %v1832
      %v2062 = vpop.f32.mrb[0].mxu0
      %v2063 = vadd.f32 0.0, %v2062
      %v2064 = vpop.f32.mrb[0].mxu0
      %v2065 = vadd.f32 0.0, %v2064
      %v2066 = vpop.f32.mrb[0].mxu0
      %v2067 = vpop.f32.mrb[0].mxu0
      %2068 = vdwg.mxu0
      %v2069 = vadd.f32 %v1786, %v1899
      %v2070 = vadd.f32 %v1787, %v1901
      %v2071 = vadd.f32 %v1788, %v1940
      %v2072 = vadd.f32 %v1789, %v1942
      %v2073 = vadd.f32 %v1790, %v1981
      %v2074 = vadd.f32 %v1791, %v1983
      %v2075 = vadd.f32 %v1792, %v2022
      %v2076 = vadd.f32 %v1793, %v2024
      %v2077 = vadd.f32 %v1794, %v2063
      %v2078 = vadd.f32 %v1795, %v2065
      %s2079 = scalar_lea.vmem %s2, 24
      %v2080 = vld [vmem:[%s2079] sm:$0xf]
      %2081 = vrot.lane.b32.xlu0 %v397, 48
      %v2082 = vpop.permute.xlu0 %2081
      %2083 = vrot.lane.b32.xlu0 %v405, 48
      %v2084 = vpop.permute.xlu0 %2083
      %2085 = vrot.lane.b32.xlu0 %v404, 48
      %v2086 = vpop.permute.xlu0 %2085
      %2087 = vrot.lane.b32.xlu0 %v406, 48
      %v2088 = vpop.permute.xlu0 %2087
      %2089 = vrot.lane.b32.xlu0 %v414, 48
      %v2090 = vpop.permute.xlu0 %2089
      %2091 = vrot.lane.b32.xlu0 %v422, 48
      %v2092 = vpop.permute.xlu0 %2091
      %2093 = vrot.lane.b32.xlu0 %v421, 48
      %v2094 = vpop.permute.xlu0 %2093
      %2095 = vrot.lane.b32.xlu0 %v423, 48
      %v2096 = vpop.permute.xlu0 %2095
      %2097 = vrot.lane.b32.xlu0 %v430, 48
      %v2098 = vpop.permute.xlu0 %2097
      %2099 = vrot.lane.b32.xlu0 %v431, 48
      %v2100 = vpop.permute.xlu0 %2099
      %2101 = vrot.lane.b32.xlu0 %v386, 48
      %v2102 = vpop.permute.xlu0 %2101
      %vm2103 = vcmask 392192
      %v2104 = vsel %vm2103, %v2082, %v2084
      %v2105 = vsel %vm2103, %v2084, %v2086
      %v2106 = vsel %vm2103, %v2086, %v2088
      %v2107 = vsel %vm2103, %v2088, %v2090
      %v2108 = vsel %vm2103, %v2090, %v2092
      %v2109 = vsel %vm2103, %v2092, %v2094
      %v2110 = vsel %vm2103, %v2094, %v2096
      %v2111 = vsel %vm2103, %v2096, %v2098
      %v2112 = vsel %vm2103, %v2098, %v2100
      %v2113 = vsel %vm2103, %v2100, %v2102
      %v2115 = vsel %vm469, %v2080, 0
      %v2118 = vsel %vm473, %v2104, 0
      %v2121 = vsel %vm473, %v2105, 0
      %v2124 = vsel %vm473, %v2106, 0
      %v2127 = vsel %vm473, %v2107, 0
      %v2130 = vsel %vm473, %v2108, 0
      %v2133 = vsel %vm473, %v2109, 0
      %v2136 = vsel %vm473, %v2110, 0
      %v2139 = vsel %vm473, %v2111, 0
      %v2142 = vsel %vm473, %v2112, 0
      %v2145 = vsel %vm473, %v2113, 0
      %2147 = vmatprep.subr.bf16.mxu0 %v2121
      %2148 = vmatpush1.bf16.msra.mxu0 %v2118
      %2149 = vmatprep.subr.bf16.mxu0 0
      %2150 = vmatpush1.bf16.msra.mxu0 0
      %2151 = vmatprep.subr.bf16.mxu0 0
      %2152 = vmatpush1.bf16.msra.mxu0 0
      %2153 = vmatprep.subr.bf16.mxu0 0
      %2154 = vmatpush1.bf16.msra.mxu0 0
      %2155 = vmatprep.subr.bf16.mxu0 0
      %2156 = vmatpush1.bf16.msra.mxu0 0
      %2157 = vmatprep.subr.bf16.mxu0 0
      %2158 = vmatpush1.bf16.msra.mxu0 0
      %2159 = vmatprep.subr.bf16.mxu0 0
      %2160 = vmatpush1.bf16.msra.mxu0 0
      %2161 = vmatprep.subr.bf16.mxu0 0
      %2162 = vmatpush1.bf16.msra.mxu0 0
      %2163 = vmatprep.subr.bf16.mxu0 0
      %2164 = vmatpush1.bf16.msra.mxu0 0
      %2165 = vmatprep.subr.bf16.mxu0 0
      %2166 = vmatpush1.bf16.msra.mxu0 0
      %2167 = vmatprep.subr.bf16.mxu0 0
      %2168 = vmatpush1.bf16.msra.mxu0 0
      %2169 = vmatprep.subr.bf16.mxu0 0
      %2170 = vmatpush1.bf16.msra.mxu0 0
      %2171 = vmatprep.subr.bf16.mxu0 0
      %2172 = vmatpush1.bf16.msra.mxu0 0
      %2173 = vmatprep.subr.bf16.mxu0 0
      %2174 = vmatpush1.bf16.msra.mxu0 0
      %2175 = vmatprep.subr.bf16.mxu0 0
      %2176 = vmatpush1.bf16.msra.mxu0 0
      %2177 = vmatprep.subr.bf16.mxu0 0
      %2178 = vmatpush1.bf16.msra.mxu0 0
      %2179 = vmatprep.mubr.bf16.mxu0 0
      %2180 = vmatmul.mubr.bf16.gmra.mrb[0].mxu0 %v2115
      %v2181 = vpop.f32.mrb[0].mxu0
      %v2182 = vadd.f32 0.0, %v2181
      %v2183 = vpop.f32.mrb[0].mxu0
      %v2184 = vadd.f32 0.0, %v2183
      %v2185 = vpop.f32.mrb[0].mxu0
      %v2186 = vpop.f32.mrb[0].mxu0
      %2187 = vdwg.mxu0
      %2188 = vmatprep.subr.bf16.mxu0 %v2127
      %2189 = vmatpush1.bf16.msra.mxu0 %v2124
      %2190 = vmatprep.subr.bf16.mxu0 0
      %2191 = vmatpush1.bf16.msra.mxu0 0
      %2192 = vmatprep.subr.bf16.mxu0 0
      %2193 = vmatpush1.bf16.msra.mxu0 0
      %2194 = vmatprep.subr.bf16.mxu0 0
      %2195 = vmatpush1.bf16.msra.mxu0 0
      %2196 = vmatprep.subr.bf16.mxu0 0
      %2197 = vmatpush1.bf16.msra.mxu0 0
      %2198 = vmatprep.subr.bf16.mxu0 0
      %2199 = vmatpush1.bf16.msra.mxu0 0
      %2200 = vmatprep.subr.bf16.mxu0 0
      %2201 = vmatpush1.bf16.msra.mxu0 0
      %2202 = vmatprep.subr.bf16.mxu0 0
      %2203 = vmatpush1.bf16.msra.mxu0 0
      %2204 = vmatprep.subr.bf16.mxu0 0
      %2205 = vmatpush1.bf16.msra.mxu0 0
      %2206 = vmatprep.subr.bf16.mxu0 0
      %2207 = vmatpush1.bf16.msra.mxu0 0
      %2208 = vmatprep.subr.bf16.mxu0 0
      %2209 = vmatpush1.bf16.msra.mxu0 0
      %2210 = vmatprep.subr.bf16.mxu0 0
      %2211 = vmatpush1.bf16.msra.mxu0 0
      %2212 = vmatprep.subr.bf16.mxu0 0
      %2213 = vmatpush1.bf16.msra.mxu0 0
      %2214 = vmatprep.subr.bf16.mxu0 0
      %2215 = vmatpush1.bf16.msra.mxu0 0
      %2216 = vmatprep.subr.bf16.mxu0 0
      %2217 = vmatpush1.bf16.msra.mxu0 0
      %2218 = vmatprep.subr.bf16.mxu0 0
      %2219 = vmatpush1.bf16.msra.mxu0 0
      %2220 = vmatprep.mubr.bf16.mxu0 0
      %2221 = vmatmul.mubr.bf16.gmra.mrb[0].mxu0 %v2115
      %v2222 = vpop.f32.mrb[0].mxu0
      %v2223 = vadd.f32 0.0, %v2222
      %v2224 = vpop.f32.mrb[0].mxu0
      %v2225 = vadd.f32 0.0, %v2224
      %v2226 = vpop.f32.mrb[0].mxu0
      %v2227 = vpop.f32.mrb[0].mxu0
      %2228 = vdwg.mxu0
      %2229 = vmatprep.subr.bf16.mxu0 %v2133
      %2230 = vmatpush1.bf16.msra.mxu0 %v2130
      %2231 = vmatprep.subr.bf16.mxu0 0
      %2232 = vmatpush1.bf16.msra.mxu0 0
      %2233 = vmatprep.subr.bf16.mxu0 0
      %2234 = vmatpush1.bf16.msra.mxu0 0
      %2235 = vmatprep.subr.bf16.mxu0 0
      %2236 = vmatpush1.bf16.msra.mxu0 0
      %2237 = vmatprep.subr.bf16.mxu0 0
      %2238 = vmatpush1.bf16.msra.mxu0 0
      %2239 = vmatprep.subr.bf16.mxu0 0
      %2240 = vmatpush1.bf16.msra.mxu0 0
      %2241 = vmatprep.subr.bf16.mxu0 0
      %2242 = vmatpush1.bf16.msra.mxu0 0
      %2243 = vmatprep.subr.bf16.mxu0 0
      %2244 = vmatpush1.bf16.msra.mxu0 0
      %2245 = vmatprep.subr.bf16.mxu0 0
      %2246 = vmatpush1.bf16.msra.mxu0 0
      %2247 = vmatprep.subr.bf16.mxu0 0
      %2248 = vmatpush1.bf16.msra.mxu0 0
      %2249 = vmatprep.subr.bf16.mxu0 0
      %2250 = vmatpush1.bf16.msra.mxu0 0
      %2251 = vmatprep.subr.bf16.mxu0 0
      %2252 = vmatpush1.bf16.msra.mxu0 0
      %2253 = vmatprep.subr.bf16.mxu0 0
      %2254 = vmatpush1.bf16.msra.mxu0 0
      %2255 = vmatprep.subr.bf16.mxu0 0
      %2256 = vmatpush1.bf16.msra.mxu0 0
      %2257 = vmatprep.subr.bf16.mxu0 0
      %2258 = vmatpush1.bf16.msra.mxu0 0
      %2259 = vmatprep.subr.bf16.mxu0 0
      %2260 = vmatpush1.bf16.msra.mxu0 0
      %2261 = vmatprep.mubr.bf16.mxu0 0
      %2262 = vmatmul.mubr.bf16.gmra.mrb[0].mxu0 %v2115
      %v2263 = vpop.f32.mrb[0].mxu0
      %v2264 = vadd.f32 0.0, %v2263
      %v2265 = vpop.f32.mrb[0].mxu0
      %v2266 = vadd.f32 0.0, %v2265
      %v2267 = vpop.f32.mrb[0].mxu0
      %v2268 = vpop.f32.mrb[0].mxu0
      %2269 = vdwg.mxu0
      %2270 = vmatprep.subr.bf16.mxu0 %v2139
      %2271 = vmatpush1.bf16.msra.mxu0 %v2136
      %2272 = vmatprep.subr.bf16.mxu0 0
      %2273 = vmatpush1.bf16.msra.mxu0 0
      %2274 = vmatprep.subr.bf16.mxu0 0
      %2275 = vmatpush1.bf16.msra.mxu0 0
      %2276 = vmatprep.subr.bf16.mxu0 0
      %2277 = vmatpush1.bf16.msra.mxu0 0
      %2278 = vmatprep.subr.bf16.mxu0 0
      %2279 = vmatpush1.bf16.msra.mxu0 0
      %2280 = vmatprep.subr.bf16.mxu0 0
      %2281 = vmatpush1.bf16.msra.mxu0 0
      %2282 = vmatprep.subr.bf16.mxu0 0
      %2283 = vmatpush1.bf16.msra.mxu0 0
      %2284 = vmatprep.subr.bf16.mxu0 0
      %2285 = vmatpush1.bf16.msra.mxu0 0
      %2286 = vmatprep.subr.bf16.mxu0 0
      %2287 = vmatpush1.bf16.msra.mxu0 0
      %2288 = vmatprep.subr.bf16.mxu0 0
      %2289 = vmatpush1.bf16.msra.mxu0 0
      %2290 = vmatprep.subr.bf16.mxu0 0
      %2291 = vmatpush1.bf16.msra.mxu0 0
      %2292 = vmatprep.subr.bf16.mxu0 0
      %2293 = vmatpush1.bf16.msra.mxu0 0
      %2294 = vmatprep.subr.bf16.mxu0 0
      %2295 = vmatpush1.bf16.msra.mxu0 0
      %2296 = vmatprep.subr.bf16.mxu0 0
      %2297 = vmatpush1.bf16.msra.mxu0 0
      %2298 = vmatprep.subr.bf16.mxu0 0
      %2299 = vmatpush1.bf16.msra.mxu0 0
      %2300 = vmatprep.subr.bf16.mxu0 0
      %2301 = vmatpush1.bf16.msra.mxu0 0
      %2302 = vmatprep.mubr.bf16.mxu0 0
      %2303 = vmatmul.mubr.bf16.gmra.mrb[0].mxu0 %v2115
      %v2304 = vpop.f32.mrb[0].mxu0
      %v2305 = vadd.f32 0.0, %v2304
      %v2306 = vpop.f32.mrb[0].mxu0
      %v2307 = vadd.f32 0.0, %v2306
      %v2308 = vpop.f32.mrb[0].mxu0
      %v2309 = vpop.f32.mrb[0].mxu0
      %2310 = vdwg.mxu0
      %2311 = vmatprep.subr.bf16.mxu0 %v2145
      %2312 = vmatpush1.bf16.msra.mxu0 %v2142
      %2313 = vmatprep.subr.bf16.mxu0 0
      %2314 = vmatpush1.bf16.msra.mxu0 0
      %2315 = vmatprep.subr.bf16.mxu0 0
      %2316 = vmatpush1.bf16.msra.mxu0 0
      %2317 = vmatprep.subr.bf16.mxu0 0
      %2318 = vmatpush1.bf16.msra.mxu0 0
      %2319 = vmatprep.subr.bf16.mxu0 0
      %2320 = vmatpush1.bf16.msra.mxu0 0
      %2321 = vmatprep.subr.bf16.mxu0 0
      %2322 = vmatpush1.bf16.msra.mxu0 0
      %2323 = vmatprep.subr.bf16.mxu0 0
      %2324 = vmatpush1.bf16.msra.mxu0 0
      %2325 = vmatprep.subr.bf16.mxu0 0
      %2326 = vmatpush1.bf16.msra.mxu0 0
      %2327 = vmatprep.subr.bf16.mxu0 0
      %2328 = vmatpush1.bf16.msra.mxu0 0
      %2329 = vmatprep.subr.bf16.mxu0 0
      %2330 = vmatpush1.bf16.msra.mxu0 0
      %2331 = vmatprep.subr.bf16.mxu0 0
      %2332 = vmatpush1.bf16.msra.mxu0 0
      %2333 = vmatprep.subr.bf16.mxu0 0
      %2334 = vmatpush1.bf16.msra.mxu0 0
      %2335 = vmatprep.subr.bf16.mxu0 0
      %2336 = vmatpush1.bf16.msra.mxu0 0
      %2337 = vmatprep.subr.bf16.mxu0 0
      %2338 = vmatpush1.bf16.msra.mxu0 0
      %2339 = vmatprep.subr.bf16.mxu0 0
      %2340 = vmatpush1.bf16.msra.mxu0 0
      %2341 = vmatprep.subr.bf16.mxu0 0
      %2342 = vmatpush1.bf16.msra.mxu0 0
      %2343 = vmatprep.mubr.bf16.mxu0 0
      %2344 = vmatmul.mubr.bf16.gmra.mrb[0].mxu0 %v2115
      %v2345 = vpop.f32.mrb[0].mxu0
      %v2346 = vadd.f32 0.0, %v2345
      %v2347 = vpop.f32.mrb[0].mxu0
      %v2348 = vadd.f32 0.0, %v2347
      %v2349 = vpop.f32.mrb[0].mxu0
      %v2350 = vpop.f32.mrb[0].mxu0
      %2351 = vdwg.mxu0
      %v2352 = vadd.f32 %v2069, %v2182
      %v2353 = vadd.f32 %v2070, %v2184
      %v2354 = vadd.f32 %v2071, %v2223
      %v2355 = vadd.f32 %v2072, %v2225
      %v2356 = vadd.f32 %v2073, %v2264
      %v2357 = vadd.f32 %v2074, %v2266
      %v2358 = vadd.f32 %v2075, %v2305
      %v2359 = vadd.f32 %v2076, %v2307
      %v2360 = vadd.f32 %v2077, %v2346
      %v2361 = vadd.f32 %v2078, %v2348
      %s2362 = scalar_lea.vmem %s2, 28
      %v2363 = vld [vmem:[%s2362] sm:$0xf]
      %2364 = vrot.lane.b32.xlu0 %v397, 47
      %v2365 = vpop.permute.xlu0 %2364
      %2366 = vrot.lane.b32.xlu0 %v405, 47
      %v2367 = vpop.permute.xlu0 %2366
      %2368 = vrot.lane.b32.xlu0 %v404, 47
      %v2369 = vpop.permute.xlu0 %2368
      %2370 = vrot.lane.b32.xlu0 %v406, 47
      %v2371 = vpop.permute.xlu0 %2370
      %2372 = vrot.lane.b32.xlu0 %v414, 47
      %v2373 = vpop.permute.xlu0 %2372
      %2374 = vrot.lane.b32.xlu0 %v422, 47
      %v2375 = vpop.permute.xlu0 %2374
      %2376 = vrot.lane.b32.xlu0 %v421, 47
      %v2377 = vpop.permute.xlu0 %2376
      %2378 = vrot.lane.b32.xlu0 %v423, 47
      %v2379 = vpop.permute.xlu0 %2378
      %2380 = vrot.lane.b32.xlu0 %v430, 47
      %v2381 = vpop.permute.xlu0 %2380
      %2382 = vrot.lane.b32.xlu0 %v431, 47
      %v2383 = vpop.permute.xlu0 %2382
      %2384 = vrot.lane.b32.xlu0 %v386, 47
      %v2385 = vpop.permute.xlu0 %2384
      %vm2386 = vcmask 384000
      %v2387 = vsel %vm2386, %v2365, %v2367
      %v2388 = vsel %vm2386, %v2367, %v2369
      %v2389 = vsel %vm2386, %v2369, %v2371
      %v2390 = vsel %vm2386, %v2371, %v2373
      %v2391 = vsel %vm2386, %v2373, %v2375
      %v2392 = vsel %vm2386, %v2375, %v2377
      %v2393 = vsel %vm2386, %v2377, %v2379
      %v2394 = vsel %vm2386, %v2379, %v2381
      %v2395 = vsel %vm2386, %v2381, %v2383
      %v2396 = vsel %vm2386, %v2383, %v2385
      %v2398 = vsel %vm469, %v2363, 0
      %v2401 = vsel %vm473, %v2387, 0
      %v2404 = vsel %vm473, %v2388, 0
      %v2407 = vsel %vm473, %v2389, 0
      %v2410 = vsel %vm473, %v2390, 0
      %v2413 = vsel %vm473, %v2391, 0
      %v2416 = vsel %vm473, %v2392, 0
      %v2419 = vsel %vm473, %v2393, 0
      %v2422 = vsel %vm473, %v2394, 0
      %v2425 = vsel %vm473, %v2395, 0
      %v2428 = vsel %vm473, %v2396, 0
      %2430 = vmatprep.subr.bf16.mxu0 %v2404
      %2431 = vmatpush1.bf16.msra.mxu0 %v2401
      %2432 = vmatprep.subr.bf16.mxu0 0
      %2433 = vmatpush1.bf16.msra.mxu0 0
      %2434 = vmatprep.subr.bf16.mxu0 0
      %2435 = vmatpush1.bf16.msra.mxu0 0
      %2436 = vmatprep.subr.bf16.mxu0 0
      %2437 = vmatpush1.bf16.msra.mxu0 0
      %2438 = vmatprep.subr.bf16.mxu0 0
      %2439 = vmatpush1.bf16.msra.mxu0 0
      %2440 = vmatprep.subr.bf16.mxu0 0
      %2441 = vmatpush1.bf16.msra.mxu0 0
      %2442 = vmatprep.subr.bf16.mxu0 0
      %2443 = vmatpush1.bf16.msra.mxu0 0
      %2444 = vmatprep.subr.bf16.mxu0 0
      %2445 = vmatpush1.bf16.msra.mxu0 0
      %2446 = vmatprep.subr.bf16.mxu0 0
      %2447 = vmatpush1.bf16.msra.mxu0 0
      %2448 = vmatprep.subr.bf16.mxu0 0
      %2449 = vmatpush1.bf16.msra.mxu0 0
      %2450 = vmatprep.subr.bf16.mxu0 0
      %2451 = vmatpush1.bf16.msra.mxu0 0
      %2452 = vmatprep.subr.bf16.mxu0 0
      %2453 = vmatpush1.bf16.msra.mxu0 0
      %2454 = vmatprep.subr.bf16.mxu0 0
      %2455 = vmatpush1.bf16.msra.mxu0 0
      %2456 = vmatprep.subr.bf16.mxu0 0
      %2457 = vmatpush1.bf16.msra.mxu0 0
      %2458 = vmatprep.subr.bf16.mxu0 0
      %2459 = vmatpush1.bf16.msra.mxu0 0
      %2460 = vmatprep.subr.bf16.mxu0 0
      %2461 = vmatpush1.bf16.msra.mxu0 0
      %2462 = vmatprep.mubr.bf16.mxu0 0
      %2463 = vmatmul.mubr.bf16.gmra.mrb[0].mxu0 %v2398
      %v2464 = vpop.f32.mrb[0].mxu0
      %v2465 = vadd.f32 0.0, %v2464
      %v2466 = vpop.f32.mrb[0].mxu0
      %v2467 = vadd.f32 0.0, %v2466
      %v2468 = vpop.f32.mrb[0].mxu0
      %v2469 = vpop.f32.mrb[0].mxu0
      %2470 = vdwg.mxu0
      %2471 = vmatprep.subr.bf16.mxu0 %v2410
      %2472 = vmatpush1.bf16.msra.mxu0 %v2407
      %2473 = vmatprep.subr.bf16.mxu0 0
      %2474 = vmatpush1.bf16.msra.mxu0 0
      %2475 = vmatprep.subr.bf16.mxu0 0
      %2476 = vmatpush1.bf16.msra.mxu0 0
      %2477 = vmatprep.subr.bf16.mxu0 0
      %2478 = vmatpush1.bf16.msra.mxu0 0
      %2479 = vmatprep.subr.bf16.mxu0 0
      %2480 = vmatpush1.bf16.msra.mxu0 0
      %2481 = vmatprep.subr.bf16.mxu0 0
      %2482 = vmatpush1.bf16.msra.mxu0 0
      %2483 = vmatprep.subr.bf16.mxu0 0
      %2484 = vmatpush1.bf16.msra.mxu0 0
      %2485 = vmatprep.subr.bf16.mxu0 0
      %2486 = vmatpush1.bf16.msra.mxu0 0
      %2487 = vmatprep.subr.bf16.mxu0 0
      %2488 = vmatpush1.bf16.msra.mxu0 0
      %2489 = vmatprep.subr.bf16.mxu0 0
      %2490 = vmatpush1.bf16.msra.mxu0 0
      %2491 = vmatprep.subr.bf16.mxu0 0
      %2492 = vmatpush1.bf16.msra.mxu0 0
      %2493 = vmatprep.subr.bf16.mxu0 0
      %2494 = vmatpush1.bf16.msra.mxu0 0
      %2495 = vmatprep.subr.bf16.mxu0 0
      %2496 = vmatpush1.bf16.msra.mxu0 0
      %2497 = vmatprep.subr.bf16.mxu0 0
      %2498 = vmatpush1.bf16.msra.mxu0 0
      %2499 = vmatprep.subr.bf16.mxu0 0
      %2500 = vmatpush1.bf16.msra.mxu0 0
      %2501 = vmatprep.subr.bf16.mxu0 0
      %2502 = vmatpush1.bf16.msra.mxu0 0
      %2503 = vmatprep.mubr.bf16.mxu0 0
      %2504 = vmatmul.mubr.bf16.gmra.mrb[0].mxu0 %v2398
      %v2505 = vpop.f32.mrb[0].mxu0
      %v2506 = vadd.f32 0.0, %v2505
      %v2507 = vpop.f32.mrb[0].mxu0
      %v2508 = vadd.f32 0.0, %v2507
      %v2509 = vpop.f32.mrb[0].mxu0
      %v2510 = vpop.f32.mrb[0].mxu0
      %2511 = vdwg.mxu0
      %2512 = vmatprep.subr.bf16.mxu0 %v2416
      %2513 = vmatpush1.bf16.msra.mxu0 %v2413
      %2514 = vmatprep.subr.bf16.mxu0 0
      %2515 = vmatpush1.bf16.msra.mxu0 0
      %2516 = vmatprep.subr.bf16.mxu0 0
      %2517 = vmatpush1.bf16.msra.mxu0 0
      %2518 = vmatprep.subr.bf16.mxu0 0
      %2519 = vmatpush1.bf16.msra.mxu0 0
      %2520 = vmatprep.subr.bf16.mxu0 0
      %2521 = vmatpush1.bf16.msra.mxu0 0
      %2522 = vmatprep.subr.bf16.mxu0 0
      %2523 = vmatpush1.bf16.msra.mxu0 0
      %2524 = vmatprep.subr.bf16.mxu0 0
      %2525 = vmatpush1.bf16.msra.mxu0 0
      %2526 = vmatprep.subr.bf16.mxu0 0
      %2527 = vmatpush1.bf16.msra.mxu0 0
      %2528 = vmatprep.subr.bf16.mxu0 0
      %2529 = vmatpush1.bf16.msra.mxu0 0
      %2530 = vmatprep.subr.bf16.mxu0 0
      %2531 = vmatpush1.bf16.msra.mxu0 0
      %2532 = vmatprep.subr.bf16.mxu0 0
      %2533 = vmatpush1.bf16.msra.mxu0 0
      %2534 = vmatprep.subr.bf16.mxu0 0
      %2535 = vmatpush1.bf16.msra.mxu0 0
      %2536 = vmatprep.subr.bf16.mxu0 0
      %2537 = vmatpush1.bf16.msra.mxu0 0
      %2538 = vmatprep.subr.bf16.mxu0 0
      %2539 = vmatpush1.bf16.msra.mxu0 0
      %2540 = vmatprep.subr.bf16.mxu0 0
      %2541 = vmatpush1.bf16.msra.mxu0 0
      %2542 = vmatprep.subr.bf16.mxu0 0
      %2543 = vmatpush1.bf16.msra.mxu0 0
      %2544 = vmatprep.mubr.bf16.mxu0 0
      %2545 = vmatmul.mubr.bf16.gmra.mrb[0].mxu0 %v2398
      %v2546 = vpop.f32.mrb[0].mxu0
      %v2547 = vadd.f32 0.0, %v2546
      %v2548 = vpop.f32.mrb[0].mxu0
      %v2549 = vadd.f32 0.0, %v2548
      %v2550 = vpop.f32.mrb[0].mxu0
      %v2551 = vpop.f32.mrb[0].mxu0
      %2552 = vdwg.mxu0
      %2553 = vmatprep.subr.bf16.mxu0 %v2422
      %2554 = vmatpush1.bf16.msra.mxu0 %v2419
      %2555 = vmatprep.subr.bf16.mxu0 0
      %2556 = vmatpush1.bf16.msra.mxu0 0
      %2557 = vmatprep.subr.bf16.mxu0 0
      %2558 = vmatpush1.bf16.msra.mxu0 0
      %2559 = vmatprep.subr.bf16.mxu0 0
      %2560 = vmatpush1.bf16.msra.mxu0 0
      %2561 = vmatprep.subr.bf16.mxu0 0
      %2562 = vmatpush1.bf16.msra.mxu0 0
      %2563 = vmatprep.subr.bf16.mxu0 0
      %2564 = vmatpush1.bf16.msra.mxu0 0
      %2565 = vmatprep.subr.bf16.mxu0 0
      %2566 = vmatpush1.bf16.msra.mxu0 0
      %2567 = vmatprep.subr.bf16.mxu0 0
      %2568 = vmatpush1.bf16.msra.mxu0 0
      %2569 = vmatprep.subr.bf16.mxu0 0
      %2570 = vmatpush1.bf16.msra.mxu0 0
      %2571 = vmatprep.subr.bf16.mxu0 0
      %2572 = vmatpush1.bf16.msra.mxu0 0
      %2573 = vmatprep.subr.bf16.mxu0 0
      %2574 = vmatpush1.bf16.msra.mxu0 0
      %2575 = vmatprep.subr.bf16.mxu0 0
      %2576 = vmatpush1.bf16.msra.mxu0 0
      %2577 = vmatprep.subr.bf16.mxu0 0
      %2578 = vmatpush1.bf16.msra.mxu0 0
      %2579 = vmatprep.subr.bf16.mxu0 0
      %2580 = vmatpush1.bf16.msra.mxu0 0
      %2581 = vmatprep.subr.bf16.mxu0 0
      %2582 = vmatpush1.bf16.msra.mxu0 0
      %2583 = vmatprep.subr.bf16.mxu0 0
      %2584 = vmatpush1.bf16.msra.mxu0 0
      %2585 = vmatprep.mubr.bf16.mxu0 0
      %2586 = vmatmul.mubr.bf16.gmra.mrb[0].mxu0 %v2398
      %v2587 = vpop.f32.mrb[0].mxu0
      %v2588 = vadd.f32 0.0, %v2587
      %v2589 = vpop.f32.mrb[0].mxu0
      %v2590 = vadd.f32 0.0, %v2589
      %v2591 = vpop.f32.mrb[0].mxu0
      %v2592 = vpop.f32.mrb[0].mxu0
      %2593 = vdwg.mxu0
      %2594 = vmatprep.subr.bf16.mxu0 %v2428
      %2595 = vmatpush1.bf16.msra.mxu0 %v2425
      %2596 = vmatprep.subr.bf16.mxu0 0
      %2597 = vmatpush1.bf16.msra.mxu0 0
      %2598 = vmatprep.subr.bf16.mxu0 0
      %2599 = vmatpush1.bf16.msra.mxu0 0
      %2600 = vmatprep.subr.bf16.mxu0 0
      %2601 = vmatpush1.bf16.msra.mxu0 0
      %2602 = vmatprep.subr.bf16.mxu0 0
      %2603 = vmatpush1.bf16.msra.mxu0 0
      %2604 = vmatprep.subr.bf16.mxu0 0
      %2605 = vmatpush1.bf16.msra.mxu0 0
      %2606 = vmatprep.subr.bf16.mxu0 0
      %2607 = vmatpush1.bf16.msra.mxu0 0
      %2608 = vmatprep.subr.bf16.mxu0 0
      %2609 = vmatpush1.bf16.msra.mxu0 0
      %2610 = vmatprep.subr.bf16.mxu0 0
      %2611 = vmatpush1.bf16.msra.mxu0 0
      %2612 = vmatprep.subr.bf16.mxu0 0
      %2613 = vmatpush1.bf16.msra.mxu0 0
      %2614 = vmatprep.subr.bf16.mxu0 0
      %2615 = vmatpush1.bf16.msra.mxu0 0
      %2616 = vmatprep.subr.bf16.mxu0 0
      %2617 = vmatpush1.bf16.msra.mxu0 0
      %2618 = vmatprep.subr.bf16.mxu0 0
      %2619 = vmatpush1.bf16.msra.mxu0 0
      %2620 = vmatprep.subr.bf16.mxu0 0
      %2621 = vmatpush1.bf16.msra.mxu0 0
      %2622 = vmatprep.subr.bf16.mxu0 0
      %2623 = vmatpush1.bf16.msra.mxu0 0
      %2624 = vmatprep.subr.bf16.mxu0 0
      %2625 = vmatpush1.bf16.msra.mxu0 0
      %2626 = vmatprep.mubr.bf16.mxu0 0
      %2627 = vmatmul.mubr.bf16.gmra.mrb[0].mxu0 %v2398
      %v2628 = vpop.f32.mrb[0].mxu0
      %v2629 = vadd.f32 0.0, %v2628
      %v2630 = vpop.f32.mrb[0].mxu0
      %v2631 = vadd.f32 0.0, %v2630
      %v2632 = vpop.f32.mrb[0].mxu0
      %v2633 = vpop.f32.mrb[0].mxu0
      %2634 = vdwg.mxu0
      %v2635 = vadd.f32 %v2352, %v2465
      %v2636 = vadd.f32 %v2353, %v2467
      %v2637 = vadd.f32 %v2354, %v2506
      %v2638 = vadd.f32 %v2355, %v2508
      %v2639 = vadd.f32 %v2356, %v2547
      %v2640 = vadd.f32 %v2357, %v2549
      %v2641 = vadd.f32 %v2358, %v2588
      %v2642 = vadd.f32 %v2359, %v2590
      %v2643 = vadd.f32 %v2360, %v2629
      %v2644 = vadd.f32 %v2361, %v2631
      %s2645 = scalar_lea.vmem %s2, 32
      %v2646 = vld [vmem:[%s2645] sm:$0xf]
      %2647 = vrot.lane.b32.xlu0 %v397, 46
      %v2648 = vpop.permute.xlu0 %2647
      %2649 = vrot.lane.b32.xlu0 %v405, 46
      %v2650 = vpop.permute.xlu0 %2649
      %2651 = vrot.lane.b32.xlu0 %v404, 46
      %v2652 = vpop.permute.xlu0 %2651
      %2653 = vrot.lane.b32.xlu0 %v406, 46
      %v2654 = vpop.permute.xlu0 %2653
      %2655 = vrot.lane.b32.xlu0 %v414, 46
      %v2656 = vpop.permute.xlu0 %2655
      %2657 = vrot.lane.b32.xlu0 %v422, 46
      %v2658 = vpop.permute.xlu0 %2657
      %2659 = vrot.lane.b32.xlu0 %v421, 46
      %v2660 = vpop.permute.xlu0 %2659
      %2661 = vrot.lane.b32.xlu0 %v423, 46
      %v2662 = vpop.permute.xlu0 %2661
      %2663 = vrot.lane.b32.xlu0 %v430, 46
      %v2664 = vpop.permute.xlu0 %2663
      %2665 = vrot.lane.b32.xlu0 %v431, 46
      %v2666 = vpop.permute.xlu0 %2665
      %2667 = vrot.lane.b32.xlu0 %v386, 46
      %v2668 = vpop.permute.xlu0 %2667
      %vm2669 = vcmask 375808
      %v2670 = vsel %vm2669, %v2648, %v2650
      %v2671 = vsel %vm2669, %v2650, %v2652
      %v2672 = vsel %vm2669, %v2652, %v2654
      %v2673 = vsel %vm2669, %v2654, %v2656
      %v2674 = vsel %vm2669, %v2656, %v2658
      %v2675 = vsel %vm2669, %v2658, %v2660
      %v2676 = vsel %vm2669, %v2660, %v2662
      %v2677 = vsel %vm2669, %v2662, %v2664
      %v2678 = vsel %vm2669, %v2664, %v2666
      %v2679 = vsel %vm2669, %v2666, %v2668
      %v2681 = vsel %vm469, %v2646, 0
      %v2684 = vsel %vm473, %v2670, 0
      %v2687 = vsel %vm473, %v2671, 0
      %v2690 = vsel %vm473, %v2672, 0
      %v2693 = vsel %vm473, %v2673, 0
      %v2696 = vsel %vm473, %v2674, 0
      %v2699 = vsel %vm473, %v2675, 0
      %v2702 = vsel %vm473, %v2676, 0
      %v2705 = vsel %vm473, %v2677, 0
      %v2708 = vsel %vm473, %v2678, 0
      %v2711 = vsel %vm473, %v2679, 0
      %2713 = vmatprep.subr.bf16.mxu0 %v2687
      %2714 = vmatpush1.bf16.msra.mxu0 %v2684
      %2715 = vmatprep.subr.bf16.mxu0 0
      %2716 = vmatpush1.bf16.msra.mxu0 0
      %2717 = vmatprep.subr.bf16.mxu0 0
      %2718 = vmatpush1.bf16.msra.mxu0 0
      %2719 = vmatprep.subr.bf16.mxu0 0
      %2720 = vmatpush1.bf16.msra.mxu0 0
      %2721 = vmatprep.subr.bf16.mxu0 0
      %2722 = vmatpush1.bf16.msra.mxu0 0
      %2723 = vmatprep.subr.bf16.mxu0 0
      %2724 = vmatpush1.bf16.msra.mxu0 0
      %2725 = vmatprep.subr.bf16.mxu0 0
      %2726 = vmatpush1.bf16.msra.mxu0 0
      %2727 = vmatprep.subr.bf16.mxu0 0
      %2728 = vmatpush1.bf16.msra.mxu0 0
      %2729 = vmatprep.subr.bf16.mxu0 0
      %2730 = vmatpush1.bf16.msra.mxu0 0
      %2731 = vmatprep.subr.bf16.mxu0 0
      %2732 = vmatpush1.bf16.msra.mxu0 0
      %2733 = vmatprep.subr.bf16.mxu0 0
      %2734 = vmatpush1.bf16.msra.mxu0 0
      %2735 = vmatprep.subr.bf16.mxu0 0
      %2736 = vmatpush1.bf16.msra.mxu0 0
      %2737 = vmatprep.subr.bf16.mxu0 0
      %2738 = vmatpush1.bf16.msra.mxu0 0
      %2739 = vmatprep.subr.bf16.mxu0 0
      %2740 = vmatpush1.bf16.msra.mxu0 0
      %2741 = vmatprep.subr.bf16.mxu0 0
      %2742 = vmatpush1.bf16.msra.mxu0 0
      %2743 = vmatprep.subr.bf16.mxu0 0
      %2744 = vmatpush1.bf16.msra.mxu0 0
      %2745 = vmatprep.mubr.bf16.mxu0 0
      %2746 = vmatmul.mubr.bf16.gmra.mrb[0].mxu0 %v2681
      %v2747 = vpop.f32.mrb[0].mxu0
      %v2748 = vadd.f32 0.0, %v2747
      %v2749 = vpop.f32.mrb[0].mxu0
      %v2750 = vadd.f32 0.0, %v2749
      %v2751 = vpop.f32.mrb[0].mxu0
      %v2752 = vpop.f32.mrb[0].mxu0
      %2753 = vdwg.mxu0
      %2754 = vmatprep.subr.bf16.mxu0 %v2693
      %2755 = vmatpush1.bf16.msra.mxu0 %v2690
      %2756 = vmatprep.subr.bf16.mxu0 0
      %2757 = vmatpush1.bf16.msra.mxu0 0
      %2758 = vmatprep.subr.bf16.mxu0 0
      %2759 = vmatpush1.bf16.msra.mxu0 0
      %2760 = vmatprep.subr.bf16.mxu0 0
      %2761 = vmatpush1.bf16.msra.mxu0 0
      %2762 = vmatprep.subr.bf16.mxu0 0
      %2763 = vmatpush1.bf16.msra.mxu0 0
      %2764 = vmatprep.subr.bf16.mxu0 0
      %2765 = vmatpush1.bf16.msra.mxu0 0
      %2766 = vmatprep.subr.bf16.mxu0 0
      %2767 = vmatpush1.bf16.msra.mxu0 0
      %2768 = vmatprep.subr.bf16.mxu0 0
      %2769 = vmatpush1.bf16.msra.mxu0 0
      %2770 = vmatprep.subr.bf16.mxu0 0
      %2771 = vmatpush1.bf16.msra.mxu0 0
      %2772 = vmatprep.subr.bf16.mxu0 0
      %2773 = vmatpush1.bf16.msra.mxu0 0
      %2774 = vmatprep.subr.bf16.mxu0 0
      %2775 = vmatpush1.bf16.msra.mxu0 0
      %2776 = vmatprep.subr.bf16.mxu0 0
      %2777 = vmatpush1.bf16.msra.mxu0 0
      %2778 = vmatprep.subr.bf16.mxu0 0
      %2779 = vmatpush1.bf16.msra.mxu0 0
      %2780 = vmatprep.subr.bf16.mxu0 0
      %2781 = vmatpush1.bf16.msra.mxu0 0
      %2782 = vmatprep.subr.bf16.mxu0 0
      %2783 = vmatpush1.bf16.msra.mxu0 0
      %2784 = vmatprep.subr.bf16.mxu0 0
      %2785 = vmatpush1.bf16.msra.mxu0 0
      %2786 = vmatprep.mubr.bf16.mxu0 0
      %2787 = vmatmul.mubr.bf16.gmra.mrb[0].mxu0 %v2681
      %v2788 = vpop.f32.mrb[0].mxu0
      %v2789 = vadd.f32 0.0, %v2788
      %v2790 = vpop.f32.mrb[0].mxu0
      %v2791 = vadd.f32 0.0, %v2790
      %v2792 = vpop.f32.mrb[0].mxu0
      %v2793 = vpop.f32.mrb[0].mxu0
      %2794 = vdwg.mxu0
      %2795 = vmatprep.subr.bf16.mxu0 %v2699
      %2796 = vmatpush1.bf16.msra.mxu0 %v2696
      %2797 = vmatprep.subr.bf16.mxu0 0
      %2798 = vmatpush1.bf16.msra.mxu0 0
      %2799 = vmatprep.subr.bf16.mxu0 0
      %2800 = vmatpush1.bf16.msra.mxu0 0
      %2801 = vmatprep.subr.bf16.mxu0 0
      %2802 = vmatpush1.bf16.msra.mxu0 0
      %2803 = vmatprep.subr.bf16.mxu0 0
      %2804 = vmatpush1.bf16.msra.mxu0 0
      %2805 = vmatprep.subr.bf16.mxu0 0
      %2806 = vmatpush1.bf16.msra.mxu0 0
      %2807 = vmatprep.subr.bf16.mxu0 0
      %2808 = vmatpush1.bf16.msra.mxu0 0
      %2809 = vmatprep.subr.bf16.mxu0 0
      %2810 = vmatpush1.bf16.msra.mxu0 0
      %2811 = vmatprep.subr.bf16.mxu0 0
      %2812 = vmatpush1.bf16.msra.mxu0 0
      %2813 = vmatprep.subr.bf16.mxu0 0
      %2814 = vmatpush1.bf16.msra.mxu0 0
      %2815 = vmatprep.subr.bf16.mxu0 0
      %2816 = vmatpush1.bf16.msra.mxu0 0
      %2817 = vmatprep.subr.bf16.mxu0 0
      %2818 = vmatpush1.bf16.msra.mxu0 0
      %2819 = vmatprep.subr.bf16.mxu0 0
      %2820 = vmatpush1.bf16.msra.mxu0 0
      %2821 = vmatprep.subr.bf16.mxu0 0
      %2822 = vmatpush1.bf16.msra.mxu0 0
      %2823 = vmatprep.subr.bf16.mxu0 0
      %2824 = vmatpush1.bf16.msra.mxu0 0
      %2825 = vmatprep.subr.bf16.mxu0 0
      %2826 = vmatpush1.bf16.msra.mxu0 0
      %2827 = vmatprep.mubr.bf16.mxu0 0
      %2828 = vmatmul.mubr.bf16.gmra.mrb[0].mxu0 %v2681
      %v2829 = vpop.f32.mrb[0].mxu0
      %v2830 = vadd.f32 0.0, %v2829
      %v2831 = vpop.f32.mrb[0].mxu0
      %v2832 = vadd.f32 0.0, %v2831
      %v2833 = vpop.f32.mrb[0].mxu0
      %v2834 = vpop.f32.mrb[0].mxu0
      %2835 = vdwg.mxu0
      %2836 = vmatprep.subr.bf16.mxu0 %v2705
      %2837 = vmatpush1.bf16.msra.mxu0 %v2702
      %2838 = vmatprep.subr.bf16.mxu0 0
      %2839 = vmatpush1.bf16.msra.mxu0 0
      %2840 = vmatprep.subr.bf16.mxu0 0
      %2841 = vmatpush1.bf16.msra.mxu0 0
      %2842 = vmatprep.subr.bf16.mxu0 0
      %2843 = vmatpush1.bf16.msra.mxu0 0
      %2844 = vmatprep.subr.bf16.mxu0 0
      %2845 = vmatpush1.bf16.msra.mxu0 0
      %2846 = vmatprep.subr.bf16.mxu0 0
      %2847 = vmatpush1.bf16.msra.mxu0 0
      %2848 = vmatprep.subr.bf16.mxu0 0
      %2849 = vmatpush1.bf16.msra.mxu0 0
      %2850 = vmatprep.subr.bf16.mxu0 0
      %2851 = vmatpush1.bf16.msra.mxu0 0
      %2852 = vmatprep.subr.bf16.mxu0 0
      %2853 = vmatpush1.bf16.msra.mxu0 0
      %2854 = vmatprep.subr.bf16.mxu0 0
      %2855 = vmatpush1.bf16.msra.mxu0 0
      %2856 = vmatprep.subr.bf16.mxu0 0
      %2857 = vmatpush1.bf16.msra.mxu0 0
      %2858 = vmatprep.subr.bf16.mxu0 0
      %2859 = vmatpush1.bf16.msra.mxu0 0
      %2860 = vmatprep.subr.bf16.mxu0 0
      %2861 = vmatpush1.bf16.msra.mxu0 0
      %2862 = vmatprep.subr.bf16.mxu0 0
      %2863 = vmatpush1.bf16.msra.mxu0 0
      %2864 = vmatprep.subr.bf16.mxu0 0
      %2865 = vmatpush1.bf16.msra.mxu0 0
      %2866 = vmatprep.subr.bf16.mxu0 0
      %2867 = vmatpush1.bf16.msra.mxu0 0
      %2868 = vmatprep.mubr.bf16.mxu0 0
      %2869 = vmatmul.mubr.bf16.gmra.mrb[0].mxu0 %v2681
      %v2870 = vpop.f32.mrb[0].mxu0
      %v2871 = vadd.f32 0.0, %v2870
      %v2872 = vpop.f32.mrb[0].mxu0
      %v2873 = vadd.f32 0.0, %v2872
      %v2874 = vpop.f32.mrb[0].mxu0
      %v2875 = vpop.f32.mrb[0].mxu0
      %2876 = vdwg.mxu0
      %2877 = vmatprep.subr.bf16.mxu0 %v2711
      %2878 = vmatpush1.bf16.msra.mxu0 %v2708
      %2879 = vmatprep.subr.bf16.mxu0 0
      %2880 = vmatpush1.bf16.msra.mxu0 0
      %2881 = vmatprep.subr.bf16.mxu0 0
      %2882 = vmatpush1.bf16.msra.mxu0 0
      %2883 = vmatprep.subr.bf16.mxu0 0
      %2884 = vmatpush1.bf16.msra.mxu0 0
      %2885 = vmatprep.subr.bf16.mxu0 0
      %2886 = vmatpush1.bf16.msra.mxu0 0
      %2887 = vmatprep.subr.bf16.mxu0 0
      %2888 = vmatpush1.bf16.msra.mxu0 0
      %2889 = vmatprep.subr.bf16.mxu0 0
      %2890 = vmatpush1.bf16.msra.mxu0 0
      %2891 = vmatprep.subr.bf16.mxu0 0
      %2892 = vmatpush1.bf16.msra.mxu0 0
      %2893 = vmatprep.subr.bf16.mxu0 0
      %2894 = vmatpush1.bf16.msra.mxu0 0
      %2895 = vmatprep.subr.bf16.mxu0 0
      %2896 = vmatpush1.bf16.msra.mxu0 0
      %2897 = vmatprep.subr.bf16.mxu0 0
      %2898 = vmatpush1.bf16.msra.mxu0 0
      %2899 = vmatprep.subr.bf16.mxu0 0
      %2900 = vmatpush1.bf16.msra.mxu0 0
      %2901 = vmatprep.subr.bf16.mxu0 0
      %2902 = vmatpush1.bf16.msra.mxu0 0
      %2903 = vmatprep.subr.bf16.mxu0 0
      %2904 = vmatpush1.bf16.msra.mxu0 0
      %2905 = vmatprep.subr.bf16.mxu0 0
      %2906 = vmatpush1.bf16.msra.mxu0 0
      %2907 = vmatprep.subr.bf16.mxu0 0
      %2908 = vmatpush1.bf16.msra.mxu0 0
      %2909 = vmatprep.mubr.bf16.mxu0 0
      %2910 = vmatmul.mubr.bf16.gmra.mrb[0].mxu0 %v2681
      %v2911 = vpop.f32.mrb[0].mxu0
      %v2912 = vadd.f32 0.0, %v2911
      %v2913 = vpop.f32.mrb[0].mxu0
      %v2914 = vadd.f32 0.0, %v2913
      %v2915 = vpop.f32.mrb[0].mxu0
      %v2916 = vpop.f32.mrb[0].mxu0
      %2917 = vdwg.mxu0
      %v2918 = vadd.f32 %v2635, %v2748
      %v2919 = vadd.f32 %v2636, %v2750
      %v2920 = vadd.f32 %v2637, %v2789
      %v2921 = vadd.f32 %v2638, %v2791
      %v2922 = vadd.f32 %v2639, %v2830
      %v2923 = vadd.f32 %v2640, %v2832
      %v2924 = vadd.f32 %v2641, %v2871
      %v2925 = vadd.f32 %v2642, %v2873
      %v2926 = vadd.f32 %v2643, %v2912
      %v2927 = vadd.f32 %v2644, %v2914
      %v2928 = vld [vmem:[%s3] sm:$0xff]
      %2930 = vset.pattern.permute.xlu0 0
      %2931 = vperm.xlu0 %2930, %v2928
      %v2932 = vpop.permute.xlu0 %2931
      %v2934 = vadd.f32 %v2918, %v2932
      %v2935 = vadd.f32 %v2919, %v2932
      %v2936 = vadd.f32 %v2920, %v2932
      %v2937 = vadd.f32 %v2921, %v2932
      %v2938 = vadd.f32 %v2922, %v2932
      %v2939 = vadd.f32 %v2923, %v2932
      %v2940 = vadd.f32 %v2924, %v2932
      %v2941 = vadd.f32 %v2925, %v2932
      %v2942 = vadd.f32 %v2926, %v2932
      %v2943 = vadd.f32 %v2927, %v2932
      %2944 = vst [vmem:[%s372] sm:$0xff] %v2934
      %2945 = vst [vmem:[%s372 + $0x8] sm:$0xff] %v2935
      %2946 = vst [vmem:[%s372 + $0x10] sm:$0xff] %v2936
      %2947 = vst [vmem:[%s372 + $0x18] sm:$0xff] %v2937
      %2948 = vst [vmem:[%s372 + $0x20] sm:$0xff] %v2938
      %2949 = vst [vmem:[%s372 + $0x28] sm:$0xff] %v2939
      %2950 = vst [vmem:[%s372 + $0x30] sm:$0xff] %v2940
      %2951 = vst [vmem:[%s372 + $0x38] sm:$0xff] %v2941
      %2952 = vst [vmem:[%s372 + $0x40] sm:$0xff] %v2942
      %2953 = vst [vmem:[%s372 + $0x48] sm:$0xff] %v2943
      %s2954 = smul.u32 %s24, 32
      %s2955 = ssub.s32 32, %s2954
      %p2956 = scmp.lt.s32.totalorder %s2955, 32
      %s2957 = scalar_select %p2956, %s2955, 32
      %v2958 = vlaneseq
      %v2959 = vand.u32 %v2958, 127
      %v2960 = vadd.s32 %v2959, 128
      %v2961 = vadd.s32 %v2959, 256
      %v2962 = vadd.s32 %v2959, 384
      %v2963 = vadd.s32 %v2959, 512
      %v2964 = vadd.s32 %v2959, 640
      %v2965 = vadd.s32 %v2959, 768
      %v2966 = vadd.s32 %v2959, 896
      %v2967 = vadd.s32 %v2959, 1024
      %v2968 = vadd.s32 %v2959, 1152
      %s2969 = smul.u32 %s2957, 40
      %v2970 = vstv %s2969
      %vm2971 = vcmp.lt.s32.totalorder %v2959, %v2970
      %vm2972 = vcmp.lt.s32.totalorder %v2960, %v2970
      %vm2973 = vcmp.lt.s32.totalorder %v2961, %v2970
      %vm2974 = vcmp.lt.s32.totalorder %v2962, %v2970
      %vm2975 = vcmp.lt.s32.totalorder %v2963, %v2970
      %vm2976 = vcmp.lt.s32.totalorder %v2964, %v2970
      %vm2977 = vcmp.lt.s32.totalorder %v2965, %v2970
      %vm2978 = vcmp.lt.s32.totalorder %v2966, %v2970
      %vm2979 = vcmp.lt.s32.totalorder %v2967, %v2970
      %vm2980 = vcmp.lt.s32.totalorder %v2968, %v2970
      %v2981 = vld [vmem:[%s4] sm:$0xff]
      %v2982 = vld [vmem:[%s4 + $0x8] sm:$0x3]
      %v2985 = vlaneseq
      %v2986 = vshrl.u32 %v2985, 7
      %v2987 = vsub.s32 0, %v2986
      %v2988 = vrot.slane %v2981, %v2987
      %v2989 = vlaneseq
      %v2990 = vshrl.u32 %v2989, 7
      %v2991 = vsub.s32 1, %v2990
      %v2992 = vrot.slane %v2981, %v2991
      %v2993 = vlaneseq
      %v2994 = vshrl.u32 %v2993, 7
      %v2995 = vsub.s32 2, %v2994
      %v2996 = vrot.slane %v2981, %v2995
      %v2997 = vlaneseq
      %v2998 = vshrl.u32 %v2997, 7
      %v2999 = vsub.s32 3, %v2998
      %v3000 = vrot.slane %v2981, %v2999
      %v3001 = vlaneseq
      %v3002 = vshrl.u32 %v3001, 7
      %v3003 = vsub.s32 4, %v3002
      %v3004 = vrot.slane %v2981, %v3003
      %v3005 = vlaneseq
      %v3006 = vshrl.u32 %v3005, 7
      %v3007 = vsub.s32 5, %v3006
      %v3008 = vrot.slane %v2981, %v3007
      %v3009 = vlaneseq
      %v3010 = vshrl.u32 %v3009, 7
      %v3011 = vsub.s32 6, %v3010
      %v3012 = vrot.slane %v2981, %v3011
      %v3013 = vlaneseq
      %v3014 = vshrl.u32 %v3013, 7
      %v3015 = vsub.s32 7, %v3014
      %v3016 = vrot.slane %v2981, %v3015
      %v3017 = vlaneseq
      %v3018 = vshrl.u32 %v3017, 7
      %v3019 = vsub.s32 0, %v3018
      %v3020 = vrot.slane %v2982, %v3019
      %v3021 = vlaneseq
      %v3022 = vshrl.u32 %v3021, 7
      %v3023 = vsub.s32 1, %v3022
      %v3024 = vrot.slane %v2982, %v3023
      %v3035 = vsel %vm2971, %v2988, 0.0
      %v3036 = vsel %vm2972, %v2992, 0.0
      %v3037 = vsel %vm2973, %v2996, 0.0
      %v3038 = vsel %vm2974, %v3000, 0.0
      %v3039 = vsel %vm2975, %v3004, 0.0
      %v3040 = vsel %vm2976, %v3008, 0.0
      %v3041 = vsel %vm2977, %v3012, 0.0
      %v3042 = vsel %vm2978, %v3016, 0.0
      %v3043 = vsel %vm2979, %v3020, 0.0
      %v3044 = vsel %vm2980, %v3024, 0.0
      %v3045 = vlaneseq
      %v3046 = vshrl.u32 %v3045, 7
      %v3047 = vsub.s32 0, %v3046
      %v3048 = vrot.slane %v3035, %v3047
      %v3049 = vlaneseq
      %v3050 = vshrl.u32 %v3049, 7
      %v3051 = vsub.s32 0, %v3050
      %v3052 = vrot.slane %v3036, %v3051
      %v3053 = vlaneseq
      %v3054 = vshrl.u32 %v3053, 7
      %v3055 = vsub.s32 0, %v3054
      %v3056 = vrot.slane %v3037, %v3055
      %v3057 = vlaneseq
      %v3058 = vshrl.u32 %v3057, 7
      %v3059 = vsub.s32 0, %v3058
      %v3060 = vrot.slane %v3038, %v3059
      %v3061 = vlaneseq
      %v3062 = vshrl.u32 %v3061, 7
      %v3063 = vsub.s32 0, %v3062
      %v3064 = vrot.slane %v3039, %v3063
      %v3065 = vlaneseq
      %v3066 = vshrl.u32 %v3065, 7
      %v3067 = vsub.s32 0, %v3066
      %v3068 = vrot.slane %v3040, %v3067
      %v3069 = vlaneseq
      %v3070 = vshrl.u32 %v3069, 7
      %v3071 = vsub.s32 0, %v3070
      %v3072 = vrot.slane %v3041, %v3071
      %v3073 = vlaneseq
      %v3074 = vshrl.u32 %v3073, 7
      %v3075 = vsub.s32 0, %v3074
      %v3076 = vrot.slane %v3042, %v3075
      %v3077 = vlaneseq
      %v3078 = vshrl.u32 %v3077, 7
      %v3079 = vsub.s32 0, %v3078
      %v3080 = vrot.slane %v3043, %v3079
      %v3081 = vlaneseq
      %v3082 = vshrl.u32 %v3081, 7
      %v3083 = vsub.s32 0, %v3082
      %v3084 = vrot.slane %v3044, %v3083
      %v3085 = vmul.f32 %v2934, %v3048
      %v3086 = vmul.f32 %v2935, %v3052
      %v3087 = vmul.f32 %v2936, %v3056
      %v3088 = vmul.f32 %v2937, %v3060
      %v3089 = vmul.f32 %v2938, %v3064
      %v3090 = vmul.f32 %v2939, %v3068
      %v3091 = vmul.f32 %v2940, %v3072
      %v3092 = vmul.f32 %v2941, %v3076
      %v3093 = vmul.f32 %v2942, %v3080
      %v3094 = vmul.f32 %v2943, %v3084
      %p3095 = scmp.eq.s32.totalorder %s24, 0
      // Predicated region
      $region41: #{conv_norm_act.3} parent=39 // pred_check
        %p3096 = pneg %p3095
      $region42: #{conv_norm_act.3} parent=39 // pred_check_branch
        %3098 = sbr.rel (%p3096) target = $region44
      $region43: #{conv_norm_act.3} parent=39 // pred_region
        %vm3099 = vcmask 7168
        %3100 = vst.msk [vmem:[%s377] sm:$0xff] %vm3099, 0.0
        %3101 = vst.msk [vmem:[%s381] sm:$0xff] %vm3099, 0.0
      $region44: #{conv_norm_act.3} parent=39 // pred_fallthru
        _
      %v3102 = vld [vmem:[%s377] sm:$0xff]
      %v3103 = vadd.f32 %v3085, %v3086
      %v3104 = vadd.f32 %v3103, %v3087
      %v3105 = vadd.f32 %v3104, %v3088
      %v3106 = vadd.f32 %v3105, %v3089
      %v3107 = vadd.f32 %v3106, %v3090
      %v3108 = vadd.f32 %v3107, %v3091
      %v3109 = vadd.f32 %v3108, %v3092
      %v3110 = vadd.f32 %v3109, %v3093
      %v3111 = vadd.f32 %v3110, %v3094
      %3112 = vadd.xlane.f32.xlu0 %v3111
      %v3113 = vpop.xlane.xlu0 %3112
      %v3114 = vadd.f32 %v3102, %v3113
      %vm3115 = vcmask 7168
      %3116 = vst.msk [vmem:[%s377] sm:$0xff] %vm3115, %v3114
      %v3117 = vld [vmem:[%s381] sm:$0xff]
      %v3118 = vmul.f32 %v3085, %v2934
      %v3119 = vmul.f32 %v3086, %v2935
      %v3120 = vmul.f32 %v3087, %v2936
      %v3121 = vmul.f32 %v3088, %v2937
      %v3122 = vmul.f32 %v3089, %v2938
      %v3123 = vmul.f32 %v3090, %v2939
      %v3124 = vmul.f32 %v3091, %v2940
      %v3125 = vmul.f32 %v3092, %v2941
      %v3126 = vmul.f32 %v3093, %v2942
      %v3127 = vmul.f32 %v3094, %v2943
      %v3128 = vadd.f32 %v3118, %v3119
      %v3129 = vadd.f32 %v3128, %v3120
      %v3130 = vadd.f32 %v3129, %v3121
      %v3131 = vadd.f32 %v3130, %v3122
      %v3132 = vadd.f32 %v3131, %v3123
      %v3133 = vadd.f32 %v3132, %v3124
      %v3134 = vadd.f32 %v3133, %v3125
      %v3135 = vadd.f32 %v3134, %v3126
      %v3136 = vadd.f32 %v3135, %v3127
      %3137 = vadd.xlane.f32.xlu0 %v3136
      %v3138 = vpop.xlane.xlu0 %3137
      %v3139 = vadd.f32 %v3117, %v3138
      %3140 = vst.msk [vmem:[%s381] sm:$0xff] %vm3115, %v3139
      %s3141 = smul.u32 10, %s24
      %p3142 = scmp.lt.s32.totalorder %s23, 1
      %s3143 = scalar_select %p3142, %s23, 1
      %p3144 = scmp.lt.s32.totalorder %s3141, 9
      %s3145 = scalar_select %p3144, %s3141, 9
      %s3146 = smul.addr %s3143, 10
      %s3147 = sadd.s32 %s3145, %s3146
      %s3148 = smul.addr %s3147, 8
      %s3149 = scalar_lea.vmem %s5, %s3148
      %p3150 = scmp.lt.s32.totalorder %s23, 1
      %s3151 = scalar_select %p3150, %s23, 1
      %s3152 = smul.addr %s3151, 8
      %s3153 = scalar_lea.vmem %s6, %s3152
      %p3154 = scmp.lt.s32.totalorder %s23, 1
      %s3155 = scalar_select %p3154, %s23, 1
      %s3156 = smul.addr %s3155, 8
      %s3157 = scalar_lea.vmem %s7, %s3156
      // Predicated region
      $region45: #{conv_norm_act.3} parent=39 // pred_check
        %p3158 = pneg %p172
      $region46: #{conv_norm_act.3} parent=39 // pred_check_branch
        %3160 = sbr.rel (%p3158) target = $region48
      $region47: #{conv_norm_act.3} parent=39 // pred_region
        %s3161 = smul.u32 10, %s24
      $region48: #{conv_norm_act.3} parent=39 // pred_fallthru
        _
      // Predicated region
      $region49: #{conv_norm_act.3} parent=39 // pred_check
        %p3162 = pneg %p198
      $region50: #{conv_norm_act.3} parent=39 // pred_check_branch
        %3164 = sbr.rel (%p3162) target = $region52
      $region51: #{conv_norm_act.3} parent=39 // pred_region
        _
      $region52: #{conv_norm_act.3} parent=39 // pred_fallthru
        _
      // Predicated region
      $region53: #{conv_norm_act.3} parent=39 // pred_check
        %p3165 = pneg %p224
      $region54: #{conv_norm_act.3} parent=39 // pred_check_branch
        %3167 = sbr.rel (%p3165) target = $region56
      $region55: #{conv_norm_act.3} parent=39 // pred_region
        _
      $region56: #{conv_norm_act.3} parent=39 // pred_fallthru
        _
    $region40: #{conv_norm_act.3} parent=5 // pred_fallthru
      _
    %p3168 = scmp.le.s32.totalorder 2, %s14
    // Predicated region
    $region57: #{conv_norm_act.3} parent=5 // pred_check
      %p3169 = pneg %p3168
    $region58: #{conv_norm_act.3} parent=5 // pred_check_branch
      %3171 = sbr.rel (%p3169) target = $region60
    $region59: #{conv_norm_act.3} parent=5 // pred_region
      %s3172 = ssub.s32 %s14, 2
      // Predicated region
      $region61: #{conv_norm_act.3} parent=59 // pred_check
        %p3173 = pneg %p178
      $region62: #{conv_norm_act.3} parent=59 // pred_check_branch
        %3175 = sbr.rel (%p3173) target = $region64
      $region63: #{conv_norm_act.3} parent=59 // pred_region
        %s3176 = smul.u32 10, %s26
        %p3177 = scmp.lt.s32.totalorder %s25, 1
        %s3178 = scalar_select %p3177, %s25, 1
        %p3179 = scmp.lt.s32.totalorder %s3176, 9
        %s3180 = scalar_select %p3179, %s3176, 9
        %s3181 = smul.addr %s3178, 10
        %s3182 = sadd.s32 %s3180, %s3181
        %s3183 = smul.addr %s3182, 8
        %s3184 = scalar_lea.vmem %s5, %s3183
      $region64: #{conv_norm_act.3} parent=59 // pred_fallthru
        _
      // Predicated region
      $region65: #{conv_norm_act.3} parent=59 // pred_check
        %p3185 = pneg %p204
      $region66: #{conv_norm_act.3} parent=59 // pred_check_branch
        %3187 = sbr.rel (%p3185) target = $region68
      $region67: #{conv_norm_act.3} parent=59 // pred_region
        %p3188 = scmp.lt.s32.totalorder %s25, 1
        %s3189 = scalar_select %p3188, %s25, 1
        %s3190 = smul.addr %s3189, 8
        %s3191 = scalar_lea.vmem %s6, %s3190
      $region68: #{conv_norm_act.3} parent=59 // pred_fallthru
        _
      // Predicated region
      $region69: #{conv_norm_act.3} parent=59 // pred_check
        %p3192 = pneg %p230
      $region70: #{conv_norm_act.3} parent=59 // pred_check_branch
        %3194 = sbr.rel (%p3192) target = $region72
      $region71: #{conv_norm_act.3} parent=59 // pred_region
        %p3195 = scmp.lt.s32.totalorder %s25, 1
        %s3196 = scalar_select %p3195, %s25, 1
        %s3197 = smul.addr %s3196, 8
        %s3198 = scalar_lea.vmem %s7, %s3197
      $region72: #{conv_norm_act.3} parent=59 // pred_fallthru
        _
    $region60: #{conv_norm_act.3} parent=5 // pred_fallthru
      _
  $region6: #{conv_norm_act.3} parent=0 // loop_footer
    %s18 = sadd.s32 1, %s14
  $region7: #{conv_norm_act.3} parent=0 // loop_footer_branch
    %13 = sbr.rel target = $region3
  $region8: #{conv_norm_act.3} parent=0 // loop_exit
    _

// kernel: conv_norm_act.5
$region0: #{conv_norm_act.5}
  #allocation0 [shape = 'u32[]', space=smem, size = 0x4, offset = 0x4, fixed_abs, tag = 'smem constant byte address 0x4 - core index']
  #allocation1 [shape = 'u32[144,128]{1,0:T(1,128)}', space=vmem, size = 0x12000, scoped, tag = 'internal scratch']
  %s0 = inlined_call_operand.vmem [shape: f32[8,128], index: 0, kind: input, shape index: {}]
  %s1 = inlined_call_operand.vmem [shape: f32[8,128], index: 1, kind: input, shape index: {}]
  %s2 = inlined_call_operand.hbm [shape: f32[1,1], index: 2, kind: output, shape index: {}]
  %s3 = sld [smem:[#allocation0]]
  $region22: #{conv_norm_act.5} parent=0
    _
  %s5 = ssub.s32 1, %s3
  %s6 = scalar_select 0, %s5, %s3
  $region1: #{conv_norm_act.5} parent=0
    #allocation2 [shape = 'u8[512]{0}', space=smem, size = 0x200, scoped, tag = 'output window, operand 0, single buffered']
    #allocation3 [shape = 's32[1]{0}', space=sflag, size = 0x4, scoped, tag = 'scoped memory for conv_norm_act.5']
    %7 = vsyncpa [#allocation3], 0
    // Predicated region
    $region2: #{conv_norm_act.5} parent=1 // pred_check
      _
    $region3: #{conv_norm_act.5} parent=1 // pred_check_branch
      %9 = sbr.rel (0) target = $region5
    $region4: #{conv_norm_act.5} parent=1 // pred_region
      _
    $region5: #{conv_norm_act.5} parent=1 // pred_fallthru
      _
    // Predicated region
    $region6: #{conv_norm_act.5} parent=1 // pred_check
      _
    $region7: #{conv_norm_act.5} parent=1 // pred_check_branch
      %11 = sbr.rel (0) target = $region9
    $region8: #{conv_norm_act.5} parent=1 // pred_region
      _
    $region9: #{conv_norm_act.5} parent=1 // pred_fallthru
      _
    %p12 = scmp.eq.s32.totalorder 0, 0
    // Predicated region
    $region10: #{conv_norm_act.5} parent=1 // pred_check
      %p13 = pneg %p12
    $region11: #{conv_norm_act.5} parent=1 // pred_check_branch
      %15 = sbr.rel (%p13) target = $region13
    $region12: #{conv_norm_act.5} parent=1 // pred_region
      %s16 = scalar_lea.smem [#allocation2], 0
      %17 = sst [smem:[%s16]] 0.0
    $region13: #{conv_norm_act.5} parent=1 // pred_fallthru
      _
    %v18 = vld [vmem:[%s0] sm:$0xff]
    %v19 = vld [vmem:[%s1] sm:$0xff]
    %v20 = vmax.f32 %v19, 0.0
    %vm21 = vcmp.ne.f32.partialorder %v19, %v19
    %v22 = vadd.f32 %v19, 0.0
    %v23 = vand.u32 2147483647, %v19
    %v24 = vsub.f32 0.0, %v23
    %v25 = vmul.f32 %v24, 1.442695
    %v26 = vpow.pop %v25
    %v27 = vadd.f32 %v26, 1.0
    %v28 = vlog2.pop %v27
    %v29 = vmul.f32 %v28, 0.6931472
    %v30 = vmul.f32 -0.5, %v26
    %v31 = vadd.f32 %v30, 1.0
    %v32 = vmul.f32 %v31, %v26
    %v33 = vand.u32 2147483647, %v26
    %vm34 = vcmp.lt.f32.partialorder %v33, 0.0004427343
    %v35 = vsel %vm34, %v32, %v29
    %v36 = vadd.f32 %v20, %v35
    %v37 = vsel %vm21, %v22, %v36
    %v38 = vmul.f32 %v37, %v37
    %v39 = vmul.f32 %v18, %v18
    %v40 = vadd.f32 %v38, %v39
    %v41 = vmul.f32 %v40, 0.5
    %v42 = vlog2.pop %v37
    %v43 = vmul.f32 %v42, 0.6931472
    %v44 = vsub.f32 %v41, %v43
    %v45 = vsub.f32 %v44, 0.5
    %s46 = smul.u32 0, 1024
    %v47 = vlaneseq
    %v48 = vshrl.u32 %v47, 7
    %v49 = vmul.u32 %v48, 128
    %v50 = vstv %s46
    %v51 = vadd.s32 %v50, %v49
    %v52 = vlaneseq
    %v53 = vand.u32 %v52, 127
    %v54 = vadd.s32 %v51, %v53
    %s55 = sld [smem:[#allocation2]]
    %vm56 = vcmp.lt.s32.totalorder %v54, 296
    %v57 = vsel %vm56, %v45, 0.0
    %58 = vadd.xlane.f32.xlu0 %v57
    %v59 = vpop.xlane.xlu0 %58
    %v60 = vrot.slane %v59, 4
    %v61 = vadd.f32 %v59, %v60
    %v62 = vrot.slane %v61, 2
    %v63 = vadd.f32 %v61, %v62
    %v64 = vrot.slane %v63, 1
    %v65 = vadd.f32 %v63, %v64
    %s66 = vtos %v65
    %s67 = sadd.f32 %s55, %s66
    %s68 = scalar_lea.smem [#allocation2], 0
    %69 = sst [smem:[%s68]] %s67
    // Predicated region
    $region14: #{conv_norm_act.5} parent=1 // pred_check
      _
    $region15: #{conv_norm_act.5} parent=1 // pred_check_branch
      %71 = sbr.rel (0) target = $region17
    $region16: #{conv_norm_act.5} parent=1 // pred_region
      %s73 = ssub.s32 16, 16
      %74 = vsyncadd [#allocation3], %s73
      %77 = dma.smem_to_hbm [#allocation2], 16, %s2, [#allocation3]
    $region17: #{conv_norm_act.5} parent=1 // pred_fallthru
      _
    // Predicated region
    $region18: #{conv_norm_act.5} parent=1 // pred_check
      _
    $region19: #{conv_norm_act.5} parent=1 // pred_check_branch
      %79 = sbr.rel (0) target = $region21
    $region20: #{conv_norm_act.5} parent=1 // pred_region
      %80 = dma.done [#allocation3], 16
    $region21: #{conv_norm_act.5} parent=1 // pred_fallthru
      _
    %81 = sfence
    %82 = vsyncpa [#allocation3], 1

</llo_original>
